<compile_context>
chip_gen: v7x
topology: tpu7x:2x2x1
jax: 0.10.0
libtpu: 0.0.40
codegen_flags: <defaults>
</compile_context>

<pallas_src>
import functools

import jax
import jax.numpy as jnp
from jax.experimental import pallas as pl
from jax.experimental.pallas import tpu as pltpu

_INV_SQRT2 = 0.7071067811865476       # 1/sqrt(2)   (exact erf GELU)
_SQRT_2_OVER_PI = 0.7978845608028654  # sqrt(2/pi)  (tanh-approx GELU)


def _gelu_f32(h, approximate):
    if approximate:
        # tanh goes to the otherwise-idle EUP slot; matches torch GELU(approximate='tanh').
        return 0.5 * h * (1.0 + jnp.tanh(_SQRT_2_OVER_PI * (h + 0.044715 * h * h * h)))
    # exact erf (torch.nn.GELU() default), ~20+ op VALU polynomial.
    return 0.5 * h * (1.0 + jax.lax.erf(h * _INV_SQRT2))


def _ffn_resident_kernel(x_ref, w1_ref, b1_ref, w2_ref, b2_ref, o_ref, *, approximate):
    """Weight-resident path: full W1/W2 stay in VMEM; single 'parallel' token axis."""
    h = jnp.dot(x_ref[...], w1_ref[...], preferred_element_type=jnp.float32)
    h = _gelu_f32(h + b1_ref[...], approximate)
    out = jnp.dot(h.astype(w2_ref.dtype), w2_ref[...], preferred_element_type=jnp.float32)
    o_ref[...] = (out + b2_ref[...]).astype(o_ref.dtype)


def _ffn_streamed_kernel(x_ref, w1_ref, b1_ref, w2_ref, b2_ref, o_ref, acc_ref, *, approximate):
    """Streaming path: hidden tiled on innermost 'arbitrary' axis, f32 VMEM accumulator."""
    k = pl.program_id(1)

    @pl.when(k == 0)
    def _():
        acc_ref[...] = jnp.zeros_like(acc_ref)

    # First linear, one hidden tile: (tm, dim) @ (dim, th) -> (tm, th), f32 acc.
    h = jnp.dot(x_ref[...], w1_ref[...], preferred_element_type=jnp.float32)
    h = _gelu_f32(h + b1_ref[...], approximate)

    # Second linear, accumulated over hidden tiles into f32 VMEM scratch.
    acc_ref[...] += jnp.dot(h.astype(w2_ref.dtype), w2_ref[...],
                            preferred_element_type=jnp.float32)

    @pl.when(k == pl.num_programs(1) - 1)
    def _():
        o_ref[...] = (acc_ref[...] + b2_ref[...]).astype(o_ref.dtype)


def _round_up(x, m):
    return ((x + m - 1) // m) * m


def feed_forward(x, w1, b1, w2, b2, *, token_tile=None, hidden_tile=None,
                 matmul_dtype=jnp.bfloat16, gelu_approximate=True,
                 force_streamed=False):
    """x: (tokens, dim); w1: (dim, hidden); b1: (hidden,); w2: (hidden, dim); b2: (dim,).

    Computes GELU(x @ w1 + b1) @ w2 + b2 (== PyTorch FeedForward with W stored
    transposed, i.e. (in_features, out_features))."""
    tokens, dim = x.shape
    hidden = w1.shape[1]
    out_dtype = x.dtype

    in_elt = jnp.dtype(matmul_dtype).itemsize
    out_elt = jnp.dtype(out_dtype).itemsize

    # ---- per-generation VMEM budget (v5e/v6e: 128 MiB, v7x: 64 MiB per TC) ----
    try:
        vmem_physical = int(getattr(pltpu.get_tpu_info(), "vmem_capacity_bytes",
                                    64 * 1024 * 1024))
    except Exception:
        vmem_physical = 64 * 1024 * 1024          # assume the smallest (v7x)
    vmem_physical = max(32 << 20, min(vmem_physical, 256 << 20))
    vmem_cap = (vmem_physical * 3) // 4           # headroom for compiler scratch

    # ---- token tile: tm >= 512 keeps weight-stream AI above the v6e/v7x knee ----
    if token_tile is None:
        token_tile = 512
    tm = max(8, min(token_tile, _round_up(tokens, 8)))
    # keep >= 2 token tiles when possible so the "parallel" axis splits across
    # TensorCores (v7x megacore).
    if tokens > 256:
        tm = min(tm, max(128, _round_up((tokens + 1) // 2, 128)))
    # prefer a tm that divides tokens exactly -> no wrapper-side jnp.pad of x.
    if tm >= 128 and tokens % tm != 0:
        for cand in range(tm, 127, -128):
            if tokens % cand == 0:
                tm = cand
                break

    def vmem_estimate(tm_, th_, streamed):
        est = (2 * tm_ * dim * in_elt                      # x tile (double-buffered)
               + 2 * tm_ * dim * out_elt                   # output tile
               + 2 * (dim * th_ + th_ * dim) * in_elt      # W1 / W2 tiles
               + 2 * (th_ + dim) * 4                       # biases (f32)
               + tm_ * th_ * (4 + in_elt))                 # GELU intermediate (f32 + bf16)
        if streamed:
            est += tm_ * dim * 4                           # f32 accumulator scratch
        return est

    # ---- weight-resident fast path decision ----
    use_resident = (not force_streamed) and vmem_estimate(tm, hidden, False) <= vmem_cap

    hidden_p = hidden
    th = hidden
    if not use_resident:
        if hidden % 128 != 0:
            # Zero-padding hidden is exact: padded units have w1 column = 0 and
            # b1 = 0 (so GELU(0) = 0) and w2 rows = 0 (contribute nothing).
            hidden_p = _round_up(hidden, 128)
            w1 = jnp.pad(w1, ((0, 0), (0, hidden_p - hidden)))
            b1 = jnp.pad(b1, ((0, hidden_p - hidden),))
            w2 = jnp.pad(w2, ((0, hidden_p - hidden), (0, 0)))

        if hidden_tile is None:
            # bigger hidden tiles on 128 MiB chips, smaller on v7x (64 MiB/TC)
            hidden_tile = 512 if vmem_physical > (96 << 20) else 256

        def pick_th(limit):
            limit = max(128, min(limit, hidden_p))
            for cand in range(limit - limit % 128, 127, -128):
                if hidden_p % cand == 0:
                    return cand
            return 128  # hidden_p is a multiple of 128 by construction

        th = pick_th(hidden_tile)
        # shrink th first (th doesn't change arithmetic intensity), then tm.
        while vmem_estimate(tm, th, True) > vmem_cap and th > 128:
            th = pick_th(th // 2)
        while vmem_estimate(tm, th, True) > vmem_cap and tm > 128:
            tm = max(128, tm // 2)

    # ---- pad tokens only when strictly necessary ----
    padded_tokens = _round_up(tokens, tm)
    if padded_tokens != tokens:
        x = jnp.pad(x, ((0, padded_tokens - tokens), (0, 0)))

    # bf16 operands for the MXU; biases / accumulation / GELU stay f32.
    # TODO(synk): if dim is not a multiple of 128, output stores are masked
    # (vst.msk); lane-padding dim would need x/w1/w2/b2 padding + output slice.
    xm = x.astype(matmul_dtype)
    w1m = w1.astype(matmul_dtype)
    w2m = w2.astype(matmul_dtype)
    b1_2d = b1.reshape(1, -1).astype(jnp.float32)
    b2_2d = b2.reshape(1, dim).astype(jnp.float32)

    cost = pl.CostEstimate(
        flops=4 * tokens * dim * hidden,
        transcendentals=tokens * hidden,
        bytes_accessed=(tokens * dim * (in_elt + out_elt)
                        + 2 * dim * hidden * in_elt
                        + (hidden + dim) * 4),
    )
    cparams = lambda sems: pltpu.CompilerParams(
        dimension_semantics=sems, vmem_limit_bytes=int(vmem_cap))

    if use_resident:
        kernel = functools.partial(_ffn_resident_kernel, approximate=gelu_approximate)
        out = pl.pallas_call(
            kernel,
            out_shape=jax.ShapeDtypeStruct((padded_tokens, dim), out_dtype),
            grid_spec=pltpu.PrefetchScalarGridSpec(
                num_scalar_prefetch=0,
                grid=(padded_tokens // tm,),
                in_specs=[
                    pl.BlockSpec((tm, dim), lambda i: (i, 0)),        # x token tile
                    pl.BlockSpec((dim, hidden), lambda i: (0, 0)),    # W1 (resident)
                    pl.BlockSpec((1, hidden), lambda i: (0, 0)),      # b1
                    pl.BlockSpec((hidden, dim), lambda i: (0, 0)),    # W2 (resident)
                    pl.BlockSpec((1, dim), lambda i: (0, 0)),         # b2
                ],
                out_specs=pl.BlockSpec((tm, dim), lambda i: (i, 0)),
            ),
            compiler_params=cparams(("parallel",)),
            cost_estimate=cost,
        )(xm, w1m, b1_2d, w2m, b2_2d)
    else:
        kernel = functools.partial(_ffn_streamed_kernel, approximate=gelu_approximate)
        out = pl.pallas_call(
            kernel,
            out_shape=jax.ShapeDtypeStruct((padded_tokens, dim), out_dtype),
            grid_spec=pltpu.PrefetchScalarGridSpec(
                num_scalar_prefetch=0,
                grid=(padded_tokens // tm, hidden_p // th),
                in_specs=[
                    pl.BlockSpec((tm, dim), lambda i, k: (i, 0)),     # x (const across k)
                    pl.BlockSpec((dim, th), lambda i, k: (0, k)),     # W1 hidden tile
                    pl.BlockSpec((1, th),   lambda i, k: (0, k)),     # b1 hidden tile
                    pl.BlockSpec((th, dim), lambda i, k: (k, 0)),     # W2 hidden tile
                    pl.BlockSpec((1, dim),  lambda i, k: (0, 0)),     # b2
                ],
                out_specs=pl.BlockSpec((tm, dim), lambda i, k: (i, 0)),
                scratch_shapes=[pltpu.VMEM((tm, dim), jnp.float32)],
            ),
            compiler_params=cparams(("parallel", "arbitrary")),
            cost_estimate=cost,
        )(xm, w1m, b1_2d, w2m, b2_2d)

    if padded_tokens != tokens:
        out = out[:tokens]
    return out


def feed_forward_ref(x, w1, b1, w2, b2, matmul_dtype=jnp.float32, gelu_approximate=True):
    """Plain-JAX reference with the same mixed-precision recipe as the kernel."""
    h = jnp.dot(x.astype(matmul_dtype), w1.astype(matmul_dtype),
                preferred_element_type=jnp.float32) + b1.astype(jnp.float32)
    h = _gelu_f32(h, gelu_approximate)
    out = jnp.dot(h.astype(matmul_dtype), w2.astype(matmul_dtype),
                  preferred_element_type=jnp.float32) + b2.astype(jnp.float32)
    return out.astype(x.dtype)


if __name__ == "__main__":
    # Small, tiling-friendly shapes: lane-dense dim, 2 token tiles (megacore axis),
    # and a hidden dim large enough to also exercise the streamed path when forced.
    batch, seq, dim, hidden = 2, 256, 256, 512

    key = jax.random.PRNGKey(0)
    kx, kw1, kb1, kw2, kb2 = jax.random.split(key, 5)

    x = jax.random.normal(kx, (batch, seq, dim), dtype=jnp.float32)
    # PyTorch-Linear-like uniform init bounds (fan-in).
    bound1 = 1.0 / jnp.sqrt(dim)
    bound2 = 1.0 / jnp.sqrt(hidden)
    w1 = jax.random.uniform(kw1, (dim, hidden), minval=-bound1, maxval=bound1, dtype=jnp.float32)
    b1 = jax.random.uniform(kb1, (hidden,), minval=-bound1, maxval=bound1, dtype=jnp.float32)
    w2 = jax.random.uniform(kw2, (hidden, dim), minval=-bound2, maxval=bound2, dtype=jnp.float32)
    b2 = jax.random.uniform(kb2, (dim,), minval=-bound2, maxval=bound2, dtype=jnp.float32)

    x_flat = x.reshape(batch * seq, dim)

    # Path 1: weight-resident fast path (default tiling at these shapes).
    out_resident = feed_forward(x_flat, w1, b1, w2, b2)
    jax.block_until_ready(out_resident)

    # Path 2: streamed-weight path (forced) — exercises the accumulator kernel.
    out_streamed = feed_forward(x_flat, w1, b1, w2, b2,
                                hidden_tile=256, force_streamed=True)
    jax.block_until_ready(out_streamed)

    # bf16-aware reference (same mixed precision + tanh GELU as the kernel).
    ref_bf16 = feed_forward_ref(x_flat, w1, b1, w2, b2, matmul_dtype=jnp.bfloat16)
    # Full-f32 exact-erf reference (looser: bf16 matmul operands + tanh GELU in kernel).
    ref_f32 = feed_forward_ref(x_flat, w1, b1, w2, b2,
                               matmul_dtype=jnp.float32, gelu_approximate=False)

    for name, out in (("resident", out_resident), ("streamed", out_streamed)):
        assert jnp.allclose(out, ref_bf16, atol=3e-3, rtol=3e-3), f"{name}: mismatch vs bf16 ref"
        assert jnp.allclose(out, ref_f32, atol=5e-2, rtol=5e-2), f"{name}: mismatch vs f32 ref"

    print("KERNEL_OK")
</pallas_src>

<mosaic_0001>
module attributes {stable_mosaic.version = 11 : i64} {
  func.func @_ffn_resident_kernel(%arg0: i32, %arg1: memref<256x256xbf16, #tpu.memory_space<vmem>>, %arg2: memref<256x512xbf16, #tpu.memory_space<vmem>>, %arg3: memref<1x512xf32, #tpu.memory_space<vmem>>, %arg4: memref<512x256xbf16, #tpu.memory_space<vmem>>, %arg5: memref<1x256xf32, #tpu.memory_space<vmem>>, %arg6: memref<256x256xf32, #tpu.memory_space<vmem>>) attributes {dimension_semantics = [#tpu.dimension_semantics<parallel>], iteration_bounds = array<i64: 2>, scalar_prefetch = 0 : i64, scratch_operands = 0 : i64, tpu.core_type = #tpu.core_type<tc>, window_params = [{transform_indices = @transform_0, window_bounds = array<i64: 256, 256>}, {pipeline_mode = #tpu.pipeline_mode<synchronous>, transform_indices = @transform_1, window_bounds = array<i64: 256, 512>}, {pipeline_mode = #tpu.pipeline_mode<synchronous>, transform_indices = @transform_2, window_bounds = array<i64: 1, 512>}, {pipeline_mode = #tpu.pipeline_mode<synchronous>, transform_indices = @transform_3, window_bounds = array<i64: 512, 256>}, {pipeline_mode = #tpu.pipeline_mode<synchronous>, transform_indices = @transform_4, window_bounds = array<i64: 1, 256>}, {transform_indices = @transform_5, window_bounds = array<i64: 256, 256>}]} {
    %c0 = arith.constant 0 : index
    %c0_0 = arith.constant 0 : index
    %0 = vector.load %arg1[%c0, %c0_0] : memref<256x256xbf16, #tpu.memory_space<vmem>>, vector<256x256xbf16>
    %c0_1 = arith.constant 0 : index
    %c0_2 = arith.constant 0 : index
    %1 = vector.load %arg2[%c0_1, %c0_2] : memref<256x512xbf16, #tpu.memory_space<vmem>>, vector<256x512xbf16>
    %cst = arith.constant dense<0.000000e+00> : vector<256x512xf32>
    %2 = tpu.matmul %0, %1, %cst {dimension_numbers = #tpu.dot_dimension_numbers<[1], [0], [0], [1], [0, 0, 1, 1], [], []>} : vector<256x256xbf16>, vector<256x512xbf16>, vector<256x512xf32> -> vector<256x512xf32>
    %c0_3 = arith.constant 0 : index
    %c0_4 = arith.constant 0 : index
    %3 = vector.load %arg3[%c0_3, %c0_4] : memref<1x512xf32, #tpu.memory_space<vmem>>, vector<1x512xf32>
    %4 = vector.broadcast %3 : vector<1x512xf32> to vector<256x512xf32>
    %5 = arith.addf %2, %4 : vector<256x512xf32>
    %cst_5 = arith.constant 5.000000e-01 : f32
    %6 = vector.broadcast %cst_5 : f32 to vector<256x512xf32>
    %7 = arith.mulf %6, %5 : vector<256x512xf32>
    %cst_6 = arith.constant 4.471500e-02 : f32
    %8 = vector.broadcast %cst_6 : f32 to vector<256x512xf32>
    %9 = arith.mulf %8, %5 : vector<256x512xf32>
    %10 = arith.mulf %9, %5 : vector<256x512xf32>
    %11 = arith.mulf %10, %5 : vector<256x512xf32>
    %12 = arith.addf %5, %11 : vector<256x512xf32>
    %cst_7 = arith.constant 0.797884583 : f32
    %13 = vector.broadcast %cst_7 : f32 to vector<256x512xf32>
    %14 = arith.mulf %13, %12 : vector<256x512xf32>
    %15 = math.tanh %14 : vector<256x512xf32>
    %cst_8 = arith.constant 1.000000e+00 : f32
    %16 = vector.broadcast %cst_8 : f32 to vector<256x512xf32>
    %17 = arith.addf %16, %15 : vector<256x512xf32>
    %18 = arith.mulf %7, %17 : vector<256x512xf32>
    %19 = arith.truncf %18 : vector<256x512xf32> to vector<256x512xbf16>
    %c0_9 = arith.constant 0 : index
    %c0_10 = arith.constant 0 : index
    %20 = vector.load %arg4[%c0_9, %c0_10] : memref<512x256xbf16, #tpu.memory_space<vmem>>, vector<512x256xbf16>
    %cst_11 = arith.constant dense<0.000000e+00> : vector<256x256xf32>
    %21 = tpu.matmul %19, %20, %cst_11 {dimension_numbers = #tpu.dot_dimension_numbers<[1], [0], [0], [1], [0, 0, 1, 1], [], []>} : vector<256x512xbf16>, vector<512x256xbf16>, vector<256x256xf32> -> vector<256x256xf32>
    %c0_12 = arith.constant 0 : index
    %c0_13 = arith.constant 0 : index
    %22 = vector.load %arg5[%c0_12, %c0_13] : memref<1x256xf32, #tpu.memory_space<vmem>>, vector<1x256xf32>
    %23 = vector.broadcast %22 : vector<1x256xf32> to vector<256x256xf32>
    %24 = arith.addf %21, %23 : vector<256x256xf32>
    %c0_14 = arith.constant 0 : index
    %c0_15 = arith.constant 0 : index
    %25 = vector.load %arg6[%c0_14, %c0_15] : memref<256x256xf32, #tpu.memory_space<vmem>>, vector<256x256xf32>
    tpu.vector_store %arg6[%c0_14, %c0_15], %24 {strides = array<i32>} : memref<256x256xf32, #tpu.memory_space<vmem>>, vector<256x256xf32>,
    return
  }
  func.func @transform_0(%arg0: i32) -> (i32, i32) {
    %c0_i32 = arith.constant 0 : i32
    %c0_i32_0 = arith.constant 0 : i32
    return %arg0, %c0_i32 : i32, i32
  }
  func.func @transform_1(%arg0: i32) -> (i32, i32) {
    %c0_i32 = arith.constant 0 : i32
    %c0_i32_0 = arith.constant 0 : i32
    %c0_i32_1 = arith.constant 0 : i32
    return %c0_i32, %c0_i32_0 : i32, i32
  }
  func.func @transform_2(%arg0: i32) -> (i32, i32) {
    %c0_i32 = arith.constant 0 : i32
    %c0_i32_0 = arith.constant 0 : i32
    %c0_i32_1 = arith.constant 0 : i32
    return %c0_i32, %c0_i32_0 : i32, i32
  }
  func.func @transform_3(%arg0: i32) -> (i32, i32) {
    %c0_i32 = arith.constant 0 : i32
    %c0_i32_0 = arith.constant 0 : i32
    %c0_i32_1 = arith.constant 0 : i32
    return %c0_i32, %c0_i32_0 : i32, i32
  }
  func.func @transform_4(%arg0: i32) -> (i32, i32) {
    %c0_i32 = arith.constant 0 : i32
    %c0_i32_0 = arith.constant 0 : i32
    %c0_i32_1 = arith.constant 0 : i32
    return %c0_i32, %c0_i32_0 : i32, i32
  }
  func.func @transform_5(%arg0: i32) -> (i32, i32) {
    %c0_i32 = arith.constant 0 : i32
    %c0_i32_0 = arith.constant 0 : i32
    return %arg0, %c0_i32 : i32, i32
  }
}

</mosaic_0001>

<llo_original>
// kernel: tpu_custom_call.1
$region0: #{tpu_custom_call.1}
  #allocation0 [shape = 'u32[]', space=smem, size = 0x4, offset = 0x4, fixed_abs, tag = 'smem constant byte address 0x4 - core index']
  #allocation1 [shape = 'u32[144,128]{1,0:T(1,128)}', space=vmem, size = 0x12000, scoped, tag = 'internal scratch']
  %s0 = inlined_call_operand.hbm [shape: bf16[512,256], index: 0, kind: input, shape index: {}]
  %s1 = inlined_call_operand.hbm [shape: bf16[256,512], index: 1, kind: input, shape index: {}]
  %s2 = inlined_call_operand.vmem [shape: f32[1,512], index: 2, kind: input, shape index: {}]
  %s3 = inlined_call_operand.hbm [shape: bf16[512,256], index: 3, kind: input, shape index: {}]
  %s4 = inlined_call_operand.vmem [shape: f32[1,256], index: 4, kind: input, shape index: {}]
  %s5 = inlined_call_operand.hbm [shape: f32[512,256], index: 5, kind: output, shape index: {}]
  %s6 = sld [smem:[#allocation0]]
  $region65: #{tpu_custom_call.1} parent=0
    _
  %s8 = ssub.s32 1, %s6
  %s9 = scalar_select 0, %s8, %s6
  $region1: #{tpu_custom_call.1} parent=0
    #allocation2 [shape = 'u8[262144]{0}', space=vmem, size = 0x40000, scoped, tag = 'input window, operand 0']
    #allocation3 [shape = 's32[2]{0}', space=sflag, size = 0x8, scoped, tag = 'scoped memory for tpu_custom_call.1']
    #allocation4 [shape = 's32[2]{0}', space=sflag, size = 0x8, scoped, tag = 'scoped memory for tpu_custom_call.1']
    #allocation5 [shape = 'u8[262144]{0}', space=vmem, size = 0x40000, scoped, tag = 'input window, operand 1, single buffered']
    #allocation6 [shape = 's32[1]{0}', space=sflag, size = 0x4, scoped, tag = 'scoped memory for tpu_custom_call.1']
    #allocation7 [shape = 'u8[262144]{0}', space=vmem, size = 0x40000, scoped, tag = 'input window, operand 3, single buffered']
    #allocation8 [shape = 'u8[524288]{0}', space=vmem, size = 0x80000, scoped, tag = 'output window, operand 0']
    %10 = vsyncpa [#allocation3], 0
    %s11 = scalar_lea.sflag [#allocation3], 1
    %12 = vsyncpa %s11, 0
    %13 = vsyncpa [#allocation6], 0
    %14 = vsyncpa [#allocation4], 0
    %s15 = scalar_lea.sflag [#allocation4], 1
    %16 = vsyncpa %s15, 0
    loop: start=0, step=1, limit=4
    $region2: #{tpu_custom_call.1} parent=1 // loop_pre_header
      _
    $region3: #{tpu_custom_call.1} parent=1 // loop_header
      %s18 = sphi 0, %s22
      %p19 = scmp.ge.s32.totalorder %s18, 4
      %s28 = sphi 0, %s30
      %s31 = sphi 0, %s28
      %s32 = sphi 0, %s31
      %s48 = sphi 0, %s32
      %s52 = sphi 0, %s52
      %s54 = sphi 0, %s52
      %s55 = sphi 0, %s54
      %s69 = sphi 0, %s55
      %s73 = sphi 0, %s73
      %s75 = sphi 0, %s73
      %s76 = sphi 0, %s75
      %s90 = sphi 0, %s76
      %s94 = sphi 0, %s94
      %s96 = sphi 0, %s94
      %s97 = sphi 0, %s96
      %s111 = sphi 0, %s97
      %s115 = sphi 0, %s115
      %s117 = sphi 0, %s115
      %s118 = sphi 0, %s117
      %s132 = sphi 0, %s118
      %s138 = sphi 0, %s140
      %s141 = sphi 0, %s138
      %s142 = sphi 0, %s141
      %s158 = sphi 0, %s142
    $region4: #{tpu_custom_call.1} parent=1 // loop_header_branch
      %21 = sbr.rel (%p19) target = $region8
    $region5: #{tpu_custom_call.1} parent=1 // loop_body
      %s23 = ssub.s32 %s18, 1
      %s24 = ssub.s32 %s18, 2
      %s25 = sadd.s32 %s18, 1
      %s26 = ssub.s32 %s18, %s25
      %p27 = scmp.eq.s32.totalorder %s26, 0
      %s29 = sadd.s32 %s28, 1
      %s30 = scalar_select %p27, %s28, %s29
      %p33 = pneg %p27
      %p34 = scmp.eq.s32.totalorder %s18, 1
      %p35 = por %p33, %p34
      %p36 = scmp.ne.s32.totalorder %s28, %s31
      %p37 = scmp.eq.s32.totalorder %s18, 0
      %p38 = por %p36, %p37
      %p39 = scmp.ne.s32.totalorder %s28, %s31
      %p40 = scmp.eq.s32.totalorder %s23, 1
      %p41 = por %p39, %p40
      %p42 = scmp.ne.s32.totalorder %s31, %s32
      %p43 = scmp.eq.s32.totalorder %s23, 0
      %p44 = por %p42, %p43
      %p45 = scmp.ne.s32.totalorder %s31, %s32
      %p46 = scmp.eq.s32.totalorder %s24, 1
      %p47 = por %p45, %p46
      %p49 = scmp.ne.s32.totalorder %s32, %s48
      %p50 = scmp.eq.s32.totalorder %s24, 0
      %p51 = por %p49, %p50
      %s53 = sadd.s32 %s52, 1
      %p56 = scmp.eq.s32.totalorder %s18, 1
      %p57 = scmp.ne.s32.totalorder %s52, %s54
      %p58 = scmp.eq.s32.totalorder %s18, 0
      %p59 = por %p57, %p58
      %p60 = scmp.ne.s32.totalorder %s52, %s54
      %p61 = scmp.eq.s32.totalorder %s23, 1
      %p62 = por %p60, %p61
      %p63 = scmp.ne.s32.totalorder %s54, %s55
      %p64 = scmp.eq.s32.totalorder %s23, 0
      %p65 = por %p63, %p64
      %p66 = scmp.ne.s32.totalorder %s54, %s55
      %p67 = scmp.eq.s32.totalorder %s24, 1
      %p68 = por %p66, %p67
      %p70 = scmp.ne.s32.totalorder %s55, %s69
      %p71 = scmp.eq.s32.totalorder %s24, 0
      %p72 = por %p70, %p71
      %s74 = sadd.s32 %s73, 1
      %p77 = scmp.eq.s32.totalorder %s18, 1
      %p78 = scmp.ne.s32.totalorder %s73, %s75
      %p79 = scmp.eq.s32.totalorder %s18, 0
      %p80 = por %p78, %p79
      %p81 = scmp.ne.s32.totalorder %s73, %s75
      %p82 = scmp.eq.s32.totalorder %s23, 1
      %p83 = por %p81, %p82
      %p84 = scmp.ne.s32.totalorder %s75, %s76
      %p85 = scmp.eq.s32.totalorder %s23, 0
      %p86 = por %p84, %p85
      %p87 = scmp.ne.s32.totalorder %s75, %s76
      %p88 = scmp.eq.s32.totalorder %s24, 1
      %p89 = por %p87, %p88
      %p91 = scmp.ne.s32.totalorder %s76, %s90
      %p92 = scmp.eq.s32.totalorder %s24, 0
      %p93 = por %p91, %p92
      %s95 = sadd.s32 %s94, 1
      %p98 = scmp.eq.s32.totalorder %s18, 1
      %p99 = scmp.ne.s32.totalorder %s94, %s96
      %p100 = scmp.eq.s32.totalorder %s18, 0
      %p101 = por %p99, %p100
      %p102 = scmp.ne.s32.totalorder %s94, %s96
      %p103 = scmp.eq.s32.totalorder %s23, 1
      %p104 = por %p102, %p103
      %p105 = scmp.ne.s32.totalorder %s96, %s97
      %p106 = scmp.eq.s32.totalorder %s23, 0
      %p107 = por %p105, %p106
      %p108 = scmp.ne.s32.totalorder %s96, %s97
      %p109 = scmp.eq.s32.totalorder %s24, 1
      %p110 = por %p108, %p109
      %p112 = scmp.ne.s32.totalorder %s97, %s111
      %p113 = scmp.eq.s32.totalorder %s24, 0
      %p114 = por %p112, %p113
      %s116 = sadd.s32 %s115, 1
      %p119 = scmp.eq.s32.totalorder %s18, 1
      %p120 = scmp.ne.s32.totalorder %s115, %s117
      %p121 = scmp.eq.s32.totalorder %s18, 0
      %p122 = por %p120, %p121
      %p123 = scmp.ne.s32.totalorder %s115, %s117
      %p124 = scmp.eq.s32.totalorder %s23, 1
      %p125 = por %p123, %p124
      %p126 = scmp.ne.s32.totalorder %s117, %s118
      %p127 = scmp.eq.s32.totalorder %s23, 0
      %p128 = por %p126, %p127
      %p129 = scmp.ne.s32.totalorder %s117, %s118
      %p130 = scmp.eq.s32.totalorder %s24, 1
      %p131 = por %p129, %p130
      %p133 = scmp.ne.s32.totalorder %s118, %s132
      %p134 = scmp.eq.s32.totalorder %s24, 0
      %p135 = por %p133, %p134
      %s136 = ssub.s32 %s18, %s25
      %p137 = scmp.eq.s32.totalorder %s136, 0
      %s139 = sadd.s32 %s138, 1
      %s140 = scalar_select %p137, %s138, %s139
      %p143 = pneg %p137
      %p144 = scmp.eq.s32.totalorder %s18, 1
      %p145 = por %p143, %p144
      %p146 = scmp.ne.s32.totalorder %s138, %s141
      %p147 = scmp.eq.s32.totalorder %s18, 0
      %p148 = por %p146, %p147
      %p149 = scmp.ne.s32.totalorder %s138, %s141
      %p150 = scmp.eq.s32.totalorder %s23, 1
      %p151 = por %p149, %p150
      %p152 = scmp.ne.s32.totalorder %s141, %s142
      %p153 = scmp.eq.s32.totalorder %s23, 0
      %p154 = por %p152, %p153
      %p155 = scmp.ne.s32.totalorder %s141, %s142
      %p156 = scmp.eq.s32.totalorder %s24, 1
      %p157 = por %p155, %p156
      %p159 = scmp.ne.s32.totalorder %s142, %s158
      %p160 = scmp.eq.s32.totalorder %s24, 0
      %p161 = por %p159, %p160
      %p162 = scmp.le.s32.totalorder 1, %s18
      %p163 = scmp.lt.s32.totalorder %s18, 3
      %p164 = pnand %p162, %p163
      %p165 = pneg %p164
      // Predicated region
      $region9: #{tpu_custom_call.1} parent=5 // pred_check
        _
      $region10: #{tpu_custom_call.1} parent=5 // pred_check_branch
        %167 = sbr.rel (%p164) target = $region12
      $region11: #{tpu_custom_call.1} parent=5 // pred_region
        %s168 = ssub.s32 %s18, 1
        // Predicated region
        $region13: #{tpu_custom_call.1} parent=11 // pred_check
          %p169 = pneg %p65
        $region14: #{tpu_custom_call.1} parent=11 // pred_check_branch
          %171 = sbr.rel (%p169) target = $region16
        $region15: #{tpu_custom_call.1} parent=11 // pred_region
          %s173 = ssub.s32 8192, 8192
          %174 = vsyncadd [#allocation6], %s173
          %s175 = sshll.u32 [#allocation5], 4
          %s176 = int_to_ptr.vmem [resolvable:$true] %s175
          %181 = dma.hbm_to_vmem [thread:$0]  %s1, 8192, %s176, [#allocation6], 256, 256, 16
        $region16: #{tpu_custom_call.1} parent=11 // pred_fallthru
          _
        // Predicated region
        $region17: #{tpu_custom_call.1} parent=11 // pred_check
          %p182 = pneg %p86
        $region18: #{tpu_custom_call.1} parent=11 // pred_check_branch
          %184 = sbr.rel (%p182) target = $region20
        $region19: #{tpu_custom_call.1} parent=11 // pred_region
          _
        $region20: #{tpu_custom_call.1} parent=11 // pred_fallthru
          _
        // Predicated region
        $region21: #{tpu_custom_call.1} parent=11 // pred_check
          %p185 = pneg %p107
        $region22: #{tpu_custom_call.1} parent=11 // pred_check_branch
          %187 = sbr.rel (%p185) target = $region24
        $region23: #{tpu_custom_call.1} parent=11 // pred_region
          %s189 = ssub.s32 8192, 8192
          %190 = vsyncadd [#allocation6], %s189
          %s191 = sshll.u32 [#allocation7], 4
          %s192 = int_to_ptr.vmem [resolvable:$true] %s191
          %197 = dma.hbm_to_vmem [thread:$0]  %s3, 8192, %s192, [#allocation6], 128, 128, 8
        $region24: #{tpu_custom_call.1} parent=11 // pred_fallthru
          _
        // Predicated region
        $region25: #{tpu_custom_call.1} parent=11 // pred_check
          %p198 = pneg %p128
        $region26: #{tpu_custom_call.1} parent=11 // pred_check_branch
          %200 = sbr.rel (%p198) target = $region28
        $region27: #{tpu_custom_call.1} parent=11 // pred_region
          _
        $region28: #{tpu_custom_call.1} parent=11 // pred_fallthru
          _
      $region12: #{tpu_custom_call.1} parent=5 // pred_fallthru
        _
      %p201 = scmp.lt.s32.totalorder %s18, 2
      // Predicated region
      $region29: #{tpu_custom_call.1} parent=5 // pred_check
        %p202 = pneg %p201
      $region30: #{tpu_custom_call.1} parent=5 // pred_check_branch
        %204 = sbr.rel (%p202) target = $region32
      $region31: #{tpu_custom_call.1} parent=5 // pred_region
        // Predicated region
        $region33: #{tpu_custom_call.1} parent=31 // pred_check
          %p205 = pneg %p38
        $region34: #{tpu_custom_call.1} parent=31 // pred_check_branch
          %207 = sbr.rel (%p205) target = $region36
        $region35: #{tpu_custom_call.1} parent=31 // pred_region
          %s208 = sand.u32 %s28, 1
          %s209 = scalar_lea.sflag [#allocation3], %s208
          %s210 = sand.u32 %s28, 1
          %s211 = smul.addr %s210, 256
          %s212 = scalar_lea.vmem [#allocation2], %s211
          %s213 = smul.u32 32, %s18
          %s215 = ssub.s32 4096, 4096
          %216 = vsyncadd %s209, %s215
          %s217 = smul.addr %s213, 2
          %s218 = smul.addr %s217, 64
          %s219 = scalar_lea.hbm %s0, %s218
          %s220 = sshll.u32 %s212, 4
          %s221 = int_to_ptr.vmem [resolvable:$true] %s220
          %226 = dma.hbm_to_vmem [thread:$0]  %s219, 4096, %s221, %s209, 128, 128, 8
        $region36: #{tpu_custom_call.1} parent=31 // pred_fallthru
          _
      $region32: #{tpu_custom_call.1} parent=5 // pred_fallthru
        _
      %p227 = scmp.le.s32.totalorder 1, %s18
      %p228 = scmp.lt.s32.totalorder %s18, 3
      %p229 = pnand %p227, %p228
      %p230 = pneg %p229
      // Predicated region
      $region37: #{tpu_custom_call.1} parent=5 // pred_check
        _
      $region38: #{tpu_custom_call.1} parent=5 // pred_check_branch
        %232 = sbr.rel (%p229) target = $region40
      $region39: #{tpu_custom_call.1} parent=5 // pred_region
        %s233 = ssub.s32 %s18, 1
        %s234 = sand.u32 %s31, 1
        %s235 = scalar_lea.sflag [#allocation3], %s234
        %s236 = sand.u32 %s31, 1
        %s237 = smul.addr %s236, 256
        %s238 = scalar_lea.vmem [#allocation2], %s237
        // Predicated region
        $region41: #{tpu_custom_call.1} parent=39 // pred_check
          %p239 = pneg %p44
        $region42: #{tpu_custom_call.1} parent=39 // pred_check_branch
          %241 = sbr.rel (%p239) target = $region44
        $region43: #{tpu_custom_call.1} parent=39 // pred_region
          %242 = dma.done %s235, 4096
        $region44: #{tpu_custom_call.1} parent=39 // pred_fallthru
          _
        // Predicated region
        $region45: #{tpu_custom_call.1} parent=39 // pred_check
          %p243 = pneg %p65
        $region46: #{tpu_custom_call.1} parent=39 // pred_check_branch
          %245 = sbr.rel (%p243) target = $region48
        $region47: #{tpu_custom_call.1} parent=39 // pred_region
          %246 = dma.done [#allocation6], 8192
        $region48: #{tpu_custom_call.1} parent=39 // pred_fallthru
          _
        // Predicated region
        $region49: #{tpu_custom_call.1} parent=39 // pred_check
          %p247 = pneg %p107
        $region50: #{tpu_custom_call.1} parent=39 // pred_check_branch
          %249 = sbr.rel (%p247) target = $region52
        $region51: #{tpu_custom_call.1} parent=39 // pred_region
          %250 = dma.done [#allocation6], 8192
        $region52: #{tpu_custom_call.1} parent=39 // pred_fallthru
          _
        %s251 = sand.u32 %s31, 1
        %s252 = scalar_lea.sflag [#allocation3], %s251
        %s253 = sand.u32 %s31, 1
        %s254 = smul.addr %s253, 256
        %s255 = scalar_lea.vmem [#allocation2], %s254
        %p256 = pneg %p44
        %p257 = pneg %p41
        %p258 = pneg %p65
        %p259 = pneg %p62
        %p260 = pneg %p86
        %p261 = pneg %p83
        %p262 = pneg %p107
        %p263 = pneg %p104
        %p264 = pneg %p128
        %p265 = pneg %p125
        %p266 = pneg %p154
        %p267 = pneg %p151
        %s268 = sand.u32 %s141, 1
        %s269 = scalar_lea.sflag [#allocation4], %s268
        %s270 = sand.u32 %s141, 1
        %s271 = smul.addr %s270, 512
        %s272 = scalar_lea.vmem [#allocation8], %s271
        %s273 = smul.u32 32, %s23
        %s274 = smul.u32 32, %s23
        %v275 = vld [vmem:[%s238] sm:$0xff]
        %v276 = vld [vmem:[%s238 + $0x8] sm:$0xff]
        %v277 = vld [vmem:[%s238 + $0x10] sm:$0xff]
        %v278 = vld [vmem:[%s238 + $0x18] sm:$0xff]
        %v279 = vld [vmem:[%s238 + $0x20] sm:$0xff]
        %v280 = vld [vmem:[%s238 + $0x28] sm:$0xff]
        %v281 = vld [vmem:[%s238 + $0x30] sm:$0xff]
        %v282 = vld [vmem:[%s238 + $0x38] sm:$0xff]
        %v283 = vld [vmem:[%s238 + $0x40] sm:$0xff]
        %v284 = vld [vmem:[%s238 + $0x48] sm:$0xff]
        %v285 = vld [vmem:[%s238 + $0x50] sm:$0xff]
        %v286 = vld [vmem:[%s238 + $0x58] sm:$0xff]
        %v287 = vld [vmem:[%s238 + $0x60] sm:$0xff]
        %v288 = vld [vmem:[%s238 + $0x68] sm:$0xff]
        %v289 = vld [vmem:[%s238 + $0x70] sm:$0xff]
        %v290 = vld [vmem:[%s238 + $0x78] sm:$0xff]
        %v291 = vld [vmem:[%s238 + $0x80] sm:$0xff]
        %v292 = vld [vmem:[%s238 + $0x88] sm:$0xff]
        %v293 = vld [vmem:[%s238 + $0x90] sm:$0xff]
        %v294 = vld [vmem:[%s238 + $0x98] sm:$0xff]
        %v295 = vld [vmem:[%s238 + $0xa0] sm:$0xff]
        %v296 = vld [vmem:[%s238 + $0xa8] sm:$0xff]
        %v297 = vld [vmem:[%s238 + $0xb0] sm:$0xff]
        %v298 = vld [vmem:[%s238 + $0xb8] sm:$0xff]
        %v299 = vld [vmem:[%s238 + $0xc0] sm:$0xff]
        %v300 = vld [vmem:[%s238 + $0xc8] sm:$0xff]
        %v301 = vld [vmem:[%s238 + $0xd0] sm:$0xff]
        %v302 = vld [vmem:[%s238 + $0xd8] sm:$0xff]
        %v303 = vld [vmem:[%s238 + $0xe0] sm:$0xff]
        %v304 = vld [vmem:[%s238 + $0xe8] sm:$0xff]
        %v305 = vld [vmem:[%s238 + $0xf0] sm:$0xff]
        %v306 = vld [vmem:[%s238 + $0xf8] sm:$0xff]
        %v307 = vld [vmem:[#allocation5] sm:$0xff]
        %v308 = vld [vmem:[#allocation5 + $0x8] sm:$0xff]
        %v309 = vld [vmem:[#allocation5 + $0x10] sm:$0xff]
        %v310 = vld [vmem:[#allocation5 + $0x18] sm:$0xff]
        %v311 = vld [vmem:[#allocation5 + $0x20] sm:$0xff]
        %v312 = vld [vmem:[#allocation5 + $0x28] sm:$0xff]
        %v313 = vld [vmem:[#allocation5 + $0x30] sm:$0xff]
        %v314 = vld [vmem:[#allocation5 + $0x38] sm:$0xff]
        %v315 = vld [vmem:[#allocation5 + $0x40] sm:$0xff]
        %v316 = vld [vmem:[#allocation5 + $0x48] sm:$0xff]
        %v317 = vld [vmem:[#allocation5 + $0x50] sm:$0xff]
        %v318 = vld [vmem:[#allocation5 + $0x58] sm:$0xff]
        %v319 = vld [vmem:[#allocation5 + $0x60] sm:$0xff]
        %v320 = vld [vmem:[#allocation5 + $0x68] sm:$0xff]
        %v321 = vld [vmem:[#allocation5 + $0x70] sm:$0xff]
        %v322 = vld [vmem:[#allocation5 + $0x78] sm:$0xff]
        %v323 = vld [vmem:[#allocation5 + $0x80] sm:$0xff]
        %v324 = vld [vmem:[#allocation5 + $0x88] sm:$0xff]
        %v325 = vld [vmem:[#allocation5 + $0x90] sm:$0xff]
        %v326 = vld [vmem:[#allocation5 + $0x98] sm:$0xff]
        %v327 = vld [vmem:[#allocation5 + $0xa0] sm:$0xff]
        %v328 = vld [vmem:[#allocation5 + $0xa8] sm:$0xff]
        %v329 = vld [vmem:[#allocation5 + $0xb0] sm:$0xff]
        %v330 = vld [vmem:[#allocation5 + $0xb8] sm:$0xff]
        %v331 = vld [vmem:[#allocation5 + $0xc0] sm:$0xff]
        %v332 = vld [vmem:[#allocation5 + $0xc8] sm:$0xff]
        %v333 = vld [vmem:[#allocation5 + $0xd0] sm:$0xff]
        %v334 = vld [vmem:[#allocation5 + $0xd8] sm:$0xff]
        %v335 = vld [vmem:[#allocation5 + $0xe0] sm:$0xff]
        %v336 = vld [vmem:[#allocation5 + $0xe8] sm:$0xff]
        %v337 = vld [vmem:[#allocation5 + $0xf0] sm:$0xff]
        %v338 = vld [vmem:[#allocation5 + $0xf8] sm:$0xff]
        %v339 = vld [vmem:[#allocation5 + $0x100] sm:$0xff]
        %v340 = vld [vmem:[#allocation5 + $0x108] sm:$0xff]
        %v341 = vld [vmem:[#allocation5 + $0x110] sm:$0xff]
        %v342 = vld [vmem:[#allocation5 + $0x118] sm:$0xff]
        %v343 = vld [vmem:[#allocation5 + $0x120] sm:$0xff]
        %v344 = vld [vmem:[#allocation5 + $0x128] sm:$0xff]
        %v345 = vld [vmem:[#allocation5 + $0x130] sm:$0xff]
        %v346 = vld [vmem:[#allocation5 + $0x138] sm:$0xff]
        %v347 = vld [vmem:[#allocation5 + $0x140] sm:$0xff]
        %v348 = vld [vmem:[#allocation5 + $0x148] sm:$0xff]
        %v349 = vld [vmem:[#allocation5 + $0x150] sm:$0xff]
        %v350 = vld [vmem:[#allocation5 + $0x158] sm:$0xff]
        %v351 = vld [vmem:[#allocation5 + $0x160] sm:$0xff]
        %v352 = vld [vmem:[#allocation5 + $0x168] sm:$0xff]
        %v353 = vld [vmem:[#allocation5 + $0x170] sm:$0xff]
        %v354 = vld [vmem:[#allocation5 + $0x178] sm:$0xff]
        %v355 = vld [vmem:[#allocation5 + $0x180] sm:$0xff]
        %v356 = vld [vmem:[#allocation5 + $0x188] sm:$0xff]
        %v357 = vld [vmem:[#allocation5 + $0x190] sm:$0xff]
        %v358 = vld [vmem:[#allocation5 + $0x198] sm:$0xff]
        %v359 = vld [vmem:[#allocation5 + $0x1a0] sm:$0xff]
        %v360 = vld [vmem:[#allocation5 + $0x1a8] sm:$0xff]
        %v361 = vld [vmem:[#allocation5 + $0x1b0] sm:$0xff]
        %v362 = vld [vmem:[#allocation5 + $0x1b8] sm:$0xff]
        %v363 = vld [vmem:[#allocation5 + $0x1c0] sm:$0xff]
        %v364 = vld [vmem:[#allocation5 + $0x1c8] sm:$0xff]
        %v365 = vld [vmem:[#allocation5 + $0x1d0] sm:$0xff]
        %v366 = vld [vmem:[#allocation5 + $0x1d8] sm:$0xff]
        %v367 = vld [vmem:[#allocation5 + $0x1e0] sm:$0xff]
        %v368 = vld [vmem:[#allocation5 + $0x1e8] sm:$0xff]
        %v369 = vld [vmem:[#allocation5 + $0x1f0] sm:$0xff]
        %v370 = vld [vmem:[#allocation5 + $0x1f8] sm:$0xff]
        %v371 = vld [vmem:[%s2] sm:$0xf]
        %v373 = vlaneseq
        %v374 = vshrl.u32 %v373, 7
        %v375 = vsub.s32 0, %v374
        %v376 = vrot.slane %v371, %v375
        %v377 = vlaneseq
        %v378 = vshrl.u32 %v377, 7
        %v379 = vsub.s32 1, %v378
        %v380 = vrot.slane %v371, %v379
        %v381 = vlaneseq
        %v382 = vshrl.u32 %v381, 7
        %v383 = vsub.s32 2, %v382
        %v384 = vrot.slane %v371, %v383
        %v385 = vlaneseq
        %v386 = vshrl.u32 %v385, 7
        %v387 = vsub.s32 3, %v386
        %v388 = vrot.slane %v371, %v387
        %v425 = vunpack.c.l.b16 %v275
        %v426 = vunpack.c.h.b16 %v275
        %v427 = vunpack.c.l.b16 %v276
        %v428 = vunpack.c.h.b16 %v276
        %v429 = vunpack.c.l.b16 %v277
        %v430 = vunpack.c.h.b16 %v277
        %v431 = vunpack.c.l.b16 %v278
        %v432 = vunpack.c.h.b16 %v278
        %v433 = vunpack.c.l.b16 %v279
        %v434 = vunpack.c.h.b16 %v279
        %v435 = vunpack.c.l.b16 %v280
        %v436 = vunpack.c.h.b16 %v280
        %v437 = vunpack.c.l.b16 %v281
        %v438 = vunpack.c.h.b16 %v281
        %v439 = vunpack.c.l.b16 %v282
        %v440 = vunpack.c.h.b16 %v282
        %v441 = vunpack.c.l.b16 %v283
        %v442 = vunpack.c.h.b16 %v283
        %v443 = vunpack.c.l.b16 %v284
        %v444 = vunpack.c.h.b16 %v284
        %v445 = vunpack.c.l.b16 %v285
        %v446 = vunpack.c.h.b16 %v285
        %v447 = vunpack.c.l.b16 %v286
        %v448 = vunpack.c.h.b16 %v286
        %v449 = vunpack.c.l.b16 %v287
        %v450 = vunpack.c.h.b16 %v287
        %v451 = vunpack.c.l.b16 %v288
        %v452 = vunpack.c.h.b16 %v288
        %v453 = vunpack.c.l.b16 %v289
        %v454 = vunpack.c.h.b16 %v289
        %v455 = vunpack.c.l.b16 %v290
        %v456 = vunpack.c.h.b16 %v290
        %v457 = vunpack.c.l.b16 %v291
        %v458 = vunpack.c.h.b16 %v291
        %v459 = vunpack.c.l.b16 %v292
        %v460 = vunpack.c.h.b16 %v292
        %v461 = vunpack.c.l.b16 %v293
        %v462 = vunpack.c.h.b16 %v293
        %v463 = vunpack.c.l.b16 %v294
        %v464 = vunpack.c.h.b16 %v294
        %v465 = vunpack.c.l.b16 %v295
        %v466 = vunpack.c.h.b16 %v295
        %v467 = vunpack.c.l.b16 %v296
        %v468 = vunpack.c.h.b16 %v296
        %v469 = vunpack.c.l.b16 %v297
        %v470 = vunpack.c.h.b16 %v297
        %v471 = vunpack.c.l.b16 %v298
        %v472 = vunpack.c.h.b16 %v298
        %v473 = vunpack.c.l.b16 %v299
        %v474 = vunpack.c.h.b16 %v299
        %v475 = vunpack.c.l.b16 %v300
        %v476 = vunpack.c.h.b16 %v300
        %v477 = vunpack.c.l.b16 %v301
        %v478 = vunpack.c.h.b16 %v301
        %v479 = vunpack.c.l.b16 %v302
        %v480 = vunpack.c.h.b16 %v302
        %v481 = vunpack.c.l.b16 %v303
        %v482 = vunpack.c.h.b16 %v303
        %v483 = vunpack.c.l.b16 %v304
        %v484 = vunpack.c.h.b16 %v304
        %v485 = vunpack.c.l.b16 %v305
        %v486 = vunpack.c.h.b16 %v305
        %v487 = vunpack.c.l.b16 %v306
        %v488 = vunpack.c.h.b16 %v306
        %v489 = vpack.c.b16 %v427, %v425
        %v490 = vpack.c.b16 %v428, %v426
        %v491 = vpack.c.b16 %v431, %v429
        %v492 = vpack.c.b16 %v432, %v430
        %v493 = vpack.c.b16 %v435, %v433
        %v494 = vpack.c.b16 %v436, %v434
        %v495 = vpack.c.b16 %v439, %v437
        %v496 = vpack.c.b16 %v440, %v438
        %v497 = vpack.c.b16 %v443, %v441
        %v498 = vpack.c.b16 %v444, %v442
        %v499 = vpack.c.b16 %v447, %v445
        %v500 = vpack.c.b16 %v448, %v446
        %v501 = vpack.c.b16 %v451, %v449
        %v502 = vpack.c.b16 %v452, %v450
        %v503 = vpack.c.b16 %v455, %v453
        %v504 = vpack.c.b16 %v456, %v454
        %v505 = vpack.c.b16 %v459, %v457
        %v506 = vpack.c.b16 %v460, %v458
        %v507 = vpack.c.b16 %v463, %v461
        %v508 = vpack.c.b16 %v464, %v462
        %v509 = vpack.c.b16 %v467, %v465
        %v510 = vpack.c.b16 %v468, %v466
        %v511 = vpack.c.b16 %v471, %v469
        %v512 = vpack.c.b16 %v472, %v470
        %v513 = vpack.c.b16 %v475, %v473
        %v514 = vpack.c.b16 %v476, %v474
        %v515 = vpack.c.b16 %v479, %v477
        %v516 = vpack.c.b16 %v480, %v478
        %v517 = vpack.c.b16 %v483, %v481
        %v518 = vpack.c.b16 %v484, %v482
        %v519 = vpack.c.b16 %v487, %v485
        %v520 = vpack.c.b16 %v488, %v486
        %v617 = vunpack.c.l.b16 %v307
        %v618 = vunpack.c.h.b16 %v307
        %v619 = vunpack.c.l.b16 %v308
        %v620 = vunpack.c.h.b16 %v308
        %v621 = vunpack.c.l.b16 %v309
        %v622 = vunpack.c.h.b16 %v309
        %v623 = vunpack.c.l.b16 %v310
        %v624 = vunpack.c.h.b16 %v310
        %v625 = vunpack.c.l.b16 %v311
        %v626 = vunpack.c.h.b16 %v311
        %v627 = vunpack.c.l.b16 %v312
        %v628 = vunpack.c.h.b16 %v312
        %v629 = vunpack.c.l.b16 %v313
        %v630 = vunpack.c.h.b16 %v313
        %v631 = vunpack.c.l.b16 %v314
        %v632 = vunpack.c.h.b16 %v314
        %v633 = vunpack.c.l.b16 %v315
        %v634 = vunpack.c.h.b16 %v315
        %v635 = vunpack.c.l.b16 %v316
        %v636 = vunpack.c.h.b16 %v316
        %v637 = vunpack.c.l.b16 %v317
        %v638 = vunpack.c.h.b16 %v317
        %v639 = vunpack.c.l.b16 %v318
        %v640 = vunpack.c.h.b16 %v318
        %v641 = vunpack.c.l.b16 %v319
        %v642 = vunpack.c.h.b16 %v319
        %v643 = vunpack.c.l.b16 %v320
        %v644 = vunpack.c.h.b16 %v320
        %v645 = vunpack.c.l.b16 %v321
        %v646 = vunpack.c.h.b16 %v321
        %v647 = vunpack.c.l.b16 %v322
        %v648 = vunpack.c.h.b16 %v322
        %v649 = vunpack.c.l.b16 %v323
        %v650 = vunpack.c.h.b16 %v323
        %v651 = vunpack.c.l.b16 %v324
        %v652 = vunpack.c.h.b16 %v324
        %v653 = vunpack.c.l.b16 %v325
        %v654 = vunpack.c.h.b16 %v325
        %v655 = vunpack.c.l.b16 %v326
        %v656 = vunpack.c.h.b16 %v326
        %v657 = vunpack.c.l.b16 %v327
        %v658 = vunpack.c.h.b16 %v327
        %v659 = vunpack.c.l.b16 %v328
        %v660 = vunpack.c.h.b16 %v328
        %v661 = vunpack.c.l.b16 %v329
        %v662 = vunpack.c.h.b16 %v329
        %v663 = vunpack.c.l.b16 %v330
        %v664 = vunpack.c.h.b16 %v330
        %v665 = vunpack.c.l.b16 %v331
        %v666 = vunpack.c.h.b16 %v331
        %v667 = vunpack.c.l.b16 %v332
        %v668 = vunpack.c.h.b16 %v332
        %v669 = vunpack.c.l.b16 %v333
        %v670 = vunpack.c.h.b16 %v333
        %v671 = vunpack.c.l.b16 %v334
        %v672 = vunpack.c.h.b16 %v334
        %v673 = vunpack.c.l.b16 %v335
        %v674 = vunpack.c.h.b16 %v335
        %v675 = vunpack.c.l.b16 %v336
        %v676 = vunpack.c.h.b16 %v336
        %v677 = vunpack.c.l.b16 %v337
        %v678 = vunpack.c.h.b16 %v337
        %v679 = vunpack.c.l.b16 %v338
        %v680 = vunpack.c.h.b16 %v338
        %v681 = vunpack.c.l.b16 %v339
        %v682 = vunpack.c.h.b16 %v339
        %v683 = vunpack.c.l.b16 %v340
        %v684 = vunpack.c.h.b16 %v340
        %v685 = vunpack.c.l.b16 %v341
        %v686 = vunpack.c.h.b16 %v341
        %v687 = vunpack.c.l.b16 %v342
        %v688 = vunpack.c.h.b16 %v342
        %v689 = vunpack.c.l.b16 %v343
        %v690 = vunpack.c.h.b16 %v343
        %v691 = vunpack.c.l.b16 %v344
        %v692 = vunpack.c.h.b16 %v344
        %v693 = vunpack.c.l.b16 %v345
        %v694 = vunpack.c.h.b16 %v345
        %v695 = vunpack.c.l.b16 %v346
        %v696 = vunpack.c.h.b16 %v346
        %v697 = vunpack.c.l.b16 %v347
        %v698 = vunpack.c.h.b16 %v347
        %v699 = vunpack.c.l.b16 %v348
        %v700 = vunpack.c.h.b16 %v348
        %v701 = vunpack.c.l.b16 %v349
        %v702 = vunpack.c.h.b16 %v349
        %v703 = vunpack.c.l.b16 %v350
        %v704 = vunpack.c.h.b16 %v350
        %v705 = vunpack.c.l.b16 %v351
        %v706 = vunpack.c.h.b16 %v351
        %v707 = vunpack.c.l.b16 %v352
        %v708 = vunpack.c.h.b16 %v352
        %v709 = vunpack.c.l.b16 %v353
        %v710 = vunpack.c.h.b16 %v353
        %v711 = vunpack.c.l.b16 %v354
        %v712 = vunpack.c.h.b16 %v354
        %v713 = vunpack.c.l.b16 %v355
        %v714 = vunpack.c.h.b16 %v355
        %v715 = vunpack.c.l.b16 %v356
        %v716 = vunpack.c.h.b16 %v356
        %v717 = vunpack.c.l.b16 %v357
        %v718 = vunpack.c.h.b16 %v357
        %v719 = vunpack.c.l.b16 %v358
        %v720 = vunpack.c.h.b16 %v358
        %v721 = vunpack.c.l.b16 %v359
        %v722 = vunpack.c.h.b16 %v359
        %v723 = vunpack.c.l.b16 %v360
        %v724 = vunpack.c.h.b16 %v360
        %v725 = vunpack.c.l.b16 %v361
        %v726 = vunpack.c.h.b16 %v361
        %v727 = vunpack.c.l.b16 %v362
        %v728 = vunpack.c.h.b16 %v362
        %v729 = vunpack.c.l.b16 %v363
        %v730 = vunpack.c.h.b16 %v363
        %v731 = vunpack.c.l.b16 %v364
        %v732 = vunpack.c.h.b16 %v364
        %v733 = vunpack.c.l.b16 %v365
        %v734 = vunpack.c.h.b16 %v365
        %v735 = vunpack.c.l.b16 %v366
        %v736 = vunpack.c.h.b16 %v366
        %v737 = vunpack.c.l.b16 %v367
        %v738 = vunpack.c.h.b16 %v367
        %v739 = vunpack.c.l.b16 %v368
        %v740 = vunpack.c.h.b16 %v368
        %v741 = vunpack.c.l.b16 %v369
        %v742 = vunpack.c.h.b16 %v369
        %v743 = vunpack.c.l.b16 %v370
        %v744 = vunpack.c.h.b16 %v370
        %v745 = vpack.c.b16 %v621, %v617
        %v746 = vpack.c.b16 %v622, %v618
        %v747 = vpack.c.b16 %v623, %v619
        %v748 = vpack.c.b16 %v624, %v620
        %v749 = vpack.c.b16 %v629, %v625
        %v750 = vpack.c.b16 %v630, %v626
        %v751 = vpack.c.b16 %v631, %v627
        %v752 = vpack.c.b16 %v632, %v628
        %v753 = vpack.c.b16 %v637, %v633
        %v754 = vpack.c.b16 %v638, %v634
        %v755 = vpack.c.b16 %v639, %v635
        %v756 = vpack.c.b16 %v640, %v636
        %v757 = vpack.c.b16 %v645, %v641
        %v758 = vpack.c.b16 %v646, %v642
        %v759 = vpack.c.b16 %v647, %v643
        %v760 = vpack.c.b16 %v648, %v644
        %v761 = vpack.c.b16 %v653, %v649
        %v762 = vpack.c.b16 %v654, %v650
        %v763 = vpack.c.b16 %v655, %v651
        %v764 = vpack.c.b16 %v656, %v652
        %v765 = vpack.c.b16 %v661, %v657
        %v766 = vpack.c.b16 %v662, %v658
        %v767 = vpack.c.b16 %v663, %v659
        %v768 = vpack.c.b16 %v664, %v660
        %v769 = vpack.c.b16 %v669, %v665
        %v770 = vpack.c.b16 %v670, %v666
        %v771 = vpack.c.b16 %v671, %v667
        %v772 = vpack.c.b16 %v672, %v668
        %v773 = vpack.c.b16 %v677, %v673
        %v774 = vpack.c.b16 %v678, %v674
        %v775 = vpack.c.b16 %v679, %v675
        %v776 = vpack.c.b16 %v680, %v676
        %v777 = vpack.c.b16 %v685, %v681
        %v778 = vpack.c.b16 %v686, %v682
        %v779 = vpack.c.b16 %v687, %v683
        %v780 = vpack.c.b16 %v688, %v684
        %v781 = vpack.c.b16 %v693, %v689
        %v782 = vpack.c.b16 %v694, %v690
        %v783 = vpack.c.b16 %v695, %v691
        %v784 = vpack.c.b16 %v696, %v692
        %v785 = vpack.c.b16 %v701, %v697
        %v786 = vpack.c.b16 %v702, %v698
        %v787 = vpack.c.b16 %v703, %v699
        %v788 = vpack.c.b16 %v704, %v700
        %v789 = vpack.c.b16 %v709, %v705
        %v790 = vpack.c.b16 %v710, %v706
        %v791 = vpack.c.b16 %v711, %v707
        %v792 = vpack.c.b16 %v712, %v708
        %v793 = vpack.c.b16 %v717, %v713
        %v794 = vpack.c.b16 %v718, %v714
        %v795 = vpack.c.b16 %v719, %v715
        %v796 = vpack.c.b16 %v720, %v716
        %v797 = vpack.c.b16 %v725, %v721
        %v798 = vpack.c.b16 %v726, %v722
        %v799 = vpack.c.b16 %v727, %v723
        %v800 = vpack.c.b16 %v728, %v724
        %v801 = vpack.c.b16 %v733, %v729
        %v802 = vpack.c.b16 %v734, %v730
        %v803 = vpack.c.b16 %v735, %v731
        %v804 = vpack.c.b16 %v736, %v732
        %v805 = vpack.c.b16 %v741, %v737
        %v806 = vpack.c.b16 %v742, %v738
        %v807 = vpack.c.b16 %v743, %v739
        %v808 = vpack.c.b16 %v744, %v740
        %873 = vmatprep.subr.bf16.mxu0 %v746
        %874 = vmatpush1.bf16.msra.mxu0 %v745
        %875 = vmatprep.subr.bf16.mxu0 %v750
        %876 = vmatpush1.bf16.msra.mxu0 %v749
        %877 = vmatprep.subr.bf16.mxu0 %v754
        %878 = vmatpush1.bf16.msra.mxu0 %v753
        %879 = vmatprep.subr.bf16.mxu0 %v758
        %880 = vmatpush1.bf16.msra.mxu0 %v757
        %881 = vmatprep.subr.bf16.mxu0 %v762
        %882 = vmatpush1.bf16.msra.mxu0 %v761
        %883 = vmatprep.subr.bf16.mxu0 %v766
        %884 = vmatpush1.bf16.msra.mxu0 %v765
        %885 = vmatprep.subr.bf16.mxu0 %v770
        %886 = vmatpush1.bf16.msra.mxu0 %v769
        %887 = vmatprep.subr.bf16.mxu0 %v774
        %888 = vmatpush1.bf16.msra.mxu0 %v773
        %889 = vmatprep.subr.bf16.mxu0 %v778
        %890 = vmatpush1.bf16.msra.mxu0 %v777
        %891 = vmatprep.subr.bf16.mxu0 %v782
        %892 = vmatpush1.bf16.msra.mxu0 %v781
        %893 = vmatprep.subr.bf16.mxu0 %v786
        %894 = vmatpush1.bf16.msra.mxu0 %v785
        %895 = vmatprep.subr.bf16.mxu0 %v790
        %896 = vmatpush1.bf16.msra.mxu0 %v789
        %897 = vmatprep.subr.bf16.mxu0 %v794
        %898 = vmatpush1.bf16.msra.mxu0 %v793
        %899 = vmatprep.subr.bf16.mxu0 %v798
        %900 = vmatpush1.bf16.msra.mxu0 %v797
        %901 = vmatprep.subr.bf16.mxu0 %v802
        %902 = vmatpush1.bf16.msra.mxu0 %v801
        %903 = vmatprep.subr.bf16.mxu0 %v806
        %904 = vmatpush1.bf16.msra.mxu0 %v805
        %905 = vmatprep.mubr.bf16.mxu0 %v490
        %906 = vmatmul.mubr.bf16.gmra.mrb[0].mxu0 %v489
        %v907 = vpop.f32.mrb[0].mxu0
        %v908 = vadd.f32 %v376, %v907
        %v909 = vpop.f32.mrb[0].mxu0
        %v910 = vadd.f32 %v380, %v909
        %v911 = vpop.f32.mrb[0].mxu0
        %v912 = vadd.f32 %v376, %v911
        %v913 = vpop.f32.mrb[0].mxu0
        %v914 = vadd.f32 %v380, %v913
        %915 = vmatprep.mubr.bf16.mxu0 %v492
        %916 = vmatmul.mubr.bf16.gmra.mrb[0].mxu0 %v491
        %v917 = vpop.f32.mrb[0].mxu0
        %v918 = vadd.f32 %v376, %v917
        %v919 = vpop.f32.mrb[0].mxu0
        %v920 = vadd.f32 %v380, %v919
        %v921 = vpop.f32.mrb[0].mxu0
        %v922 = vadd.f32 %v376, %v921
        %v923 = vpop.f32.mrb[0].mxu0
        %v924 = vadd.f32 %v380, %v923
        %925 = vmatprep.mubr.bf16.mxu0 %v494
        %926 = vmatmul.mubr.bf16.gmra.mrb[0].mxu0 %v493
        %v927 = vpop.f32.mrb[0].mxu0
        %v928 = vadd.f32 %v376, %v927
        %v929 = vpop.f32.mrb[0].mxu0
        %v930 = vadd.f32 %v380, %v929
        %v931 = vpop.f32.mrb[0].mxu0
        %v932 = vadd.f32 %v376, %v931
        %v933 = vpop.f32.mrb[0].mxu0
        %v934 = vadd.f32 %v380, %v933
        %935 = vmatprep.mubr.bf16.mxu0 %v496
        %936 = vmatmul.mubr.bf16.gmra.mrb[0].mxu0 %v495
        %v937 = vpop.f32.mrb[0].mxu0
        %v938 = vadd.f32 %v376, %v937
        %v939 = vpop.f32.mrb[0].mxu0
        %v940 = vadd.f32 %v380, %v939
        %v941 = vpop.f32.mrb[0].mxu0
        %v942 = vadd.f32 %v376, %v941
        %v943 = vpop.f32.mrb[0].mxu0
        %v944 = vadd.f32 %v380, %v943
        %945 = vmatprep.mubr.bf16.mxu0 %v498
        %946 = vmatmul.mubr.bf16.gmra.mrb[0].mxu0 %v497
        %v947 = vpop.f32.mrb[0].mxu0
        %v948 = vadd.f32 %v376, %v947
        %v949 = vpop.f32.mrb[0].mxu0
        %v950 = vadd.f32 %v380, %v949
        %v951 = vpop.f32.mrb[0].mxu0
        %v952 = vadd.f32 %v376, %v951
        %v953 = vpop.f32.mrb[0].mxu0
        %v954 = vadd.f32 %v380, %v953
        %955 = vmatprep.mubr.bf16.mxu0 %v500
        %956 = vmatmul.mubr.bf16.gmra.mrb[0].mxu0 %v499
        %v957 = vpop.f32.mrb[0].mxu0
        %v958 = vadd.f32 %v376, %v957
        %v959 = vpop.f32.mrb[0].mxu0
        %v960 = vadd.f32 %v380, %v959
        %v961 = vpop.f32.mrb[0].mxu0
        %v962 = vadd.f32 %v376, %v961
        %v963 = vpop.f32.mrb[0].mxu0
        %v964 = vadd.f32 %v380, %v963
        %965 = vmatprep.mubr.bf16.mxu0 %v502
        %966 = vmatmul.mubr.bf16.gmra.mrb[0].mxu0 %v501
        %v967 = vpop.f32.mrb[0].mxu0
        %v968 = vadd.f32 %v376, %v967
        %v969 = vpop.f32.mrb[0].mxu0
        %v970 = vadd.f32 %v380, %v969
        %v971 = vpop.f32.mrb[0].mxu0
        %v972 = vadd.f32 %v376, %v971
        %v973 = vpop.f32.mrb[0].mxu0
        %v974 = vadd.f32 %v380, %v973
        %975 = vmatprep.mubr.bf16.mxu0 %v504
        %976 = vmatmul.mubr.bf16.gmra.mrb[0].mxu0 %v503
        %v977 = vpop.f32.mrb[0].mxu0
        %v978 = vadd.f32 %v376, %v977
        %v979 = vpop.f32.mrb[0].mxu0
        %v980 = vadd.f32 %v380, %v979
        %v981 = vpop.f32.mrb[0].mxu0
        %v982 = vadd.f32 %v376, %v981
        %v983 = vpop.f32.mrb[0].mxu0
        %v984 = vadd.f32 %v380, %v983
        %985 = vmatprep.mubr.bf16.mxu0 %v506
        %986 = vmatmul.mubr.bf16.gmra.mrb[0].mxu0 %v505
        %v987 = vpop.f32.mrb[0].mxu0
        %v988 = vadd.f32 %v376, %v987
        %v989 = vpop.f32.mrb[0].mxu0
        %v990 = vadd.f32 %v380, %v989
        %v991 = vpop.f32.mrb[0].mxu0
        %v992 = vadd.f32 %v376, %v991
        %v993 = vpop.f32.mrb[0].mxu0
        %v994 = vadd.f32 %v380, %v993
        %995 = vmatprep.mubr.bf16.mxu0 %v508
        %996 = vmatmul.mubr.bf16.gmra.mrb[0].mxu0 %v507
        %v997 = vpop.f32.mrb[0].mxu0
        %v998 = vadd.f32 %v376, %v997
        %v999 = vpop.f32.mrb[0].mxu0
        %v1000 = vadd.f32 %v380, %v999
        %v1001 = vpop.f32.mrb[0].mxu0
        %v1002 = vadd.f32 %v376, %v1001
        %v1003 = vpop.f32.mrb[0].mxu0
        %v1004 = vadd.f32 %v380, %v1003
        %1005 = vmatprep.mubr.bf16.mxu0 %v510
        %1006 = vmatmul.mubr.bf16.gmra.mrb[0].mxu0 %v509
        %v1007 = vpop.f32.mrb[0].mxu0
        %v1008 = vadd.f32 %v376, %v1007
        %v1009 = vpop.f32.mrb[0].mxu0
        %v1010 = vadd.f32 %v380, %v1009
        %v1011 = vpop.f32.mrb[0].mxu0
        %v1012 = vadd.f32 %v376, %v1011
        %v1013 = vpop.f32.mrb[0].mxu0
        %v1014 = vadd.f32 %v380, %v1013
        %1015 = vmatprep.mubr.bf16.mxu0 %v512
        %1016 = vmatmul.mubr.bf16.gmra.mrb[0].mxu0 %v511
        %v1017 = vpop.f32.mrb[0].mxu0
        %v1018 = vadd.f32 %v376, %v1017
        %v1019 = vpop.f32.mrb[0].mxu0
        %v1020 = vadd.f32 %v380, %v1019
        %v1021 = vpop.f32.mrb[0].mxu0
        %v1022 = vadd.f32 %v376, %v1021
        %v1023 = vpop.f32.mrb[0].mxu0
        %v1024 = vadd.f32 %v380, %v1023
        %1025 = vmatprep.mubr.bf16.mxu0 %v514
        %1026 = vmatmul.mubr.bf16.gmra.mrb[0].mxu0 %v513
        %v1027 = vpop.f32.mrb[0].mxu0
        %v1028 = vadd.f32 %v376, %v1027
        %v1029 = vpop.f32.mrb[0].mxu0
        %v1030 = vadd.f32 %v380, %v1029
        %v1031 = vpop.f32.mrb[0].mxu0
        %v1032 = vadd.f32 %v376, %v1031
        %v1033 = vpop.f32.mrb[0].mxu0
        %v1034 = vadd.f32 %v380, %v1033
        %1035 = vmatprep.mubr.bf16.mxu0 %v516
        %1036 = vmatmul.mubr.bf16.gmra.mrb[0].mxu0 %v515
        %v1037 = vpop.f32.mrb[0].mxu0
        %v1038 = vadd.f32 %v376, %v1037
        %v1039 = vpop.f32.mrb[0].mxu0
        %v1040 = vadd.f32 %v380, %v1039
        %v1041 = vpop.f32.mrb[0].mxu0
        %v1042 = vadd.f32 %v376, %v1041
        %v1043 = vpop.f32.mrb[0].mxu0
        %v1044 = vadd.f32 %v380, %v1043
        %1045 = vmatprep.mubr.bf16.mxu0 %v518
        %1046 = vmatmul.mubr.bf16.gmra.mrb[0].mxu0 %v517
        %v1047 = vpop.f32.mrb[0].mxu0
        %v1048 = vadd.f32 %v376, %v1047
        %v1049 = vpop.f32.mrb[0].mxu0
        %v1050 = vadd.f32 %v380, %v1049
        %v1051 = vpop.f32.mrb[0].mxu0
        %v1052 = vadd.f32 %v376, %v1051
        %v1053 = vpop.f32.mrb[0].mxu0
        %v1054 = vadd.f32 %v380, %v1053
        %1055 = vmatprep.mubr.bf16.mxu0 %v520
        %1056 = vmatmul.mubr.bf16.gmra.mrb[0].mxu0 %v519
        %v1057 = vpop.f32.mrb[0].mxu0
        %v1058 = vadd.f32 %v376, %v1057
        %v1059 = vpop.f32.mrb[0].mxu0
        %v1060 = vadd.f32 %v380, %v1059
        %v1061 = vpop.f32.mrb[0].mxu0
        %v1062 = vadd.f32 %v376, %v1061
        %v1063 = vpop.f32.mrb[0].mxu0
        %v1064 = vadd.f32 %v380, %v1063
        %1065 = vdwg.mxu0
        %1066 = vmatprep.subr.bf16.mxu0 %v748
        %1067 = vmatpush1.bf16.msra.mxu0 %v747
        %1068 = vmatprep.subr.bf16.mxu0 %v752
        %1069 = vmatpush1.bf16.msra.mxu0 %v751
        %1070 = vmatprep.subr.bf16.mxu0 %v756
        %1071 = vmatpush1.bf16.msra.mxu0 %v755
        %1072 = vmatprep.subr.bf16.mxu0 %v760
        %1073 = vmatpush1.bf16.msra.mxu0 %v759
        %1074 = vmatprep.subr.bf16.mxu0 %v764
        %1075 = vmatpush1.bf16.msra.mxu0 %v763
        %1076 = vmatprep.subr.bf16.mxu0 %v768
        %1077 = vmatpush1.bf16.msra.mxu0 %v767
        %1078 = vmatprep.subr.bf16.mxu0 %v772
        %1079 = vmatpush1.bf16.msra.mxu0 %v771
        %1080 = vmatprep.subr.bf16.mxu0 %v776
        %1081 = vmatpush1.bf16.msra.mxu0 %v775
        %1082 = vmatprep.subr.bf16.mxu0 %v780
        %1083 = vmatpush1.bf16.msra.mxu0 %v779
        %1084 = vmatprep.subr.bf16.mxu0 %v784
        %1085 = vmatpush1.bf16.msra.mxu0 %v783
        %1086 = vmatprep.subr.bf16.mxu0 %v788
        %1087 = vmatpush1.bf16.msra.mxu0 %v787
        %1088 = vmatprep.subr.bf16.mxu0 %v792
        %1089 = vmatpush1.bf16.msra.mxu0 %v791
        %1090 = vmatprep.subr.bf16.mxu0 %v796
        %1091 = vmatpush1.bf16.msra.mxu0 %v795
        %1092 = vmatprep.subr.bf16.mxu0 %v800
        %1093 = vmatpush1.bf16.msra.mxu0 %v799
        %1094 = vmatprep.subr.bf16.mxu0 %v804
        %1095 = vmatpush1.bf16.msra.mxu0 %v803
        %1096 = vmatprep.subr.bf16.mxu0 %v808
        %1097 = vmatpush1.bf16.msra.mxu0 %v807
        %1098 = vmatprep.mubr.bf16.mxu0 %v490
        %1099 = vmatmul.mubr.bf16.gmra.mrb[0].mxu0 %v489
        %v1100 = vpop.f32.mrb[0].mxu0
        %v1101 = vadd.f32 %v384, %v1100
        %v1102 = vpop.f32.mrb[0].mxu0
        %v1103 = vadd.f32 %v388, %v1102
        %v1104 = vpop.f32.mrb[0].mxu0
        %v1105 = vadd.f32 %v384, %v1104
        %v1106 = vpop.f32.mrb[0].mxu0
        %v1107 = vadd.f32 %v388, %v1106
        %1108 = vmatprep.mubr.bf16.mxu0 %v492
        %1109 = vmatmul.mubr.bf16.gmra.mrb[0].mxu0 %v491
        %v1110 = vpop.f32.mrb[0].mxu0
        %v1111 = vadd.f32 %v384, %v1110
        %v1112 = vpop.f32.mrb[0].mxu0
        %v1113 = vadd.f32 %v388, %v1112
        %v1114 = vpop.f32.mrb[0].mxu0
        %v1115 = vadd.f32 %v384, %v1114
        %v1116 = vpop.f32.mrb[0].mxu0
        %v1117 = vadd.f32 %v388, %v1116
        %1118 = vmatprep.mubr.bf16.mxu0 %v494
        %1119 = vmatmul.mubr.bf16.gmra.mrb[0].mxu0 %v493
        %v1120 = vpop.f32.mrb[0].mxu0
        %v1121 = vadd.f32 %v384, %v1120
        %v1122 = vpop.f32.mrb[0].mxu0
        %v1123 = vadd.f32 %v388, %v1122
        %v1124 = vpop.f32.mrb[0].mxu0
        %v1125 = vadd.f32 %v384, %v1124
        %v1126 = vpop.f32.mrb[0].mxu0
        %v1127 = vadd.f32 %v388, %v1126
        %1128 = vmatprep.mubr.bf16.mxu0 %v496
        %1129 = vmatmul.mubr.bf16.gmra.mrb[0].mxu0 %v495
        %v1130 = vpop.f32.mrb[0].mxu0
        %v1131 = vadd.f32 %v384, %v1130
        %v1132 = vpop.f32.mrb[0].mxu0
        %v1133 = vadd.f32 %v388, %v1132
        %v1134 = vpop.f32.mrb[0].mxu0
        %v1135 = vadd.f32 %v384, %v1134
        %v1136 = vpop.f32.mrb[0].mxu0
        %v1137 = vadd.f32 %v388, %v1136
        %1138 = vmatprep.mubr.bf16.mxu0 %v498
        %1139 = vmatmul.mubr.bf16.gmra.mrb[0].mxu0 %v497
        %v1140 = vpop.f32.mrb[0].mxu0
        %v1141 = vadd.f32 %v384, %v1140
        %v1142 = vpop.f32.mrb[0].mxu0
        %v1143 = vadd.f32 %v388, %v1142
        %v1144 = vpop.f32.mrb[0].mxu0
        %v1145 = vadd.f32 %v384, %v1144
        %v1146 = vpop.f32.mrb[0].mxu0
        %v1147 = vadd.f32 %v388, %v1146
        %1148 = vmatprep.mubr.bf16.mxu0 %v500
        %1149 = vmatmul.mubr.bf16.gmra.mrb[0].mxu0 %v499
        %v1150 = vpop.f32.mrb[0].mxu0
        %v1151 = vadd.f32 %v384, %v1150
        %v1152 = vpop.f32.mrb[0].mxu0
        %v1153 = vadd.f32 %v388, %v1152
        %v1154 = vpop.f32.mrb[0].mxu0
        %v1155 = vadd.f32 %v384, %v1154
        %v1156 = vpop.f32.mrb[0].mxu0
        %v1157 = vadd.f32 %v388, %v1156
        %1158 = vmatprep.mubr.bf16.mxu0 %v502
        %1159 = vmatmul.mubr.bf16.gmra.mrb[0].mxu0 %v501
        %v1160 = vpop.f32.mrb[0].mxu0
        %v1161 = vadd.f32 %v384, %v1160
        %v1162 = vpop.f32.mrb[0].mxu0
        %v1163 = vadd.f32 %v388, %v1162
        %v1164 = vpop.f32.mrb[0].mxu0
        %v1165 = vadd.f32 %v384, %v1164
        %v1166 = vpop.f32.mrb[0].mxu0
        %v1167 = vadd.f32 %v388, %v1166
        %1168 = vmatprep.mubr.bf16.mxu0 %v504
        %1169 = vmatmul.mubr.bf16.gmra.mrb[0].mxu0 %v503
        %v1170 = vpop.f32.mrb[0].mxu0
        %v1171 = vadd.f32 %v384, %v1170
        %v1172 = vpop.f32.mrb[0].mxu0
        %v1173 = vadd.f32 %v388, %v1172
        %v1174 = vpop.f32.mrb[0].mxu0
        %v1175 = vadd.f32 %v384, %v1174
        %v1176 = vpop.f32.mrb[0].mxu0
        %v1177 = vadd.f32 %v388, %v1176
        %1178 = vmatprep.mubr.bf16.mxu0 %v506
        %1179 = vmatmul.mubr.bf16.gmra.mrb[0].mxu0 %v505
        %v1180 = vpop.f32.mrb[0].mxu0
        %v1181 = vadd.f32 %v384, %v1180
        %v1182 = vpop.f32.mrb[0].mxu0
        %v1183 = vadd.f32 %v388, %v1182
        %v1184 = vpop.f32.mrb[0].mxu0
        %v1185 = vadd.f32 %v384, %v1184
        %v1186 = vpop.f32.mrb[0].mxu0
        %v1187 = vadd.f32 %v388, %v1186
        %1188 = vmatprep.mubr.bf16.mxu0 %v508
        %1189 = vmatmul.mubr.bf16.gmra.mrb[0].mxu0 %v507
        %v1190 = vpop.f32.mrb[0].mxu0
        %v1191 = vadd.f32 %v384, %v1190
        %v1192 = vpop.f32.mrb[0].mxu0
        %v1193 = vadd.f32 %v388, %v1192
        %v1194 = vpop.f32.mrb[0].mxu0
        %v1195 = vadd.f32 %v384, %v1194
        %v1196 = vpop.f32.mrb[0].mxu0
        %v1197 = vadd.f32 %v388, %v1196
        %1198 = vmatprep.mubr.bf16.mxu0 %v510
        %1199 = vmatmul.mubr.bf16.gmra.mrb[0].mxu0 %v509
        %v1200 = vpop.f32.mrb[0].mxu0
        %v1201 = vadd.f32 %v384, %v1200
        %v1202 = vpop.f32.mrb[0].mxu0
        %v1203 = vadd.f32 %v388, %v1202
        %v1204 = vpop.f32.mrb[0].mxu0
        %v1205 = vadd.f32 %v384, %v1204
        %v1206 = vpop.f32.mrb[0].mxu0
        %v1207 = vadd.f32 %v388, %v1206
        %1208 = vmatprep.mubr.bf16.mxu0 %v512
        %1209 = vmatmul.mubr.bf16.gmra.mrb[0].mxu0 %v511
        %v1210 = vpop.f32.mrb[0].mxu0
        %v1211 = vadd.f32 %v384, %v1210
        %v1212 = vpop.f32.mrb[0].mxu0
        %v1213 = vadd.f32 %v388, %v1212
        %v1214 = vpop.f32.mrb[0].mxu0
        %v1215 = vadd.f32 %v384, %v1214
        %v1216 = vpop.f32.mrb[0].mxu0
        %v1217 = vadd.f32 %v388, %v1216
        %1218 = vmatprep.mubr.bf16.mxu0 %v514
        %1219 = vmatmul.mubr.bf16.gmra.mrb[0].mxu0 %v513
        %v1220 = vpop.f32.mrb[0].mxu0
        %v1221 = vadd.f32 %v384, %v1220
        %v1222 = vpop.f32.mrb[0].mxu0
        %v1223 = vadd.f32 %v388, %v1222
        %v1224 = vpop.f32.mrb[0].mxu0
        %v1225 = vadd.f32 %v384, %v1224
        %v1226 = vpop.f32.mrb[0].mxu0
        %v1227 = vadd.f32 %v388, %v1226
        %1228 = vmatprep.mubr.bf16.mxu0 %v516
        %1229 = vmatmul.mubr.bf16.gmra.mrb[0].mxu0 %v515
        %v1230 = vpop.f32.mrb[0].mxu0
        %v1231 = vadd.f32 %v384, %v1230
        %v1232 = vpop.f32.mrb[0].mxu0
        %v1233 = vadd.f32 %v388, %v1232
        %v1234 = vpop.f32.mrb[0].mxu0
        %v1235 = vadd.f32 %v384, %v1234
        %v1236 = vpop.f32.mrb[0].mxu0
        %v1237 = vadd.f32 %v388, %v1236
        %1238 = vmatprep.mubr.bf16.mxu0 %v518
        %1239 = vmatmul.mubr.bf16.gmra.mrb[0].mxu0 %v517
        %v1240 = vpop.f32.mrb[0].mxu0
        %v1241 = vadd.f32 %v384, %v1240
        %v1242 = vpop.f32.mrb[0].mxu0
        %v1243 = vadd.f32 %v388, %v1242
        %v1244 = vpop.f32.mrb[0].mxu0
        %v1245 = vadd.f32 %v384, %v1244
        %v1246 = vpop.f32.mrb[0].mxu0
        %v1247 = vadd.f32 %v388, %v1246
        %1248 = vmatprep.mubr.bf16.mxu0 %v520
        %1249 = vmatmul.mubr.bf16.gmra.mrb[0].mxu0 %v519
        %v1250 = vpop.f32.mrb[0].mxu0
        %v1251 = vadd.f32 %v384, %v1250
        %v1252 = vpop.f32.mrb[0].mxu0
        %v1253 = vadd.f32 %v388, %v1252
        %v1254 = vpop.f32.mrb[0].mxu0
        %v1255 = vadd.f32 %v384, %v1254
        %v1256 = vpop.f32.mrb[0].mxu0
        %v1257 = vadd.f32 %v388, %v1256
        %1258 = vdwg.mxu0
        %v1259 = vmul.f32 %v908, 0.5
        %v1260 = vmul.f32 %v910, 0.5
        %v1261 = vmul.f32 %v1101, 0.5
        %v1262 = vmul.f32 %v1103, 0.5
        %v1263 = vmul.f32 %v912, 0.5
        %v1264 = vmul.f32 %v914, 0.5
        %v1265 = vmul.f32 %v1105, 0.5
        %v1266 = vmul.f32 %v1107, 0.5
        %v1267 = vmul.f32 %v918, 0.5
        %v1268 = vmul.f32 %v920, 0.5
        %v1269 = vmul.f32 %v1111, 0.5
        %v1270 = vmul.f32 %v1113, 0.5
        %v1271 = vmul.f32 %v922, 0.5
        %v1272 = vmul.f32 %v924, 0.5
        %v1273 = vmul.f32 %v1115, 0.5
        %v1274 = vmul.f32 %v1117, 0.5
        %v1275 = vmul.f32 %v928, 0.5
        %v1276 = vmul.f32 %v930, 0.5
        %v1277 = vmul.f32 %v1121, 0.5
        %v1278 = vmul.f32 %v1123, 0.5
        %v1279 = vmul.f32 %v932, 0.5
        %v1280 = vmul.f32 %v934, 0.5
        %v1281 = vmul.f32 %v1125, 0.5
        %v1282 = vmul.f32 %v1127, 0.5
        %v1283 = vmul.f32 %v938, 0.5
        %v1284 = vmul.f32 %v940, 0.5
        %v1285 = vmul.f32 %v1131, 0.5
        %v1286 = vmul.f32 %v1133, 0.5
        %v1287 = vmul.f32 %v942, 0.5
        %v1288 = vmul.f32 %v944, 0.5
        %v1289 = vmul.f32 %v1135, 0.5
        %v1290 = vmul.f32 %v1137, 0.5
        %v1291 = vmul.f32 %v948, 0.5
        %v1292 = vmul.f32 %v950, 0.5
        %v1293 = vmul.f32 %v1141, 0.5
        %v1294 = vmul.f32 %v1143, 0.5
        %v1295 = vmul.f32 %v952, 0.5
        %v1296 = vmul.f32 %v954, 0.5
        %v1297 = vmul.f32 %v1145, 0.5
        %v1298 = vmul.f32 %v1147, 0.5
        %v1299 = vmul.f32 %v958, 0.5
        %v1300 = vmul.f32 %v960, 0.5
        %v1301 = vmul.f32 %v1151, 0.5
        %v1302 = vmul.f32 %v1153, 0.5
        %v1303 = vmul.f32 %v962, 0.5
        %v1304 = vmul.f32 %v964, 0.5
        %v1305 = vmul.f32 %v1155, 0.5
        %v1306 = vmul.f32 %v1157, 0.5
        %v1307 = vmul.f32 %v968, 0.5
        %v1308 = vmul.f32 %v970, 0.5
        %v1309 = vmul.f32 %v1161, 0.5
        %v1310 = vmul.f32 %v1163, 0.5
        %v1311 = vmul.f32 %v972, 0.5
        %v1312 = vmul.f32 %v974, 0.5
        %v1313 = vmul.f32 %v1165, 0.5
        %v1314 = vmul.f32 %v1167, 0.5
        %v1315 = vmul.f32 %v978, 0.5
        %v1316 = vmul.f32 %v980, 0.5
        %v1317 = vmul.f32 %v1171, 0.5
        %v1318 = vmul.f32 %v1173, 0.5
        %v1319 = vmul.f32 %v982, 0.5
        %v1320 = vmul.f32 %v984, 0.5
        %v1321 = vmul.f32 %v1175, 0.5
        %v1322 = vmul.f32 %v1177, 0.5
        %v1323 = vmul.f32 %v988, 0.5
        %v1324 = vmul.f32 %v990, 0.5
        %v1325 = vmul.f32 %v1181, 0.5
        %v1326 = vmul.f32 %v1183, 0.5
        %v1327 = vmul.f32 %v992, 0.5
        %v1328 = vmul.f32 %v994, 0.5
        %v1329 = vmul.f32 %v1185, 0.5
        %v1330 = vmul.f32 %v1187, 0.5
        %v1331 = vmul.f32 %v998, 0.5
        %v1332 = vmul.f32 %v1000, 0.5
        %v1333 = vmul.f32 %v1191, 0.5
        %v1334 = vmul.f32 %v1193, 0.5
        %v1335 = vmul.f32 %v1002, 0.5
        %v1336 = vmul.f32 %v1004, 0.5
        %v1337 = vmul.f32 %v1195, 0.5
        %v1338 = vmul.f32 %v1197, 0.5
        %v1339 = vmul.f32 %v1008, 0.5
        %v1340 = vmul.f32 %v1010, 0.5
        %v1341 = vmul.f32 %v1201, 0.5
        %v1342 = vmul.f32 %v1203, 0.5
        %v1343 = vmul.f32 %v1012, 0.5
        %v1344 = vmul.f32 %v1014, 0.5
        %v1345 = vmul.f32 %v1205, 0.5
        %v1346 = vmul.f32 %v1207, 0.5
        %v1347 = vmul.f32 %v1018, 0.5
        %v1348 = vmul.f32 %v1020, 0.5
        %v1349 = vmul.f32 %v1211, 0.5
        %v1350 = vmul.f32 %v1213, 0.5
        %v1351 = vmul.f32 %v1022, 0.5
        %v1352 = vmul.f32 %v1024, 0.5
        %v1353 = vmul.f32 %v1215, 0.5
        %v1354 = vmul.f32 %v1217, 0.5
        %v1355 = vmul.f32 %v1028, 0.5
        %v1356 = vmul.f32 %v1030, 0.5
        %v1357 = vmul.f32 %v1221, 0.5
        %v1358 = vmul.f32 %v1223, 0.5
        %v1359 = vmul.f32 %v1032, 0.5
        %v1360 = vmul.f32 %v1034, 0.5
        %v1361 = vmul.f32 %v1225, 0.5
        %v1362 = vmul.f32 %v1227, 0.5
        %v1363 = vmul.f32 %v1038, 0.5
        %v1364 = vmul.f32 %v1040, 0.5
        %v1365 = vmul.f32 %v1231, 0.5
        %v1366 = vmul.f32 %v1233, 0.5
        %v1367 = vmul.f32 %v1042, 0.5
        %v1368 = vmul.f32 %v1044, 0.5
        %v1369 = vmul.f32 %v1235, 0.5
        %v1370 = vmul.f32 %v1237, 0.5
        %v1371 = vmul.f32 %v1048, 0.5
        %v1372 = vmul.f32 %v1050, 0.5
        %v1373 = vmul.f32 %v1241, 0.5
        %v1374 = vmul.f32 %v1243, 0.5
        %v1375 = vmul.f32 %v1052, 0.5
        %v1376 = vmul.f32 %v1054, 0.5
        %v1377 = vmul.f32 %v1245, 0.5
        %v1378 = vmul.f32 %v1247, 0.5
        %v1379 = vmul.f32 %v1058, 0.5
        %v1380 = vmul.f32 %v1060, 0.5
        %v1381 = vmul.f32 %v1251, 0.5
        %v1382 = vmul.f32 %v1253, 0.5
        %v1383 = vmul.f32 %v1062, 0.5
        %v1384 = vmul.f32 %v1064, 0.5
        %v1385 = vmul.f32 %v1255, 0.5
        %v1386 = vmul.f32 %v1257, 0.5
        %v1387 = vmul.f32 %v908, 0.044715
        %v1388 = vmul.f32 %v910, 0.044715
        %v1389 = vmul.f32 %v1101, 0.044715
        %v1390 = vmul.f32 %v1103, 0.044715
        %v1391 = vmul.f32 %v912, 0.044715
        %v1392 = vmul.f32 %v914, 0.044715
        %v1393 = vmul.f32 %v1105, 0.044715
        %v1394 = vmul.f32 %v1107, 0.044715
        %v1395 = vmul.f32 %v918, 0.044715
        %v1396 = vmul.f32 %v920, 0.044715
        %v1397 = vmul.f32 %v1111, 0.044715
        %v1398 = vmul.f32 %v1113, 0.044715
        %v1399 = vmul.f32 %v922, 0.044715
        %v1400 = vmul.f32 %v924, 0.044715
        %v1401 = vmul.f32 %v1115, 0.044715
        %v1402 = vmul.f32 %v1117, 0.044715
        %v1403 = vmul.f32 %v928, 0.044715
        %v1404 = vmul.f32 %v930, 0.044715
        %v1405 = vmul.f32 %v1121, 0.044715
        %v1406 = vmul.f32 %v1123, 0.044715
        %v1407 = vmul.f32 %v932, 0.044715
        %v1408 = vmul.f32 %v934, 0.044715
        %v1409 = vmul.f32 %v1125, 0.044715
        %v1410 = vmul.f32 %v1127, 0.044715
        %v1411 = vmul.f32 %v938, 0.044715
        %v1412 = vmul.f32 %v940, 0.044715
        %v1413 = vmul.f32 %v1131, 0.044715
        %v1414 = vmul.f32 %v1133, 0.044715
        %v1415 = vmul.f32 %v942, 0.044715
        %v1416 = vmul.f32 %v944, 0.044715
        %v1417 = vmul.f32 %v1135, 0.044715
        %v1418 = vmul.f32 %v1137, 0.044715
        %v1419 = vmul.f32 %v948, 0.044715
        %v1420 = vmul.f32 %v950, 0.044715
        %v1421 = vmul.f32 %v1141, 0.044715
        %v1422 = vmul.f32 %v1143, 0.044715
        %v1423 = vmul.f32 %v952, 0.044715
        %v1424 = vmul.f32 %v954, 0.044715
        %v1425 = vmul.f32 %v1145, 0.044715
        %v1426 = vmul.f32 %v1147, 0.044715
        %v1427 = vmul.f32 %v958, 0.044715
        %v1428 = vmul.f32 %v960, 0.044715
        %v1429 = vmul.f32 %v1151, 0.044715
        %v1430 = vmul.f32 %v1153, 0.044715
        %v1431 = vmul.f32 %v962, 0.044715
        %v1432 = vmul.f32 %v964, 0.044715
        %v1433 = vmul.f32 %v1155, 0.044715
        %v1434 = vmul.f32 %v1157, 0.044715
        %v1435 = vmul.f32 %v968, 0.044715
        %v1436 = vmul.f32 %v970, 0.044715
        %v1437 = vmul.f32 %v1161, 0.044715
        %v1438 = vmul.f32 %v1163, 0.044715
        %v1439 = vmul.f32 %v972, 0.044715
        %v1440 = vmul.f32 %v974, 0.044715
        %v1441 = vmul.f32 %v1165, 0.044715
        %v1442 = vmul.f32 %v1167, 0.044715
        %v1443 = vmul.f32 %v978, 0.044715
        %v1444 = vmul.f32 %v980, 0.044715
        %v1445 = vmul.f32 %v1171, 0.044715
        %v1446 = vmul.f32 %v1173, 0.044715
        %v1447 = vmul.f32 %v982, 0.044715
        %v1448 = vmul.f32 %v984, 0.044715
        %v1449 = vmul.f32 %v1175, 0.044715
        %v1450 = vmul.f32 %v1177, 0.044715
        %v1451 = vmul.f32 %v988, 0.044715
        %v1452 = vmul.f32 %v990, 0.044715
        %v1453 = vmul.f32 %v1181, 0.044715
        %v1454 = vmul.f32 %v1183, 0.044715
        %v1455 = vmul.f32 %v992, 0.044715
        %v1456 = vmul.f32 %v994, 0.044715
        %v1457 = vmul.f32 %v1185, 0.044715
        %v1458 = vmul.f32 %v1187, 0.044715
        %v1459 = vmul.f32 %v998, 0.044715
        %v1460 = vmul.f32 %v1000, 0.044715
        %v1461 = vmul.f32 %v1191, 0.044715
        %v1462 = vmul.f32 %v1193, 0.044715
        %v1463 = vmul.f32 %v1002, 0.044715
        %v1464 = vmul.f32 %v1004, 0.044715
        %v1465 = vmul.f32 %v1195, 0.044715
        %v1466 = vmul.f32 %v1197, 0.044715
        %v1467 = vmul.f32 %v1008, 0.044715
        %v1468 = vmul.f32 %v1010, 0.044715
        %v1469 = vmul.f32 %v1201, 0.044715
        %v1470 = vmul.f32 %v1203, 0.044715
        %v1471 = vmul.f32 %v1012, 0.044715
        %v1472 = vmul.f32 %v1014, 0.044715
        %v1473 = vmul.f32 %v1205, 0.044715
        %v1474 = vmul.f32 %v1207, 0.044715
        %v1475 = vmul.f32 %v1018, 0.044715
        %v1476 = vmul.f32 %v1020, 0.044715
        %v1477 = vmul.f32 %v1211, 0.044715
        %v1478 = vmul.f32 %v1213, 0.044715
        %v1479 = vmul.f32 %v1022, 0.044715
        %v1480 = vmul.f32 %v1024, 0.044715
        %v1481 = vmul.f32 %v1215, 0.044715
        %v1482 = vmul.f32 %v1217, 0.044715
        %v1483 = vmul.f32 %v1028, 0.044715
        %v1484 = vmul.f32 %v1030, 0.044715
        %v1485 = vmul.f32 %v1221, 0.044715
        %v1486 = vmul.f32 %v1223, 0.044715
        %v1487 = vmul.f32 %v1032, 0.044715
        %v1488 = vmul.f32 %v1034, 0.044715
        %v1489 = vmul.f32 %v1225, 0.044715
        %v1490 = vmul.f32 %v1227, 0.044715
        %v1491 = vmul.f32 %v1038, 0.044715
        %v1492 = vmul.f32 %v1040, 0.044715
        %v1493 = vmul.f32 %v1231, 0.044715
        %v1494 = vmul.f32 %v1233, 0.044715
        %v1495 = vmul.f32 %v1042, 0.044715
        %v1496 = vmul.f32 %v1044, 0.044715
        %v1497 = vmul.f32 %v1235, 0.044715
        %v1498 = vmul.f32 %v1237, 0.044715
        %v1499 = vmul.f32 %v1048, 0.044715
        %v1500 = vmul.f32 %v1050, 0.044715
        %v1501 = vmul.f32 %v1241, 0.044715
        %v1502 = vmul.f32 %v1243, 0.044715
        %v1503 = vmul.f32 %v1052, 0.044715
        %v1504 = vmul.f32 %v1054, 0.044715
        %v1505 = vmul.f32 %v1245, 0.044715
        %v1506 = vmul.f32 %v1247, 0.044715
        %v1507 = vmul.f32 %v1058, 0.044715
        %v1508 = vmul.f32 %v1060, 0.044715
        %v1509 = vmul.f32 %v1251, 0.044715
        %v1510 = vmul.f32 %v1253, 0.044715
        %v1511 = vmul.f32 %v1062, 0.044715
        %v1512 = vmul.f32 %v1064, 0.044715
        %v1513 = vmul.f32 %v1255, 0.044715
        %v1514 = vmul.f32 %v1257, 0.044715
        %v1515 = vmul.f32 %v1387, %v908
        %v1516 = vmul.f32 %v1388, %v910
        %v1517 = vmul.f32 %v1389, %v1101
        %v1518 = vmul.f32 %v1390, %v1103
        %v1519 = vmul.f32 %v1391, %v912
        %v1520 = vmul.f32 %v1392, %v914
        %v1521 = vmul.f32 %v1393, %v1105
        %v1522 = vmul.f32 %v1394, %v1107
        %v1523 = vmul.f32 %v1395, %v918
        %v1524 = vmul.f32 %v1396, %v920
        %v1525 = vmul.f32 %v1397, %v1111
        %v1526 = vmul.f32 %v1398, %v1113
        %v1527 = vmul.f32 %v1399, %v922
        %v1528 = vmul.f32 %v1400, %v924
        %v1529 = vmul.f32 %v1401, %v1115
        %v1530 = vmul.f32 %v1402, %v1117
        %v1531 = vmul.f32 %v1403, %v928
        %v1532 = vmul.f32 %v1404, %v930
        %v1533 = vmul.f32 %v1405, %v1121
        %v1534 = vmul.f32 %v1406, %v1123
        %v1535 = vmul.f32 %v1407, %v932
        %v1536 = vmul.f32 %v1408, %v934
        %v1537 = vmul.f32 %v1409, %v1125
        %v1538 = vmul.f32 %v1410, %v1127
        %v1539 = vmul.f32 %v1411, %v938
        %v1540 = vmul.f32 %v1412, %v940
        %v1541 = vmul.f32 %v1413, %v1131
        %v1542 = vmul.f32 %v1414, %v1133
        %v1543 = vmul.f32 %v1415, %v942
        %v1544 = vmul.f32 %v1416, %v944
        %v1545 = vmul.f32 %v1417, %v1135
        %v1546 = vmul.f32 %v1418, %v1137
        %v1547 = vmul.f32 %v1419, %v948
        %v1548 = vmul.f32 %v1420, %v950
        %v1549 = vmul.f32 %v1421, %v1141
        %v1550 = vmul.f32 %v1422, %v1143
        %v1551 = vmul.f32 %v1423, %v952
        %v1552 = vmul.f32 %v1424, %v954
        %v1553 = vmul.f32 %v1425, %v1145
        %v1554 = vmul.f32 %v1426, %v1147
        %v1555 = vmul.f32 %v1427, %v958
        %v1556 = vmul.f32 %v1428, %v960
        %v1557 = vmul.f32 %v1429, %v1151
        %v1558 = vmul.f32 %v1430, %v1153
        %v1559 = vmul.f32 %v1431, %v962
        %v1560 = vmul.f32 %v1432, %v964
        %v1561 = vmul.f32 %v1433, %v1155
        %v1562 = vmul.f32 %v1434, %v1157
        %v1563 = vmul.f32 %v1435, %v968
        %v1564 = vmul.f32 %v1436, %v970
        %v1565 = vmul.f32 %v1437, %v1161
        %v1566 = vmul.f32 %v1438, %v1163
        %v1567 = vmul.f32 %v1439, %v972
        %v1568 = vmul.f32 %v1440, %v974
        %v1569 = vmul.f32 %v1441, %v1165
        %v1570 = vmul.f32 %v1442, %v1167
        %v1571 = vmul.f32 %v1443, %v978
        %v1572 = vmul.f32 %v1444, %v980
        %v1573 = vmul.f32 %v1445, %v1171
        %v1574 = vmul.f32 %v1446, %v1173
        %v1575 = vmul.f32 %v1447, %v982
        %v1576 = vmul.f32 %v1448, %v984
        %v1577 = vmul.f32 %v1449, %v1175
        %v1578 = vmul.f32 %v1450, %v1177
        %v1579 = vmul.f32 %v1451, %v988
        %v1580 = vmul.f32 %v1452, %v990
        %v1581 = vmul.f32 %v1453, %v1181
        %v1582 = vmul.f32 %v1454, %v1183
        %v1583 = vmul.f32 %v1455, %v992
        %v1584 = vmul.f32 %v1456, %v994
        %v1585 = vmul.f32 %v1457, %v1185
        %v1586 = vmul.f32 %v1458, %v1187
        %v1587 = vmul.f32 %v1459, %v998
        %v1588 = vmul.f32 %v1460, %v1000
        %v1589 = vmul.f32 %v1461, %v1191
        %v1590 = vmul.f32 %v1462, %v1193
        %v1591 = vmul.f32 %v1463, %v1002
        %v1592 = vmul.f32 %v1464, %v1004
        %v1593 = vmul.f32 %v1465, %v1195
        %v1594 = vmul.f32 %v1466, %v1197
        %v1595 = vmul.f32 %v1467, %v1008
        %v1596 = vmul.f32 %v1468, %v1010
        %v1597 = vmul.f32 %v1469, %v1201
        %v1598 = vmul.f32 %v1470, %v1203
        %v1599 = vmul.f32 %v1471, %v1012
        %v1600 = vmul.f32 %v1472, %v1014
        %v1601 = vmul.f32 %v1473, %v1205
        %v1602 = vmul.f32 %v1474, %v1207
        %v1603 = vmul.f32 %v1475, %v1018
        %v1604 = vmul.f32 %v1476, %v1020
        %v1605 = vmul.f32 %v1477, %v1211
        %v1606 = vmul.f32 %v1478, %v1213
        %v1607 = vmul.f32 %v1479, %v1022
        %v1608 = vmul.f32 %v1480, %v1024
        %v1609 = vmul.f32 %v1481, %v1215
        %v1610 = vmul.f32 %v1482, %v1217
        %v1611 = vmul.f32 %v1483, %v1028
        %v1612 = vmul.f32 %v1484, %v1030
        %v1613 = vmul.f32 %v1485, %v1221
        %v1614 = vmul.f32 %v1486, %v1223
        %v1615 = vmul.f32 %v1487, %v1032
        %v1616 = vmul.f32 %v1488, %v1034
        %v1617 = vmul.f32 %v1489, %v1225
        %v1618 = vmul.f32 %v1490, %v1227
        %v1619 = vmul.f32 %v1491, %v1038
        %v1620 = vmul.f32 %v1492, %v1040
        %v1621 = vmul.f32 %v1493, %v1231
        %v1622 = vmul.f32 %v1494, %v1233
        %v1623 = vmul.f32 %v1495, %v1042
        %v1624 = vmul.f32 %v1496, %v1044
        %v1625 = vmul.f32 %v1497, %v1235
        %v1626 = vmul.f32 %v1498, %v1237
        %v1627 = vmul.f32 %v1499, %v1048
        %v1628 = vmul.f32 %v1500, %v1050
        %v1629 = vmul.f32 %v1501, %v1241
        %v1630 = vmul.f32 %v1502, %v1243
        %v1631 = vmul.f32 %v1503, %v1052
        %v1632 = vmul.f32 %v1504, %v1054
        %v1633 = vmul.f32 %v1505, %v1245
        %v1634 = vmul.f32 %v1506, %v1247
        %v1635 = vmul.f32 %v1507, %v1058
        %v1636 = vmul.f32 %v1508, %v1060
        %v1637 = vmul.f32 %v1509, %v1251
        %v1638 = vmul.f32 %v1510, %v1253
        %v1639 = vmul.f32 %v1511, %v1062
        %v1640 = vmul.f32 %v1512, %v1064
        %v1641 = vmul.f32 %v1513, %v1255
        %v1642 = vmul.f32 %v1514, %v1257
        %v1643 = vmul.f32 %v1515, %v908
        %v1644 = vmul.f32 %v1516, %v910
        %v1645 = vmul.f32 %v1517, %v1101
        %v1646 = vmul.f32 %v1518, %v1103
        %v1647 = vmul.f32 %v1519, %v912
        %v1648 = vmul.f32 %v1520, %v914
        %v1649 = vmul.f32 %v1521, %v1105
        %v1650 = vmul.f32 %v1522, %v1107
        %v1651 = vmul.f32 %v1523, %v918
        %v1652 = vmul.f32 %v1524, %v920
        %v1653 = vmul.f32 %v1525, %v1111
        %v1654 = vmul.f32 %v1526, %v1113
        %v1655 = vmul.f32 %v1527, %v922
        %v1656 = vmul.f32 %v1528, %v924
        %v1657 = vmul.f32 %v1529, %v1115
        %v1658 = vmul.f32 %v1530, %v1117
        %v1659 = vmul.f32 %v1531, %v928
        %v1660 = vmul.f32 %v1532, %v930
        %v1661 = vmul.f32 %v1533, %v1121
        %v1662 = vmul.f32 %v1534, %v1123
        %v1663 = vmul.f32 %v1535, %v932
        %v1664 = vmul.f32 %v1536, %v934
        %v1665 = vmul.f32 %v1537, %v1125
        %v1666 = vmul.f32 %v1538, %v1127
        %v1667 = vmul.f32 %v1539, %v938
        %v1668 = vmul.f32 %v1540, %v940
        %v1669 = vmul.f32 %v1541, %v1131
        %v1670 = vmul.f32 %v1542, %v1133
        %v1671 = vmul.f32 %v1543, %v942
        %v1672 = vmul.f32 %v1544, %v944
        %v1673 = vmul.f32 %v1545, %v1135
        %v1674 = vmul.f32 %v1546, %v1137
        %v1675 = vmul.f32 %v1547, %v948
        %v1676 = vmul.f32 %v1548, %v950
        %v1677 = vmul.f32 %v1549, %v1141
        %v1678 = vmul.f32 %v1550, %v1143
        %v1679 = vmul.f32 %v1551, %v952
        %v1680 = vmul.f32 %v1552, %v954
        %v1681 = vmul.f32 %v1553, %v1145
        %v1682 = vmul.f32 %v1554, %v1147
        %v1683 = vmul.f32 %v1555, %v958
        %v1684 = vmul.f32 %v1556, %v960
        %v1685 = vmul.f32 %v1557, %v1151
        %v1686 = vmul.f32 %v1558, %v1153
        %v1687 = vmul.f32 %v1559, %v962
        %v1688 = vmul.f32 %v1560, %v964
        %v1689 = vmul.f32 %v1561, %v1155
        %v1690 = vmul.f32 %v1562, %v1157
        %v1691 = vmul.f32 %v1563, %v968
        %v1692 = vmul.f32 %v1564, %v970
        %v1693 = vmul.f32 %v1565, %v1161
        %v1694 = vmul.f32 %v1566, %v1163
        %v1695 = vmul.f32 %v1567, %v972
        %v1696 = vmul.f32 %v1568, %v974
        %v1697 = vmul.f32 %v1569, %v1165
        %v1698 = vmul.f32 %v1570, %v1167
        %v1699 = vmul.f32 %v1571, %v978
        %v1700 = vmul.f32 %v1572, %v980
        %v1701 = vmul.f32 %v1573, %v1171
        %v1702 = vmul.f32 %v1574, %v1173
        %v1703 = vmul.f32 %v1575, %v982
        %v1704 = vmul.f32 %v1576, %v984
        %v1705 = vmul.f32 %v1577, %v1175
        %v1706 = vmul.f32 %v1578, %v1177
        %v1707 = vmul.f32 %v1579, %v988
        %v1708 = vmul.f32 %v1580, %v990
        %v1709 = vmul.f32 %v1581, %v1181
        %v1710 = vmul.f32 %v1582, %v1183
        %v1711 = vmul.f32 %v1583, %v992
        %v1712 = vmul.f32 %v1584, %v994
        %v1713 = vmul.f32 %v1585, %v1185
        %v1714 = vmul.f32 %v1586, %v1187
        %v1715 = vmul.f32 %v1587, %v998
        %v1716 = vmul.f32 %v1588, %v1000
        %v1717 = vmul.f32 %v1589, %v1191
        %v1718 = vmul.f32 %v1590, %v1193
        %v1719 = vmul.f32 %v1591, %v1002
        %v1720 = vmul.f32 %v1592, %v1004
        %v1721 = vmul.f32 %v1593, %v1195
        %v1722 = vmul.f32 %v1594, %v1197
        %v1723 = vmul.f32 %v1595, %v1008
        %v1724 = vmul.f32 %v1596, %v1010
        %v1725 = vmul.f32 %v1597, %v1201
        %v1726 = vmul.f32 %v1598, %v1203
        %v1727 = vmul.f32 %v1599, %v1012
        %v1728 = vmul.f32 %v1600, %v1014
        %v1729 = vmul.f32 %v1601, %v1205
        %v1730 = vmul.f32 %v1602, %v1207
        %v1731 = vmul.f32 %v1603, %v1018
        %v1732 = vmul.f32 %v1604, %v1020
        %v1733 = vmul.f32 %v1605, %v1211
        %v1734 = vmul.f32 %v1606, %v1213
        %v1735 = vmul.f32 %v1607, %v1022
        %v1736 = vmul.f32 %v1608, %v1024
        %v1737 = vmul.f32 %v1609, %v1215
        %v1738 = vmul.f32 %v1610, %v1217
        %v1739 = vmul.f32 %v1611, %v1028
        %v1740 = vmul.f32 %v1612, %v1030
        %v1741 = vmul.f32 %v1613, %v1221
        %v1742 = vmul.f32 %v1614, %v1223
        %v1743 = vmul.f32 %v1615, %v1032
        %v1744 = vmul.f32 %v1616, %v1034
        %v1745 = vmul.f32 %v1617, %v1225
        %v1746 = vmul.f32 %v1618, %v1227
        %v1747 = vmul.f32 %v1619, %v1038
        %v1748 = vmul.f32 %v1620, %v1040
        %v1749 = vmul.f32 %v1621, %v1231
        %v1750 = vmul.f32 %v1622, %v1233
        %v1751 = vmul.f32 %v1623, %v1042
        %v1752 = vmul.f32 %v1624, %v1044
        %v1753 = vmul.f32 %v1625, %v1235
        %v1754 = vmul.f32 %v1626, %v1237
        %v1755 = vmul.f32 %v1627, %v1048
        %v1756 = vmul.f32 %v1628, %v1050
        %v1757 = vmul.f32 %v1629, %v1241
        %v1758 = vmul.f32 %v1630, %v1243
        %v1759 = vmul.f32 %v1631, %v1052
        %v1760 = vmul.f32 %v1632, %v1054
        %v1761 = vmul.f32 %v1633, %v1245
        %v1762 = vmul.f32 %v1634, %v1247
        %v1763 = vmul.f32 %v1635, %v1058
        %v1764 = vmul.f32 %v1636, %v1060
        %v1765 = vmul.f32 %v1637, %v1251
        %v1766 = vmul.f32 %v1638, %v1253
        %v1767 = vmul.f32 %v1639, %v1062
        %v1768 = vmul.f32 %v1640, %v1064
        %v1769 = vmul.f32 %v1641, %v1255
        %v1770 = vmul.f32 %v1642, %v1257
        %v1771 = vadd.f32 %v908, %v1643
        %v1772 = vadd.f32 %v910, %v1644
        %v1773 = vadd.f32 %v1101, %v1645
        %v1774 = vadd.f32 %v1103, %v1646
        %v1775 = vadd.f32 %v912, %v1647
        %v1776 = vadd.f32 %v914, %v1648
        %v1777 = vadd.f32 %v1105, %v1649
        %v1778 = vadd.f32 %v1107, %v1650
        %v1779 = vadd.f32 %v918, %v1651
        %v1780 = vadd.f32 %v920, %v1652
        %v1781 = vadd.f32 %v1111, %v1653
        %v1782 = vadd.f32 %v1113, %v1654
        %v1783 = vadd.f32 %v922, %v1655
        %v1784 = vadd.f32 %v924, %v1656
        %v1785 = vadd.f32 %v1115, %v1657
        %v1786 = vadd.f32 %v1117, %v1658
        %v1787 = vadd.f32 %v928, %v1659
        %v1788 = vadd.f32 %v930, %v1660
        %v1789 = vadd.f32 %v1121, %v1661
        %v1790 = vadd.f32 %v1123, %v1662
        %v1791 = vadd.f32 %v932, %v1663
        %v1792 = vadd.f32 %v934, %v1664
        %v1793 = vadd.f32 %v1125, %v1665
        %v1794 = vadd.f32 %v1127, %v1666
        %v1795 = vadd.f32 %v938, %v1667
        %v1796 = vadd.f32 %v940, %v1668
        %v1797 = vadd.f32 %v1131, %v1669
        %v1798 = vadd.f32 %v1133, %v1670
        %v1799 = vadd.f32 %v942, %v1671
        %v1800 = vadd.f32 %v944, %v1672
        %v1801 = vadd.f32 %v1135, %v1673
        %v1802 = vadd.f32 %v1137, %v1674
        %v1803 = vadd.f32 %v948, %v1675
        %v1804 = vadd.f32 %v950, %v1676
        %v1805 = vadd.f32 %v1141, %v1677
        %v1806 = vadd.f32 %v1143, %v1678
        %v1807 = vadd.f32 %v952, %v1679
        %v1808 = vadd.f32 %v954, %v1680
        %v1809 = vadd.f32 %v1145, %v1681
        %v1810 = vadd.f32 %v1147, %v1682
        %v1811 = vadd.f32 %v958, %v1683
        %v1812 = vadd.f32 %v960, %v1684
        %v1813 = vadd.f32 %v1151, %v1685
        %v1814 = vadd.f32 %v1153, %v1686
        %v1815 = vadd.f32 %v962, %v1687
        %v1816 = vadd.f32 %v964, %v1688
        %v1817 = vadd.f32 %v1155, %v1689
        %v1818 = vadd.f32 %v1157, %v1690
        %v1819 = vadd.f32 %v968, %v1691
        %v1820 = vadd.f32 %v970, %v1692
        %v1821 = vadd.f32 %v1161, %v1693
        %v1822 = vadd.f32 %v1163, %v1694
        %v1823 = vadd.f32 %v972, %v1695
        %v1824 = vadd.f32 %v974, %v1696
        %v1825 = vadd.f32 %v1165, %v1697
        %v1826 = vadd.f32 %v1167, %v1698
        %v1827 = vadd.f32 %v978, %v1699
        %v1828 = vadd.f32 %v980, %v1700
        %v1829 = vadd.f32 %v1171, %v1701
        %v1830 = vadd.f32 %v1173, %v1702
        %v1831 = vadd.f32 %v982, %v1703
        %v1832 = vadd.f32 %v984, %v1704
        %v1833 = vadd.f32 %v1175, %v1705
        %v1834 = vadd.f32 %v1177, %v1706
        %v1835 = vadd.f32 %v988, %v1707
        %v1836 = vadd.f32 %v990, %v1708
        %v1837 = vadd.f32 %v1181, %v1709
        %v1838 = vadd.f32 %v1183, %v1710
        %v1839 = vadd.f32 %v992, %v1711
        %v1840 = vadd.f32 %v994, %v1712
        %v1841 = vadd.f32 %v1185, %v1713
        %v1842 = vadd.f32 %v1187, %v1714
        %v1843 = vadd.f32 %v998, %v1715
        %v1844 = vadd.f32 %v1000, %v1716
        %v1845 = vadd.f32 %v1191, %v1717
        %v1846 = vadd.f32 %v1193, %v1718
        %v1847 = vadd.f32 %v1002, %v1719
        %v1848 = vadd.f32 %v1004, %v1720
        %v1849 = vadd.f32 %v1195, %v1721
        %v1850 = vadd.f32 %v1197, %v1722
        %v1851 = vadd.f32 %v1008, %v1723
        %v1852 = vadd.f32 %v1010, %v1724
        %v1853 = vadd.f32 %v1201, %v1725
        %v1854 = vadd.f32 %v1203, %v1726
        %v1855 = vadd.f32 %v1012, %v1727
        %v1856 = vadd.f32 %v1014, %v1728
        %v1857 = vadd.f32 %v1205, %v1729
        %v1858 = vadd.f32 %v1207, %v1730
        %v1859 = vadd.f32 %v1018, %v1731
        %v1860 = vadd.f32 %v1020, %v1732
        %v1861 = vadd.f32 %v1211, %v1733
        %v1862 = vadd.f32 %v1213, %v1734
        %v1863 = vadd.f32 %v1022, %v1735
        %v1864 = vadd.f32 %v1024, %v1736
        %v1865 = vadd.f32 %v1215, %v1737
        %v1866 = vadd.f32 %v1217, %v1738
        %v1867 = vadd.f32 %v1028, %v1739
        %v1868 = vadd.f32 %v1030, %v1740
        %v1869 = vadd.f32 %v1221, %v1741
        %v1870 = vadd.f32 %v1223, %v1742
        %v1871 = vadd.f32 %v1032, %v1743
        %v1872 = vadd.f32 %v1034, %v1744
        %v1873 = vadd.f32 %v1225, %v1745
        %v1874 = vadd.f32 %v1227, %v1746
        %v1875 = vadd.f32 %v1038, %v1747
        %v1876 = vadd.f32 %v1040, %v1748
        %v1877 = vadd.f32 %v1231, %v1749
        %v1878 = vadd.f32 %v1233, %v1750
        %v1879 = vadd.f32 %v1042, %v1751
        %v1880 = vadd.f32 %v1044, %v1752
        %v1881 = vadd.f32 %v1235, %v1753
        %v1882 = vadd.f32 %v1237, %v1754
        %v1883 = vadd.f32 %v1048, %v1755
        %v1884 = vadd.f32 %v1050, %v1756
        %v1885 = vadd.f32 %v1241, %v1757
        %v1886 = vadd.f32 %v1243, %v1758
        %v1887 = vadd.f32 %v1052, %v1759
        %v1888 = vadd.f32 %v1054, %v1760
        %v1889 = vadd.f32 %v1245, %v1761
        %v1890 = vadd.f32 %v1247, %v1762
        %v1891 = vadd.f32 %v1058, %v1763
        %v1892 = vadd.f32 %v1060, %v1764
        %v1893 = vadd.f32 %v1251, %v1765
        %v1894 = vadd.f32 %v1253, %v1766
        %v1895 = vadd.f32 %v1062, %v1767
        %v1896 = vadd.f32 %v1064, %v1768
        %v1897 = vadd.f32 %v1255, %v1769
        %v1898 = vadd.f32 %v1257, %v1770
        %v1899 = vmul.f32 %v1771, 0.7978846
        %v1900 = vmul.f32 %v1772, 0.7978846
        %v1901 = vmul.f32 %v1773, 0.7978846
        %v1902 = vmul.f32 %v1774, 0.7978846
        %v1903 = vmul.f32 %v1775, 0.7978846
        %v1904 = vmul.f32 %v1776, 0.7978846
        %v1905 = vmul.f32 %v1777, 0.7978846
        %v1906 = vmul.f32 %v1778, 0.7978846
        %v1907 = vmul.f32 %v1779, 0.7978846
        %v1908 = vmul.f32 %v1780, 0.7978846
        %v1909 = vmul.f32 %v1781, 0.7978846
        %v1910 = vmul.f32 %v1782, 0.7978846
        %v1911 = vmul.f32 %v1783, 0.7978846
        %v1912 = vmul.f32 %v1784, 0.7978846
        %v1913 = vmul.f32 %v1785, 0.7978846
        %v1914 = vmul.f32 %v1786, 0.7978846
        %v1915 = vmul.f32 %v1787, 0.7978846
        %v1916 = vmul.f32 %v1788, 0.7978846
        %v1917 = vmul.f32 %v1789, 0.7978846
        %v1918 = vmul.f32 %v1790, 0.7978846
        %v1919 = vmul.f32 %v1791, 0.7978846
        %v1920 = vmul.f32 %v1792, 0.7978846
        %v1921 = vmul.f32 %v1793, 0.7978846
        %v1922 = vmul.f32 %v1794, 0.7978846
        %v1923 = vmul.f32 %v1795, 0.7978846
        %v1924 = vmul.f32 %v1796, 0.7978846
        %v1925 = vmul.f32 %v1797, 0.7978846
        %v1926 = vmul.f32 %v1798, 0.7978846
        %v1927 = vmul.f32 %v1799, 0.7978846
        %v1928 = vmul.f32 %v1800, 0.7978846
        %v1929 = vmul.f32 %v1801, 0.7978846
        %v1930 = vmul.f32 %v1802, 0.7978846
        %v1931 = vmul.f32 %v1803, 0.7978846
        %v1932 = vmul.f32 %v1804, 0.7978846
        %v1933 = vmul.f32 %v1805, 0.7978846
        %v1934 = vmul.f32 %v1806, 0.7978846
        %v1935 = vmul.f32 %v1807, 0.7978846
        %v1936 = vmul.f32 %v1808, 0.7978846
        %v1937 = vmul.f32 %v1809, 0.7978846
        %v1938 = vmul.f32 %v1810, 0.7978846
        %v1939 = vmul.f32 %v1811, 0.7978846
        %v1940 = vmul.f32 %v1812, 0.7978846
        %v1941 = vmul.f32 %v1813, 0.7978846
        %v1942 = vmul.f32 %v1814, 0.7978846
        %v1943 = vmul.f32 %v1815, 0.7978846
        %v1944 = vmul.f32 %v1816, 0.7978846
        %v1945 = vmul.f32 %v1817, 0.7978846
        %v1946 = vmul.f32 %v1818, 0.7978846
        %v1947 = vmul.f32 %v1819, 0.7978846
        %v1948 = vmul.f32 %v1820, 0.7978846
        %v1949 = vmul.f32 %v1821, 0.7978846
        %v1950 = vmul.f32 %v1822, 0.7978846
        %v1951 = vmul.f32 %v1823, 0.7978846
        %v1952 = vmul.f32 %v1824, 0.7978846
        %v1953 = vmul.f32 %v1825, 0.7978846
        %v1954 = vmul.f32 %v1826, 0.7978846
        %v1955 = vmul.f32 %v1827, 0.7978846
        %v1956 = vmul.f32 %v1828, 0.7978846
        %v1957 = vmul.f32 %v1829, 0.7978846
        %v1958 = vmul.f32 %v1830, 0.7978846
        %v1959 = vmul.f32 %v1831, 0.7978846
        %v1960 = vmul.f32 %v1832, 0.7978846
        %v1961 = vmul.f32 %v1833, 0.7978846
        %v1962 = vmul.f32 %v1834, 0.7978846
        %v1963 = vmul.f32 %v1835, 0.7978846
        %v1964 = vmul.f32 %v1836, 0.7978846
        %v1965 = vmul.f32 %v1837, 0.7978846
        %v1966 = vmul.f32 %v1838, 0.7978846
        %v1967 = vmul.f32 %v1839, 0.7978846
        %v1968 = vmul.f32 %v1840, 0.7978846
        %v1969 = vmul.f32 %v1841, 0.7978846
        %v1970 = vmul.f32 %v1842, 0.7978846
        %v1971 = vmul.f32 %v1843, 0.7978846
        %v1972 = vmul.f32 %v1844, 0.7978846
        %v1973 = vmul.f32 %v1845, 0.7978846
        %v1974 = vmul.f32 %v1846, 0.7978846
        %v1975 = vmul.f32 %v1847, 0.7978846
        %v1976 = vmul.f32 %v1848, 0.7978846
        %v1977 = vmul.f32 %v1849, 0.7978846
        %v1978 = vmul.f32 %v1850, 0.7978846
        %v1979 = vmul.f32 %v1851, 0.7978846
        %v1980 = vmul.f32 %v1852, 0.7978846
        %v1981 = vmul.f32 %v1853, 0.7978846
        %v1982 = vmul.f32 %v1854, 0.7978846
        %v1983 = vmul.f32 %v1855, 0.7978846
        %v1984 = vmul.f32 %v1856, 0.7978846
        %v1985 = vmul.f32 %v1857, 0.7978846
        %v1986 = vmul.f32 %v1858, 0.7978846
        %v1987 = vmul.f32 %v1859, 0.7978846
        %v1988 = vmul.f32 %v1860, 0.7978846
        %v1989 = vmul.f32 %v1861, 0.7978846
        %v1990 = vmul.f32 %v1862, 0.7978846
        %v1991 = vmul.f32 %v1863, 0.7978846
        %v1992 = vmul.f32 %v1864, 0.7978846
        %v1993 = vmul.f32 %v1865, 0.7978846
        %v1994 = vmul.f32 %v1866, 0.7978846
        %v1995 = vmul.f32 %v1867, 0.7978846
        %v1996 = vmul.f32 %v1868, 0.7978846
        %v1997 = vmul.f32 %v1869, 0.7978846
        %v1998 = vmul.f32 %v1870, 0.7978846
        %v1999 = vmul.f32 %v1871, 0.7978846
        %v2000 = vmul.f32 %v1872, 0.7978846
        %v2001 = vmul.f32 %v1873, 0.7978846
        %v2002 = vmul.f32 %v1874, 0.7978846
        %v2003 = vmul.f32 %v1875, 0.7978846
        %v2004 = vmul.f32 %v1876, 0.7978846
        %v2005 = vmul.f32 %v1877, 0.7978846
        %v2006 = vmul.f32 %v1878, 0.7978846
        %v2007 = vmul.f32 %v1879, 0.7978846
        %v2008 = vmul.f32 %v1880, 0.7978846
        %v2009 = vmul.f32 %v1881, 0.7978846
        %v2010 = vmul.f32 %v1882, 0.7978846
        %v2011 = vmul.f32 %v1883, 0.7978846
        %v2012 = vmul.f32 %v1884, 0.7978846
        %v2013 = vmul.f32 %v1885, 0.7978846
        %v2014 = vmul.f32 %v1886, 0.7978846
        %v2015 = vmul.f32 %v1887, 0.7978846
        %v2016 = vmul.f32 %v1888, 0.7978846
        %v2017 = vmul.f32 %v1889, 0.7978846
        %v2018 = vmul.f32 %v1890, 0.7978846
        %v2019 = vmul.f32 %v1891, 0.7978846
        %v2020 = vmul.f32 %v1892, 0.7978846
        %v2021 = vmul.f32 %v1893, 0.7978846
        %v2022 = vmul.f32 %v1894, 0.7978846
        %v2023 = vmul.f32 %v1895, 0.7978846
        %v2024 = vmul.f32 %v1896, 0.7978846
        %v2025 = vmul.f32 %v1897, 0.7978846
        %v2026 = vmul.f32 %v1898, 0.7978846
        %v2027 = vtanh.pop %v1899
        %v2028 = vtanh.pop %v1900
        %v2029 = vtanh.pop %v1901
        %v2030 = vtanh.pop %v1902
        %v2031 = vtanh.pop %v1903
        %v2032 = vtanh.pop %v1904
        %v2033 = vtanh.pop %v1905
        %v2034 = vtanh.pop %v1906
        %v2035 = vtanh.pop %v1907
        %v2036 = vtanh.pop %v1908
        %v2037 = vtanh.pop %v1909
        %v2038 = vtanh.pop %v1910
        %v2039 = vtanh.pop %v1911
        %v2040 = vtanh.pop %v1912
        %v2041 = vtanh.pop %v1913
        %v2042 = vtanh.pop %v1914
        %v2043 = vtanh.pop %v1915
        %v2044 = vtanh.pop %v1916
        %v2045 = vtanh.pop %v1917
        %v2046 = vtanh.pop %v1918
        %v2047 = vtanh.pop %v1919
        %v2048 = vtanh.pop %v1920
        %v2049 = vtanh.pop %v1921
        %v2050 = vtanh.pop %v1922
        %v2051 = vtanh.pop %v1923
        %v2052 = vtanh.pop %v1924
        %v2053 = vtanh.pop %v1925
        %v2054 = vtanh.pop %v1926
        %v2055 = vtanh.pop %v1927
        %v2056 = vtanh.pop %v1928
        %v2057 = vtanh.pop %v1929
        %v2058 = vtanh.pop %v1930
        %v2059 = vtanh.pop %v1931
        %v2060 = vtanh.pop %v1932
        %v2061 = vtanh.pop %v1933
        %v2062 = vtanh.pop %v1934
        %v2063 = vtanh.pop %v1935
        %v2064 = vtanh.pop %v1936
        %v2065 = vtanh.pop %v1937
        %v2066 = vtanh.pop %v1938
        %v2067 = vtanh.pop %v1939
        %v2068 = vtanh.pop %v1940
        %v2069 = vtanh.pop %v1941
        %v2070 = vtanh.pop %v1942
        %v2071 = vtanh.pop %v1943
        %v2072 = vtanh.pop %v1944
        %v2073 = vtanh.pop %v1945
        %v2074 = vtanh.pop %v1946
        %v2075 = vtanh.pop %v1947
        %v2076 = vtanh.pop %v1948
        %v2077 = vtanh.pop %v1949
        %v2078 = vtanh.pop %v1950
        %v2079 = vtanh.pop %v1951
        %v2080 = vtanh.pop %v1952
        %v2081 = vtanh.pop %v1953
        %v2082 = vtanh.pop %v1954
        %v2083 = vtanh.pop %v1955
        %v2084 = vtanh.pop %v1956
        %v2085 = vtanh.pop %v1957
        %v2086 = vtanh.pop %v1958
        %v2087 = vtanh.pop %v1959
        %v2088 = vtanh.pop %v1960
        %v2089 = vtanh.pop %v1961
        %v2090 = vtanh.pop %v1962
        %v2091 = vtanh.pop %v1963
        %v2092 = vtanh.pop %v1964
        %v2093 = vtanh.pop %v1965
        %v2094 = vtanh.pop %v1966
        %v2095 = vtanh.pop %v1967
        %v2096 = vtanh.pop %v1968
        %v2097 = vtanh.pop %v1969
        %v2098 = vtanh.pop %v1970
        %v2099 = vtanh.pop %v1971
        %v2100 = vtanh.pop %v1972
        %v2101 = vtanh.pop %v1973
        %v2102 = vtanh.pop %v1974
        %v2103 = vtanh.pop %v1975
        %v2104 = vtanh.pop %v1976
        %v2105 = vtanh.pop %v1977
        %v2106 = vtanh.pop %v1978
        %v2107 = vtanh.pop %v1979
        %v2108 = vtanh.pop %v1980
        %v2109 = vtanh.pop %v1981
        %v2110 = vtanh.pop %v1982
        %v2111 = vtanh.pop %v1983
        %v2112 = vtanh.pop %v1984
        %v2113 = vtanh.pop %v1985
        %v2114 = vtanh.pop %v1986
        %v2115 = vtanh.pop %v1987
        %v2116 = vtanh.pop %v1988
        %v2117 = vtanh.pop %v1989
        %v2118 = vtanh.pop %v1990
        %v2119 = vtanh.pop %v1991
        %v2120 = vtanh.pop %v1992
        %v2121 = vtanh.pop %v1993
        %v2122 = vtanh.pop %v1994
        %v2123 = vtanh.pop %v1995
        %v2124 = vtanh.pop %v1996
        %v2125 = vtanh.pop %v1997
        %v2126 = vtanh.pop %v1998
        %v2127 = vtanh.pop %v1999
        %v2128 = vtanh.pop %v2000
        %v2129 = vtanh.pop %v2001
        %v2130 = vtanh.pop %v2002
        %v2131 = vtanh.pop %v2003
        %v2132 = vtanh.pop %v2004
        %v2133 = vtanh.pop %v2005
        %v2134 = vtanh.pop %v2006
        %v2135 = vtanh.pop %v2007
        %v2136 = vtanh.pop %v2008
        %v2137 = vtanh.pop %v2009
        %v2138 = vtanh.pop %v2010
        %v2139 = vtanh.pop %v2011
        %v2140 = vtanh.pop %v2012
        %v2141 = vtanh.pop %v2013
        %v2142 = vtanh.pop %v2014
        %v2143 = vtanh.pop %v2015
        %v2144 = vtanh.pop %v2016
        %v2145 = vtanh.pop %v2017
        %v2146 = vtanh.pop %v2018
        %v2147 = vtanh.pop %v2019
        %v2148 = vtanh.pop %v2020
        %v2149 = vtanh.pop %v2021
        %v2150 = vtanh.pop %v2022
        %v2151 = vtanh.pop %v2023
        %v2152 = vtanh.pop %v2024
        %v2153 = vtanh.pop %v2025
        %v2154 = vtanh.pop %v2026
        %v2155 = vadd.f32 %v2027, 1.0
        %v2156 = vadd.f32 %v2028, 1.0
        %v2157 = vadd.f32 %v2029, 1.0
        %v2158 = vadd.f32 %v2030, 1.0
        %v2159 = vadd.f32 %v2031, 1.0
        %v2160 = vadd.f32 %v2032, 1.0
        %v2161 = vadd.f32 %v2033, 1.0
        %v2162 = vadd.f32 %v2034, 1.0
        %v2163 = vadd.f32 %v2035, 1.0
        %v2164 = vadd.f32 %v2036, 1.0
        %v2165 = vadd.f32 %v2037, 1.0
        %v2166 = vadd.f32 %v2038, 1.0
        %v2167 = vadd.f32 %v2039, 1.0
        %v2168 = vadd.f32 %v2040, 1.0
        %v2169 = vadd.f32 %v2041, 1.0
        %v2170 = vadd.f32 %v2042, 1.0
        %v2171 = vadd.f32 %v2043, 1.0
        %v2172 = vadd.f32 %v2044, 1.0
        %v2173 = vadd.f32 %v2045, 1.0
        %v2174 = vadd.f32 %v2046, 1.0
        %v2175 = vadd.f32 %v2047, 1.0
        %v2176 = vadd.f32 %v2048, 1.0
        %v2177 = vadd.f32 %v2049, 1.0
        %v2178 = vadd.f32 %v2050, 1.0
        %v2179 = vadd.f32 %v2051, 1.0
        %v2180 = vadd.f32 %v2052, 1.0
        %v2181 = vadd.f32 %v2053, 1.0
        %v2182 = vadd.f32 %v2054, 1.0
        %v2183 = vadd.f32 %v2055, 1.0
        %v2184 = vadd.f32 %v2056, 1.0
        %v2185 = vadd.f32 %v2057, 1.0
        %v2186 = vadd.f32 %v2058, 1.0
        %v2187 = vadd.f32 %v2059, 1.0
        %v2188 = vadd.f32 %v2060, 1.0
        %v2189 = vadd.f32 %v2061, 1.0
        %v2190 = vadd.f32 %v2062, 1.0
        %v2191 = vadd.f32 %v2063, 1.0
        %v2192 = vadd.f32 %v2064, 1.0
        %v2193 = vadd.f32 %v2065, 1.0
        %v2194 = vadd.f32 %v2066, 1.0
        %v2195 = vadd.f32 %v2067, 1.0
        %v2196 = vadd.f32 %v2068, 1.0
        %v2197 = vadd.f32 %v2069, 1.0
        %v2198 = vadd.f32 %v2070, 1.0
        %v2199 = vadd.f32 %v2071, 1.0
        %v2200 = vadd.f32 %v2072, 1.0
        %v2201 = vadd.f32 %v2073, 1.0
        %v2202 = vadd.f32 %v2074, 1.0
        %v2203 = vadd.f32 %v2075, 1.0
        %v2204 = vadd.f32 %v2076, 1.0
        %v2205 = vadd.f32 %v2077, 1.0
        %v2206 = vadd.f32 %v2078, 1.0
        %v2207 = vadd.f32 %v2079, 1.0
        %v2208 = vadd.f32 %v2080, 1.0
        %v2209 = vadd.f32 %v2081, 1.0
        %v2210 = vadd.f32 %v2082, 1.0
        %v2211 = vadd.f32 %v2083, 1.0
        %v2212 = vadd.f32 %v2084, 1.0
        %v2213 = vadd.f32 %v2085, 1.0
        %v2214 = vadd.f32 %v2086, 1.0
        %v2215 = vadd.f32 %v2087, 1.0
        %v2216 = vadd.f32 %v2088, 1.0
        %v2217 = vadd.f32 %v2089, 1.0
        %v2218 = vadd.f32 %v2090, 1.0
        %v2219 = vadd.f32 %v2091, 1.0
        %v2220 = vadd.f32 %v2092, 1.0
        %v2221 = vadd.f32 %v2093, 1.0
        %v2222 = vadd.f32 %v2094, 1.0
        %v2223 = vadd.f32 %v2095, 1.0
        %v2224 = vadd.f32 %v2096, 1.0
        %v2225 = vadd.f32 %v2097, 1.0
        %v2226 = vadd.f32 %v2098, 1.0
        %v2227 = vadd.f32 %v2099, 1.0
        %v2228 = vadd.f32 %v2100, 1.0
        %v2229 = vadd.f32 %v2101, 1.0
        %v2230 = vadd.f32 %v2102, 1.0
        %v2231 = vadd.f32 %v2103, 1.0
        %v2232 = vadd.f32 %v2104, 1.0
        %v2233 = vadd.f32 %v2105, 1.0
        %v2234 = vadd.f32 %v2106, 1.0
        %v2235 = vadd.f32 %v2107, 1.0
        %v2236 = vadd.f32 %v2108, 1.0
        %v2237 = vadd.f32 %v2109, 1.0
        %v2238 = vadd.f32 %v2110, 1.0
        %v2239 = vadd.f32 %v2111, 1.0
        %v2240 = vadd.f32 %v2112, 1.0
        %v2241 = vadd.f32 %v2113, 1.0
        %v2242 = vadd.f32 %v2114, 1.0
        %v2243 = vadd.f32 %v2115, 1.0
        %v2244 = vadd.f32 %v2116, 1.0
        %v2245 = vadd.f32 %v2117, 1.0
        %v2246 = vadd.f32 %v2118, 1.0
        %v2247 = vadd.f32 %v2119, 1.0
        %v2248 = vadd.f32 %v2120, 1.0
        %v2249 = vadd.f32 %v2121, 1.0
        %v2250 = vadd.f32 %v2122, 1.0
        %v2251 = vadd.f32 %v2123, 1.0
        %v2252 = vadd.f32 %v2124, 1.0
        %v2253 = vadd.f32 %v2125, 1.0
        %v2254 = vadd.f32 %v2126, 1.0
        %v2255 = vadd.f32 %v2127, 1.0
        %v2256 = vadd.f32 %v2128, 1.0
        %v2257 = vadd.f32 %v2129, 1.0
        %v2258 = vadd.f32 %v2130, 1.0
        %v2259 = vadd.f32 %v2131, 1.0
        %v2260 = vadd.f32 %v2132, 1.0
        %v2261 = vadd.f32 %v2133, 1.0
        %v2262 = vadd.f32 %v2134, 1.0
        %v2263 = vadd.f32 %v2135, 1.0
        %v2264 = vadd.f32 %v2136, 1.0
        %v2265 = vadd.f32 %v2137, 1.0
        %v2266 = vadd.f32 %v2138, 1.0
        %v2267 = vadd.f32 %v2139, 1.0
        %v2268 = vadd.f32 %v2140, 1.0
        %v2269 = vadd.f32 %v2141, 1.0
        %v2270 = vadd.f32 %v2142, 1.0
        %v2271 = vadd.f32 %v2143, 1.0
        %v2272 = vadd.f32 %v2144, 1.0
        %v2273 = vadd.f32 %v2145, 1.0
        %v2274 = vadd.f32 %v2146, 1.0
        %v2275 = vadd.f32 %v2147, 1.0
        %v2276 = vadd.f32 %v2148, 1.0
        %v2277 = vadd.f32 %v2149, 1.0
        %v2278 = vadd.f32 %v2150, 1.0
        %v2279 = vadd.f32 %v2151, 1.0
        %v2280 = vadd.f32 %v2152, 1.0
        %v2281 = vadd.f32 %v2153, 1.0
        %v2282 = vadd.f32 %v2154, 1.0
        %v2283 = vmul.f32 %v1259, %v2155
        %v2284 = vmul.f32 %v1260, %v2156
        %v2285 = vmul.f32 %v1261, %v2157
        %v2286 = vmul.f32 %v1262, %v2158
        %v2287 = vmul.f32 %v1263, %v2159
        %v2288 = vmul.f32 %v1264, %v2160
        %v2289 = vmul.f32 %v1265, %v2161
        %v2290 = vmul.f32 %v1266, %v2162
        %v2291 = vmul.f32 %v1267, %v2163
        %v2292 = vmul.f32 %v1268, %v2164
        %v2293 = vmul.f32 %v1269, %v2165
        %v2294 = vmul.f32 %v1270, %v2166
        %v2295 = vmul.f32 %v1271, %v2167
        %v2296 = vmul.f32 %v1272, %v2168
        %v2297 = vmul.f32 %v1273, %v2169
        %v2298 = vmul.f32 %v1274, %v2170
        %v2299 = vmul.f32 %v1275, %v2171
        %v2300 = vmul.f32 %v1276, %v2172
        %v2301 = vmul.f32 %v1277, %v2173
        %v2302 = vmul.f32 %v1278, %v2174
        %v2303 = vmul.f32 %v1279, %v2175
        %v2304 = vmul.f32 %v1280, %v2176
        %v2305 = vmul.f32 %v1281, %v2177
        %v2306 = vmul.f32 %v1282, %v2178
        %v2307 = vmul.f32 %v1283, %v2179
        %v2308 = vmul.f32 %v1284, %v2180
        %v2309 = vmul.f32 %v1285, %v2181
        %v2310 = vmul.f32 %v1286, %v2182
        %v2311 = vmul.f32 %v1287, %v2183
        %v2312 = vmul.f32 %v1288, %v2184
        %v2313 = vmul.f32 %v1289, %v2185
        %v2314 = vmul.f32 %v1290, %v2186
        %v2315 = vmul.f32 %v1291, %v2187
        %v2316 = vmul.f32 %v1292, %v2188
        %v2317 = vmul.f32 %v1293, %v2189
        %v2318 = vmul.f32 %v1294, %v2190
        %v2319 = vmul.f32 %v1295, %v2191
        %v2320 = vmul.f32 %v1296, %v2192
        %v2321 = vmul.f32 %v1297, %v2193
        %v2322 = vmul.f32 %v1298, %v2194
        %v2323 = vmul.f32 %v1299, %v2195
        %v2324 = vmul.f32 %v1300, %v2196
        %v2325 = vmul.f32 %v1301, %v2197
        %v2326 = vmul.f32 %v1302, %v2198
        %v2327 = vmul.f32 %v1303, %v2199
        %v2328 = vmul.f32 %v1304, %v2200
        %v2329 = vmul.f32 %v1305, %v2201
        %v2330 = vmul.f32 %v1306, %v2202
        %v2331 = vmul.f32 %v1307, %v2203
        %v2332 = vmul.f32 %v1308, %v2204
        %v2333 = vmul.f32 %v1309, %v2205
        %v2334 = vmul.f32 %v1310, %v2206
        %v2335 = vmul.f32 %v1311, %v2207
        %v2336 = vmul.f32 %v1312, %v2208
        %v2337 = vmul.f32 %v1313, %v2209
        %v2338 = vmul.f32 %v1314, %v2210
        %v2339 = vmul.f32 %v1315, %v2211
        %v2340 = vmul.f32 %v1316, %v2212
        %v2341 = vmul.f32 %v1317, %v2213
        %v2342 = vmul.f32 %v1318, %v2214
        %v2343 = vmul.f32 %v1319, %v2215
        %v2344 = vmul.f32 %v1320, %v2216
        %v2345 = vmul.f32 %v1321, %v2217
        %v2346 = vmul.f32 %v1322, %v2218
        %v2347 = vmul.f32 %v1323, %v2219
        %v2348 = vmul.f32 %v1324, %v2220
        %v2349 = vmul.f32 %v1325, %v2221
        %v2350 = vmul.f32 %v1326, %v2222
        %v2351 = vmul.f32 %v1327, %v2223
        %v2352 = vmul.f32 %v1328, %v2224
        %v2353 = vmul.f32 %v1329, %v2225
        %v2354 = vmul.f32 %v1330, %v2226
        %v2355 = vmul.f32 %v1331, %v2227
        %v2356 = vmul.f32 %v1332, %v2228
        %v2357 = vmul.f32 %v1333, %v2229
        %v2358 = vmul.f32 %v1334, %v2230
        %v2359 = vmul.f32 %v1335, %v2231
        %v2360 = vmul.f32 %v1336, %v2232
        %v2361 = vmul.f32 %v1337, %v2233
        %v2362 = vmul.f32 %v1338, %v2234
        %v2363 = vmul.f32 %v1339, %v2235
        %v2364 = vmul.f32 %v1340, %v2236
        %v2365 = vmul.f32 %v1341, %v2237
        %v2366 = vmul.f32 %v1342, %v2238
        %v2367 = vmul.f32 %v1343, %v2239
        %v2368 = vmul.f32 %v1344, %v2240
        %v2369 = vmul.f32 %v1345, %v2241
        %v2370 = vmul.f32 %v1346, %v2242
        %v2371 = vmul.f32 %v1347, %v2243
        %v2372 = vmul.f32 %v1348, %v2244
        %v2373 = vmul.f32 %v1349, %v2245
        %v2374 = vmul.f32 %v1350, %v2246
        %v2375 = vmul.f32 %v1351, %v2247
        %v2376 = vmul.f32 %v1352, %v2248
        %v2377 = vmul.f32 %v1353, %v2249
        %v2378 = vmul.f32 %v1354, %v2250
        %v2379 = vmul.f32 %v1355, %v2251
        %v2380 = vmul.f32 %v1356, %v2252
        %v2381 = vmul.f32 %v1357, %v2253
        %v2382 = vmul.f32 %v1358, %v2254
        %v2383 = vmul.f32 %v1359, %v2255
        %v2384 = vmul.f32 %v1360, %v2256
        %v2385 = vmul.f32 %v1361, %v2257
        %v2386 = vmul.f32 %v1362, %v2258
        %v2387 = vmul.f32 %v1363, %v2259
        %v2388 = vmul.f32 %v1364, %v2260
        %v2389 = vmul.f32 %v1365, %v2261
        %v2390 = vmul.f32 %v1366, %v2262
        %v2391 = vmul.f32 %v1367, %v2263
        %v2392 = vmul.f32 %v1368, %v2264
        %v2393 = vmul.f32 %v1369, %v2265
        %v2394 = vmul.f32 %v1370, %v2266
        %v2395 = vmul.f32 %v1371, %v2267
        %v2396 = vmul.f32 %v1372, %v2268
        %v2397 = vmul.f32 %v1373, %v2269
        %v2398 = vmul.f32 %v1374, %v2270
        %v2399 = vmul.f32 %v1375, %v2271
        %v2400 = vmul.f32 %v1376, %v2272
        %v2401 = vmul.f32 %v1377, %v2273
        %v2402 = vmul.f32 %v1378, %v2274
        %v2403 = vmul.f32 %v1379, %v2275
        %v2404 = vmul.f32 %v1380, %v2276
        %v2405 = vmul.f32 %v1381, %v2277
        %v2406 = vmul.f32 %v1382, %v2278
        %v2407 = vmul.f32 %v1383, %v2279
        %v2408 = vmul.f32 %v1384, %v2280
        %v2409 = vmul.f32 %v1385, %v2281
        %v2410 = vmul.f32 %v1386, %v2282
        %v2411 = vpack.c.bf16 %v2287, %v2283
        %v2412 = vpack.c.bf16 %v2288, %v2284
        %v2413 = vpack.c.bf16 %v2289, %v2285
        %v2414 = vpack.c.bf16 %v2290, %v2286
        %v2415 = vpack.c.bf16 %v2295, %v2291
        %v2416 = vpack.c.bf16 %v2296, %v2292
        %v2417 = vpack.c.bf16 %v2297, %v2293
        %v2418 = vpack.c.bf16 %v2298, %v2294
        %v2419 = vpack.c.bf16 %v2303, %v2299
        %v2420 = vpack.c.bf16 %v2304, %v2300
        %v2421 = vpack.c.bf16 %v2305, %v2301
        %v2422 = vpack.c.bf16 %v2306, %v2302
        %v2423 = vpack.c.bf16 %v2311, %v2307
        %v2424 = vpack.c.bf16 %v2312, %v2308
        %v2425 = vpack.c.bf16 %v2313, %v2309
        %v2426 = vpack.c.bf16 %v2314, %v2310
        %v2427 = vpack.c.bf16 %v2319, %v2315
        %v2428 = vpack.c.bf16 %v2320, %v2316
        %v2429 = vpack.c.bf16 %v2321, %v2317
        %v2430 = vpack.c.bf16 %v2322, %v2318
        %v2431 = vpack.c.bf16 %v2327, %v2323
        %v2432 = vpack.c.bf16 %v2328, %v2324
        %v2433 = vpack.c.bf16 %v2329, %v2325
        %v2434 = vpack.c.bf16 %v2330, %v2326
        %v2435 = vpack.c.bf16 %v2335, %v2331
        %v2436 = vpack.c.bf16 %v2336, %v2332
        %v2437 = vpack.c.bf16 %v2337, %v2333
        %v2438 = vpack.c.bf16 %v2338, %v2334
        %v2439 = vpack.c.bf16 %v2343, %v2339
        %v2440 = vpack.c.bf16 %v2344, %v2340
        %v2441 = vpack.c.bf16 %v2345, %v2341
        %v2442 = vpack.c.bf16 %v2346, %v2342
        %v2443 = vpack.c.bf16 %v2351, %v2347
        %v2444 = vpack.c.bf16 %v2352, %v2348
        %v2445 = vpack.c.bf16 %v2353, %v2349
        %v2446 = vpack.c.bf16 %v2354, %v2350
        %v2447 = vpack.c.bf16 %v2359, %v2355
        %v2448 = vpack.c.bf16 %v2360, %v2356
        %v2449 = vpack.c.bf16 %v2361, %v2357
        %v2450 = vpack.c.bf16 %v2362, %v2358
        %v2451 = vpack.c.bf16 %v2367, %v2363
        %v2452 = vpack.c.bf16 %v2368, %v2364
        %v2453 = vpack.c.bf16 %v2369, %v2365
        %v2454 = vpack.c.bf16 %v2370, %v2366
        %v2455 = vpack.c.bf16 %v2375, %v2371
        %v2456 = vpack.c.bf16 %v2376, %v2372
        %v2457 = vpack.c.bf16 %v2377, %v2373
        %v2458 = vpack.c.bf16 %v2378, %v2374
        %v2459 = vpack.c.bf16 %v2383, %v2379
        %v2460 = vpack.c.bf16 %v2384, %v2380
        %v2461 = vpack.c.bf16 %v2385, %v2381
        %v2462 = vpack.c.bf16 %v2386, %v2382
        %v2463 = vpack.c.bf16 %v2391, %v2387
        %v2464 = vpack.c.bf16 %v2392, %v2388
        %v2465 = vpack.c.bf16 %v2393, %v2389
        %v2466 = vpack.c.bf16 %v2394, %v2390
        %v2467 = vpack.c.bf16 %v2399, %v2395
        %v2468 = vpack.c.bf16 %v2400, %v2396
        %v2469 = vpack.c.bf16 %v2401, %v2397
        %v2470 = vpack.c.bf16 %v2402, %v2398
        %v2471 = vpack.c.bf16 %v2407, %v2403
        %v2472 = vpack.c.bf16 %v2408, %v2404
        %v2473 = vpack.c.bf16 %v2409, %v2405
        %v2474 = vpack.c.bf16 %v2410, %v2406
        %v2475 = vld [vmem:[#allocation7] sm:$0xff]
        %v2476 = vld [vmem:[#allocation7 + $0x8] sm:$0xff]
        %v2477 = vld [vmem:[#allocation7 + $0x10] sm:$0xff]
        %v2478 = vld [vmem:[#allocation7 + $0x18] sm:$0xff]
        %v2479 = vld [vmem:[#allocation7 + $0x20] sm:$0xff]
        %v2480 = vld [vmem:[#allocation7 + $0x28] sm:$0xff]
        %v2481 = vld [vmem:[#allocation7 + $0x30] sm:$0xff]
        %v2482 = vld [vmem:[#allocation7 + $0x38] sm:$0xff]
        %v2483 = vld [vmem:[#allocation7 + $0x40] sm:$0xff]
        %v2484 = vld [vmem:[#allocation7 + $0x48] sm:$0xff]
        %v2485 = vld [vmem:[#allocation7 + $0x50] sm:$0xff]
        %v2486 = vld [vmem:[#allocation7 + $0x58] sm:$0xff]
        %v2487 = vld [vmem:[#allocation7 + $0x60] sm:$0xff]
        %v2488 = vld [vmem:[#allocation7 + $0x68] sm:$0xff]
        %v2489 = vld [vmem:[#allocation7 + $0x70] sm:$0xff]
        %v2490 = vld [vmem:[#allocation7 + $0x78] sm:$0xff]
        %v2491 = vld [vmem:[#allocation7 + $0x80] sm:$0xff]
        %v2492 = vld [vmem:[#allocation7 + $0x88] sm:$0xff]
        %v2493 = vld [vmem:[#allocation7 + $0x90] sm:$0xff]
        %v2494 = vld [vmem:[#allocation7 + $0x98] sm:$0xff]
        %v2495 = vld [vmem:[#allocation7 + $0xa0] sm:$0xff]
        %v2496 = vld [vmem:[#allocation7 + $0xa8] sm:$0xff]
        %v2497 = vld [vmem:[#allocation7 + $0xb0] sm:$0xff]
        %v2498 = vld [vmem:[#allocation7 + $0xb8] sm:$0xff]
        %v2499 = vld [vmem:[#allocation7 + $0xc0] sm:$0xff]
        %v2500 = vld [vmem:[#allocation7 + $0xc8] sm:$0xff]
        %v2501 = vld [vmem:[#allocation7 + $0xd0] sm:$0xff]
        %v2502 = vld [vmem:[#allocation7 + $0xd8] sm:$0xff]
        %v2503 = vld [vmem:[#allocation7 + $0xe0] sm:$0xff]
        %v2504 = vld [vmem:[#allocation7 + $0xe8] sm:$0xff]
        %v2505 = vld [vmem:[#allocation7 + $0xf0] sm:$0xff]
        %v2506 = vld [vmem:[#allocation7 + $0xf8] sm:$0xff]
        %v2507 = vld [vmem:[#allocation7 + $0x100] sm:$0xff]
        %v2508 = vld [vmem:[#allocation7 + $0x108] sm:$0xff]
        %v2509 = vld [vmem:[#allocation7 + $0x110] sm:$0xff]
        %v2510 = vld [vmem:[#allocation7 + $0x118] sm:$0xff]
        %v2511 = vld [vmem:[#allocation7 + $0x120] sm:$0xff]
        %v2512 = vld [vmem:[#allocation7 + $0x128] sm:$0xff]
        %v2513 = vld [vmem:[#allocation7 + $0x130] sm:$0xff]
        %v2514 = vld [vmem:[#allocation7 + $0x138] sm:$0xff]
        %v2515 = vld [vmem:[#allocation7 + $0x140] sm:$0xff]
        %v2516 = vld [vmem:[#allocation7 + $0x148] sm:$0xff]
        %v2517 = vld [vmem:[#allocation7 + $0x150] sm:$0xff]
        %v2518 = vld [vmem:[#allocation7 + $0x158] sm:$0xff]
        %v2519 = vld [vmem:[#allocation7 + $0x160] sm:$0xff]
        %v2520 = vld [vmem:[#allocation7 + $0x168] sm:$0xff]
        %v2521 = vld [vmem:[#allocation7 + $0x170] sm:$0xff]
        %v2522 = vld [vmem:[#allocation7 + $0x178] sm:$0xff]
        %v2523 = vld [vmem:[#allocation7 + $0x180] sm:$0xff]
        %v2524 = vld [vmem:[#allocation7 + $0x188] sm:$0xff]
        %v2525 = vld [vmem:[#allocation7 + $0x190] sm:$0xff]
        %v2526 = vld [vmem:[#allocation7 + $0x198] sm:$0xff]
        %v2527 = vld [vmem:[#allocation7 + $0x1a0] sm:$0xff]
        %v2528 = vld [vmem:[#allocation7 + $0x1a8] sm:$0xff]
        %v2529 = vld [vmem:[#allocation7 + $0x1b0] sm:$0xff]
        %v2530 = vld [vmem:[#allocation7 + $0x1b8] sm:$0xff]
        %v2531 = vld [vmem:[#allocation7 + $0x1c0] sm:$0xff]
        %v2532 = vld [vmem:[#allocation7 + $0x1c8] sm:$0xff]
        %v2533 = vld [vmem:[#allocation7 + $0x1d0] sm:$0xff]
        %v2534 = vld [vmem:[#allocation7 + $0x1d8] sm:$0xff]
        %v2535 = vld [vmem:[#allocation7 + $0x1e0] sm:$0xff]
        %v2536 = vld [vmem:[#allocation7 + $0x1e8] sm:$0xff]
        %v2537 = vld [vmem:[#allocation7 + $0x1f0] sm:$0xff]
        %v2538 = vld [vmem:[#allocation7 + $0x1f8] sm:$0xff]
        %v2539 = vld [vmem:[%s4] sm:$0x3]
        %v2541 = vlaneseq
        %v2542 = vshrl.u32 %v2541, 7
        %v2543 = vsub.s32 0, %v2542
        %v2544 = vrot.slane %v2539, %v2543
        %v2545 = vlaneseq
        %v2546 = vshrl.u32 %v2545, 7
        %v2547 = vsub.s32 1, %v2546
        %v2548 = vrot.slane %v2539, %v2547
        %v2615 = vunpack.c.l.b16 %v2475
        %v2616 = vunpack.c.h.b16 %v2475
        %v2617 = vunpack.c.l.b16 %v2476
        %v2618 = vunpack.c.h.b16 %v2476
        %v2619 = vunpack.c.l.b16 %v2477
        %v2620 = vunpack.c.h.b16 %v2477
        %v2621 = vunpack.c.l.b16 %v2478
        %v2622 = vunpack.c.h.b16 %v2478
        %v2623 = vunpack.c.l.b16 %v2479
        %v2624 = vunpack.c.h.b16 %v2479
        %v2625 = vunpack.c.l.b16 %v2480
        %v2626 = vunpack.c.h.b16 %v2480
        %v2627 = vunpack.c.l.b16 %v2481
        %v2628 = vunpack.c.h.b16 %v2481
        %v2629 = vunpack.c.l.b16 %v2482
        %v2630 = vunpack.c.h.b16 %v2482
        %v2631 = vunpack.c.l.b16 %v2483
        %v2632 = vunpack.c.h.b16 %v2483
        %v2633 = vunpack.c.l.b16 %v2484
        %v2634 = vunpack.c.h.b16 %v2484
        %v2635 = vunpack.c.l.b16 %v2485
        %v2636 = vunpack.c.h.b16 %v2485
        %v2637 = vunpack.c.l.b16 %v2486
        %v2638 = vunpack.c.h.b16 %v2486
        %v2639 = vunpack.c.l.b16 %v2487
        %v2640 = vunpack.c.h.b16 %v2487
        %v2641 = vunpack.c.l.b16 %v2488
        %v2642 = vunpack.c.h.b16 %v2488
        %v2643 = vunpack.c.l.b16 %v2489
        %v2644 = vunpack.c.h.b16 %v2489
        %v2645 = vunpack.c.l.b16 %v2490
        %v2646 = vunpack.c.h.b16 %v2490
        %v2647 = vunpack.c.l.b16 %v2491
        %v2648 = vunpack.c.h.b16 %v2491
        %v2649 = vunpack.c.l.b16 %v2492
        %v2650 = vunpack.c.h.b16 %v2492
        %v2651 = vunpack.c.l.b16 %v2493
        %v2652 = vunpack.c.h.b16 %v2493
        %v2653 = vunpack.c.l.b16 %v2494
        %v2654 = vunpack.c.h.b16 %v2494
        %v2655 = vunpack.c.l.b16 %v2495
        %v2656 = vunpack.c.h.b16 %v2495
        %v2657 = vunpack.c.l.b16 %v2496
        %v2658 = vunpack.c.h.b16 %v2496
        %v2659 = vunpack.c.l.b16 %v2497
        %v2660 = vunpack.c.h.b16 %v2497
        %v2661 = vunpack.c.l.b16 %v2498
        %v2662 = vunpack.c.h.b16 %v2498
        %v2663 = vunpack.c.l.b16 %v2499
        %v2664 = vunpack.c.h.b16 %v2499
        %v2665 = vunpack.c.l.b16 %v2500
        %v2666 = vunpack.c.h.b16 %v2500
        %v2667 = vunpack.c.l.b16 %v2501
        %v2668 = vunpack.c.h.b16 %v2501
        %v2669 = vunpack.c.l.b16 %v2502
        %v2670 = vunpack.c.h.b16 %v2502
        %v2671 = vunpack.c.l.b16 %v2503
        %v2672 = vunpack.c.h.b16 %v2503
        %v2673 = vunpack.c.l.b16 %v2504
        %v2674 = vunpack.c.h.b16 %v2504
        %v2675 = vunpack.c.l.b16 %v2505
        %v2676 = vunpack.c.h.b16 %v2505
        %v2677 = vunpack.c.l.b16 %v2506
        %v2678 = vunpack.c.h.b16 %v2506
        %v2679 = vunpack.c.l.b16 %v2507
        %v2680 = vunpack.c.h.b16 %v2507
        %v2681 = vunpack.c.l.b16 %v2508
        %v2682 = vunpack.c.h.b16 %v2508
        %v2683 = vunpack.c.l.b16 %v2509
        %v2684 = vunpack.c.h.b16 %v2509
        %v2685 = vunpack.c.l.b16 %v2510
        %v2686 = vunpack.c.h.b16 %v2510
        %v2687 = vunpack.c.l.b16 %v2511
        %v2688 = vunpack.c.h.b16 %v2511
        %v2689 = vunpack.c.l.b16 %v2512
        %v2690 = vunpack.c.h.b16 %v2512
        %v2691 = vunpack.c.l.b16 %v2513
        %v2692 = vunpack.c.h.b16 %v2513
        %v2693 = vunpack.c.l.b16 %v2514
        %v2694 = vunpack.c.h.b16 %v2514
        %v2695 = vunpack.c.l.b16 %v2515
        %v2696 = vunpack.c.h.b16 %v2515
        %v2697 = vunpack.c.l.b16 %v2516
        %v2698 = vunpack.c.h.b16 %v2516
        %v2699 = vunpack.c.l.b16 %v2517
        %v2700 = vunpack.c.h.b16 %v2517
        %v2701 = vunpack.c.l.b16 %v2518
        %v2702 = vunpack.c.h.b16 %v2518
        %v2703 = vunpack.c.l.b16 %v2519
        %v2704 = vunpack.c.h.b16 %v2519
        %v2705 = vunpack.c.l.b16 %v2520
        %v2706 = vunpack.c.h.b16 %v2520
        %v2707 = vunpack.c.l.b16 %v2521
        %v2708 = vunpack.c.h.b16 %v2521
        %v2709 = vunpack.c.l.b16 %v2522
        %v2710 = vunpack.c.h.b16 %v2522
        %v2711 = vunpack.c.l.b16 %v2523
        %v2712 = vunpack.c.h.b16 %v2523
        %v2713 = vunpack.c.l.b16 %v2524
        %v2714 = vunpack.c.h.b16 %v2524
        %v2715 = vunpack.c.l.b16 %v2525
        %v2716 = vunpack.c.h.b16 %v2525
        %v2717 = vunpack.c.l.b16 %v2526
        %v2718 = vunpack.c.h.b16 %v2526
        %v2719 = vunpack.c.l.b16 %v2527
        %v2720 = vunpack.c.h.b16 %v2527
        %v2721 = vunpack.c.l.b16 %v2528
        %v2722 = vunpack.c.h.b16 %v2528
        %v2723 = vunpack.c.l.b16 %v2529
        %v2724 = vunpack.c.h.b16 %v2529
        %v2725 = vunpack.c.l.b16 %v2530
        %v2726 = vunpack.c.h.b16 %v2530
        %v2727 = vunpack.c.l.b16 %v2531
        %v2728 = vunpack.c.h.b16 %v2531
        %v2729 = vunpack.c.l.b16 %v2532
        %v2730 = vunpack.c.h.b16 %v2532
        %v2731 = vunpack.c.l.b16 %v2533
        %v2732 = vunpack.c.h.b16 %v2533
        %v2733 = vunpack.c.l.b16 %v2534
        %v2734 = vunpack.c.h.b16 %v2534
        %v2735 = vunpack.c.l.b16 %v2535
        %v2736 = vunpack.c.h.b16 %v2535
        %v2737 = vunpack.c.l.b16 %v2536
        %v2738 = vunpack.c.h.b16 %v2536
        %v2739 = vunpack.c.l.b16 %v2537
        %v2740 = vunpack.c.h.b16 %v2537
        %v2741 = vunpack.c.l.b16 %v2538
        %v2742 = vunpack.c.h.b16 %v2538
        %v2743 = vpack.c.b16 %v2617, %v2615
        %v2744 = vpack.c.b16 %v2618, %v2616
        %v2745 = vpack.c.b16 %v2621, %v2619
        %v2746 = vpack.c.b16 %v2622, %v2620
        %v2747 = vpack.c.b16 %v2625, %v2623
        %v2748 = vpack.c.b16 %v2626, %v2624
        %v2749 = vpack.c.b16 %v2629, %v2627
        %v2750 = vpack.c.b16 %v2630, %v2628
        %v2751 = vpack.c.b16 %v2633, %v2631
        %v2752 = vpack.c.b16 %v2634, %v2632
        %v2753 = vpack.c.b16 %v2637, %v2635
        %v2754 = vpack.c.b16 %v2638, %v2636
        %v2755 = vpack.c.b16 %v2641, %v2639
        %v2756 = vpack.c.b16 %v2642, %v2640
        %v2757 = vpack.c.b16 %v2645, %v2643
        %v2758 = vpack.c.b16 %v2646, %v2644
        %v2759 = vpack.c.b16 %v2649, %v2647
        %v2760 = vpack.c.b16 %v2650, %v2648
        %v2761 = vpack.c.b16 %v2653, %v2651
        %v2762 = vpack.c.b16 %v2654, %v2652
        %v2763 = vpack.c.b16 %v2657, %v2655
        %v2764 = vpack.c.b16 %v2658, %v2656
        %v2765 = vpack.c.b16 %v2661, %v2659
        %v2766 = vpack.c.b16 %v2662, %v2660
        %v2767 = vpack.c.b16 %v2665, %v2663
        %v2768 = vpack.c.b16 %v2666, %v2664
        %v2769 = vpack.c.b16 %v2669, %v2667
        %v2770 = vpack.c.b16 %v2670, %v2668
        %v2771 = vpack.c.b16 %v2673, %v2671
        %v2772 = vpack.c.b16 %v2674, %v2672
        %v2773 = vpack.c.b16 %v2677, %v2675
        %v2774 = vpack.c.b16 %v2678, %v2676
        %v2775 = vpack.c.b16 %v2681, %v2679
        %v2776 = vpack.c.b16 %v2682, %v2680
        %v2777 = vpack.c.b16 %v2685, %v2683
        %v2778 = vpack.c.b16 %v2686, %v2684
        %v2779 = vpack.c.b16 %v2689, %v2687
        %v2780 = vpack.c.b16 %v2690, %v2688
        %v2781 = vpack.c.b16 %v2693, %v2691
        %v2782 = vpack.c.b16 %v2694, %v2692
        %v2783 = vpack.c.b16 %v2697, %v2695
        %v2784 = vpack.c.b16 %v2698, %v2696
        %v2785 = vpack.c.b16 %v2701, %v2699
        %v2786 = vpack.c.b16 %v2702, %v2700
        %v2787 = vpack.c.b16 %v2705, %v2703
        %v2788 = vpack.c.b16 %v2706, %v2704
        %v2789 = vpack.c.b16 %v2709, %v2707
        %v2790 = vpack.c.b16 %v2710, %v2708
        %v2791 = vpack.c.b16 %v2713, %v2711
        %v2792 = vpack.c.b16 %v2714, %v2712
        %v2793 = vpack.c.b16 %v2717, %v2715
        %v2794 = vpack.c.b16 %v2718, %v2716
        %v2795 = vpack.c.b16 %v2721, %v2719
        %v2796 = vpack.c.b16 %v2722, %v2720
        %v2797 = vpack.c.b16 %v2725, %v2723
        %v2798 = vpack.c.b16 %v2726, %v2724
        %v2799 = vpack.c.b16 %v2729, %v2727
        %v2800 = vpack.c.b16 %v2730, %v2728
        %v2801 = vpack.c.b16 %v2733, %v2731
        %v2802 = vpack.c.b16 %v2734, %v2732
        %v2803 = vpack.c.b16 %v2737, %v2735
        %v2804 = vpack.c.b16 %v2738, %v2736
        %v2805 = vpack.c.b16 %v2741, %v2739
        %v2806 = vpack.c.b16 %v2742, %v2740
        %2871 = vmatprep.subr.bf16.mxu0 %v2744
        %2872 = vmatpush1.bf16.msra.mxu0 %v2743
        %2873 = vmatprep.subr.bf16.mxu0 %v2746
        %2874 = vmatpush1.bf16.msra.mxu0 %v2745
        %2875 = vmatprep.subr.bf16.mxu0 %v2748
        %2876 = vmatpush1.bf16.msra.mxu0 %v2747
        %2877 = vmatprep.subr.bf16.mxu0 %v2750
        %2878 = vmatpush1.bf16.msra.mxu0 %v2749
        %2879 = vmatprep.subr.bf16.mxu0 %v2752
        %2880 = vmatpush1.bf16.msra.mxu0 %v2751
        %2881 = vmatprep.subr.bf16.mxu0 %v2754
        %2882 = vmatpush1.bf16.msra.mxu0 %v2753
        %2883 = vmatprep.subr.bf16.mxu0 %v2756
        %2884 = vmatpush1.bf16.msra.mxu0 %v2755
        %2885 = vmatprep.subr.bf16.mxu0 %v2758
        %2886 = vmatpush1.bf16.msra.mxu0 %v2757
        %2887 = vmatprep.subr.bf16.mxu0 %v2760
        %2888 = vmatpush1.bf16.msra.mxu0 %v2759
        %2889 = vmatprep.subr.bf16.mxu0 %v2762
        %2890 = vmatpush1.bf16.msra.mxu0 %v2761
        %2891 = vmatprep.subr.bf16.mxu0 %v2764
        %2892 = vmatpush1.bf16.msra.mxu0 %v2763
        %2893 = vmatprep.subr.bf16.mxu0 %v2766
        %2894 = vmatpush1.bf16.msra.mxu0 %v2765
        %2895 = vmatprep.subr.bf16.mxu0 %v2768
        %2896 = vmatpush1.bf16.msra.mxu0 %v2767
        %2897 = vmatprep.subr.bf16.mxu0 %v2770
        %2898 = vmatpush1.bf16.msra.mxu0 %v2769
        %2899 = vmatprep.subr.bf16.mxu0 %v2772
        %2900 = vmatpush1.bf16.msra.mxu0 %v2771
        %2901 = vmatprep.subr.bf16.mxu0 %v2774
        %2902 = vmatpush1.bf16.msra.mxu0 %v2773
        %2903 = vmatprep.mubr.bf16.mxu0 %v2412
        %2904 = vmatmul.mubr.bf16.gmra.mrb[0].mxu0 %v2411
        %v2905 = vpop.f32.mrb[0].mxu0
        %v2906 = vadd.f32 %v2544, %v2905
        %v2907 = vpop.f32.mrb[0].mxu0
        %v2908 = vadd.f32 %v2548, %v2907
        %v2909 = vpop.f32.mrb[0].mxu0
        %v2910 = vadd.f32 %v2544, %v2909
        %v2911 = vpop.f32.mrb[0].mxu0
        %v2912 = vadd.f32 %v2548, %v2911
        %2913 = vmatprep.mubr.bf16.mxu0 %v2416
        %2914 = vmatmul.mubr.bf16.gmra.mrb[0].mxu0 %v2415
        %v2915 = vpop.f32.mrb[0].mxu0
        %v2916 = vadd.f32 %v2544, %v2915
        %v2917 = vpop.f32.mrb[0].mxu0
        %v2918 = vadd.f32 %v2548, %v2917
        %v2919 = vpop.f32.mrb[0].mxu0
        %v2920 = vadd.f32 %v2544, %v2919
        %v2921 = vpop.f32.mrb[0].mxu0
        %v2922 = vadd.f32 %v2548, %v2921
        %2923 = vmatprep.mubr.bf16.mxu0 %v2420
        %2924 = vmatmul.mubr.bf16.gmra.mrb[0].mxu0 %v2419
        %v2925 = vpop.f32.mrb[0].mxu0
        %v2926 = vadd.f32 %v2544, %v2925
        %v2927 = vpop.f32.mrb[0].mxu0
        %v2928 = vadd.f32 %v2548, %v2927
        %v2929 = vpop.f32.mrb[0].mxu0
        %v2930 = vadd.f32 %v2544, %v2929
        %v2931 = vpop.f32.mrb[0].mxu0
        %v2932 = vadd.f32 %v2548, %v2931
        %2933 = vmatprep.mubr.bf16.mxu0 %v2424
        %2934 = vmatmul.mubr.bf16.gmra.mrb[0].mxu0 %v2423
        %v2935 = vpop.f32.mrb[0].mxu0
        %v2936 = vadd.f32 %v2544, %v2935
        %v2937 = vpop.f32.mrb[0].mxu0
        %v2938 = vadd.f32 %v2548, %v2937
        %v2939 = vpop.f32.mrb[0].mxu0
        %v2940 = vadd.f32 %v2544, %v2939
        %v2941 = vpop.f32.mrb[0].mxu0
        %v2942 = vadd.f32 %v2548, %v2941
        %2943 = vmatprep.mubr.bf16.mxu0 %v2428
        %2944 = vmatmul.mubr.bf16.gmra.mrb[0].mxu0 %v2427
        %v2945 = vpop.f32.mrb[0].mxu0
        %v2946 = vadd.f32 %v2544, %v2945
        %v2947 = vpop.f32.mrb[0].mxu0
        %v2948 = vadd.f32 %v2548, %v2947
        %v2949 = vpop.f32.mrb[0].mxu0
        %v2950 = vadd.f32 %v2544, %v2949
        %v2951 = vpop.f32.mrb[0].mxu0
        %v2952 = vadd.f32 %v2548, %v2951
        %2953 = vmatprep.mubr.bf16.mxu0 %v2432
        %2954 = vmatmul.mubr.bf16.gmra.mrb[0].mxu0 %v2431
        %v2955 = vpop.f32.mrb[0].mxu0
        %v2956 = vadd.f32 %v2544, %v2955
        %v2957 = vpop.f32.mrb[0].mxu0
        %v2958 = vadd.f32 %v2548, %v2957
        %v2959 = vpop.f32.mrb[0].mxu0
        %v2960 = vadd.f32 %v2544, %v2959
        %v2961 = vpop.f32.mrb[0].mxu0
        %v2962 = vadd.f32 %v2548, %v2961
        %2963 = vmatprep.mubr.bf16.mxu0 %v2436
        %2964 = vmatmul.mubr.bf16.gmra.mrb[0].mxu0 %v2435
        %v2965 = vpop.f32.mrb[0].mxu0
        %v2966 = vadd.f32 %v2544, %v2965
        %v2967 = vpop.f32.mrb[0].mxu0
        %v2968 = vadd.f32 %v2548, %v2967
        %v2969 = vpop.f32.mrb[0].mxu0
        %v2970 = vadd.f32 %v2544, %v2969
        %v2971 = vpop.f32.mrb[0].mxu0
        %v2972 = vadd.f32 %v2548, %v2971
        %2973 = vmatprep.mubr.bf16.mxu0 %v2440
        %2974 = vmatmul.mubr.bf16.gmra.mrb[0].mxu0 %v2439
        %v2975 = vpop.f32.mrb[0].mxu0
        %v2976 = vadd.f32 %v2544, %v2975
        %v2977 = vpop.f32.mrb[0].mxu0
        %v2978 = vadd.f32 %v2548, %v2977
        %v2979 = vpop.f32.mrb[0].mxu0
        %v2980 = vadd.f32 %v2544, %v2979
        %v2981 = vpop.f32.mrb[0].mxu0
        %v2982 = vadd.f32 %v2548, %v2981
        %2983 = vmatprep.mubr.bf16.mxu0 %v2444
        %2984 = vmatmul.mubr.bf16.gmra.mrb[0].mxu0 %v2443
        %v2985 = vpop.f32.mrb[0].mxu0
        %v2986 = vadd.f32 %v2544, %v2985
        %v2987 = vpop.f32.mrb[0].mxu0
        %v2988 = vadd.f32 %v2548, %v2987
        %v2989 = vpop.f32.mrb[0].mxu0
        %v2990 = vadd.f32 %v2544, %v2989
        %v2991 = vpop.f32.mrb[0].mxu0
        %v2992 = vadd.f32 %v2548, %v2991
        %2993 = vmatprep.mubr.bf16.mxu0 %v2448
        %2994 = vmatmul.mubr.bf16.gmra.mrb[0].mxu0 %v2447
        %v2995 = vpop.f32.mrb[0].mxu0
        %v2996 = vadd.f32 %v2544, %v2995
        %v2997 = vpop.f32.mrb[0].mxu0
        %v2998 = vadd.f32 %v2548, %v2997
        %v2999 = vpop.f32.mrb[0].mxu0
        %v3000 = vadd.f32 %v2544, %v2999
        %v3001 = vpop.f32.mrb[0].mxu0
        %v3002 = vadd.f32 %v2548, %v3001
        %3003 = vmatprep.mubr.bf16.mxu0 %v2452
        %3004 = vmatmul.mubr.bf16.gmra.mrb[0].mxu0 %v2451
        %v3005 = vpop.f32.mrb[0].mxu0
        %v3006 = vadd.f32 %v2544, %v3005
        %v3007 = vpop.f32.mrb[0].mxu0
        %v3008 = vadd.f32 %v2548, %v3007
        %v3009 = vpop.f32.mrb[0].mxu0
        %v3010 = vadd.f32 %v2544, %v3009
        %v3011 = vpop.f32.mrb[0].mxu0
        %v3012 = vadd.f32 %v2548, %v3011
        %3013 = vmatprep.mubr.bf16.mxu0 %v2456
        %3014 = vmatmul.mubr.bf16.gmra.mrb[0].mxu0 %v2455
        %v3015 = vpop.f32.mrb[0].mxu0
        %v3016 = vadd.f32 %v2544, %v3015
        %v3017 = vpop.f32.mrb[0].mxu0
        %v3018 = vadd.f32 %v2548, %v3017
        %v3019 = vpop.f32.mrb[0].mxu0
        %v3020 = vadd.f32 %v2544, %v3019
        %v3021 = vpop.f32.mrb[0].mxu0
        %v3022 = vadd.f32 %v2548, %v3021
        %3023 = vmatprep.mubr.bf16.mxu0 %v2460
        %3024 = vmatmul.mubr.bf16.gmra.mrb[0].mxu0 %v2459
        %v3025 = vpop.f32.mrb[0].mxu0
        %v3026 = vadd.f32 %v2544, %v3025
        %v3027 = vpop.f32.mrb[0].mxu0
        %v3028 = vadd.f32 %v2548, %v3027
        %v3029 = vpop.f32.mrb[0].mxu0
        %v3030 = vadd.f32 %v2544, %v3029
        %v3031 = vpop.f32.mrb[0].mxu0
        %v3032 = vadd.f32 %v2548, %v3031
        %3033 = vmatprep.mubr.bf16.mxu0 %v2464
        %3034 = vmatmul.mubr.bf16.gmra.mrb[0].mxu0 %v2463
        %v3035 = vpop.f32.mrb[0].mxu0
        %v3036 = vadd.f32 %v2544, %v3035
        %v3037 = vpop.f32.mrb[0].mxu0
        %v3038 = vadd.f32 %v2548, %v3037
        %v3039 = vpop.f32.mrb[0].mxu0
        %v3040 = vadd.f32 %v2544, %v3039
        %v3041 = vpop.f32.mrb[0].mxu0
        %v3042 = vadd.f32 %v2548, %v3041
        %3043 = vmatprep.mubr.bf16.mxu0 %v2468
        %3044 = vmatmul.mubr.bf16.gmra.mrb[0].mxu0 %v2467
        %v3045 = vpop.f32.mrb[0].mxu0
        %v3046 = vadd.f32 %v2544, %v3045
        %v3047 = vpop.f32.mrb[0].mxu0
        %v3048 = vadd.f32 %v2548, %v3047
        %v3049 = vpop.f32.mrb[0].mxu0
        %v3050 = vadd.f32 %v2544, %v3049
        %v3051 = vpop.f32.mrb[0].mxu0
        %v3052 = vadd.f32 %v2548, %v3051
        %3053 = vmatprep.mubr.bf16.mxu0 %v2472
        %3054 = vmatmul.mubr.bf16.gmra.mrb[0].mxu0 %v2471
        %v3055 = vpop.f32.mrb[0].mxu0
        %v3056 = vadd.f32 %v2544, %v3055
        %v3057 = vpop.f32.mrb[0].mxu0
        %v3058 = vadd.f32 %v2548, %v3057
        %v3059 = vpop.f32.mrb[0].mxu0
        %v3060 = vadd.f32 %v2544, %v3059
        %v3061 = vpop.f32.mrb[0].mxu0
        %v3062 = vadd.f32 %v2548, %v3061
        %3063 = vdwg.mxu0
        %3064 = vmatprep.subr.bf16.mxu0 %v2776
        %3065 = vmatpush1.bf16.msra.mxu0 %v2775
        %3066 = vmatprep.subr.bf16.mxu0 %v2778
        %3067 = vmatpush1.bf16.msra.mxu0 %v2777
        %3068 = vmatprep.subr.bf16.mxu0 %v2780
        %3069 = vmatpush1.bf16.msra.mxu0 %v2779
        %3070 = vmatprep.subr.bf16.mxu0 %v2782
        %3071 = vmatpush1.bf16.msra.mxu0 %v2781
        %3072 = vmatprep.subr.bf16.mxu0 %v2784
        %3073 = vmatpush1.bf16.msra.mxu0 %v2783
        %3074 = vmatprep.subr.bf16.mxu0 %v2786
        %3075 = vmatpush1.bf16.msra.mxu0 %v2785
        %3076 = vmatprep.subr.bf16.mxu0 %v2788
        %3077 = vmatpush1.bf16.msra.mxu0 %v2787
        %3078 = vmatprep.subr.bf16.mxu0 %v2790
        %3079 = vmatpush1.bf16.msra.mxu0 %v2789
        %3080 = vmatprep.subr.bf16.mxu0 %v2792
        %3081 = vmatpush1.bf16.msra.mxu0 %v2791
        %3082 = vmatprep.subr.bf16.mxu0 %v2794
        %3083 = vmatpush1.bf16.msra.mxu0 %v2793
        %3084 = vmatprep.subr.bf16.mxu0 %v2796
        %3085 = vmatpush1.bf16.msra.mxu0 %v2795
        %3086 = vmatprep.subr.bf16.mxu0 %v2798
        %3087 = vmatpush1.bf16.msra.mxu0 %v2797
        %3088 = vmatprep.subr.bf16.mxu0 %v2800
        %3089 = vmatpush1.bf16.msra.mxu0 %v2799
        %3090 = vmatprep.subr.bf16.mxu0 %v2802
        %3091 = vmatpush1.bf16.msra.mxu0 %v2801
        %3092 = vmatprep.subr.bf16.mxu0 %v2804
        %3093 = vmatpush1.bf16.msra.mxu0 %v2803
        %3094 = vmatprep.subr.bf16.mxu0 %v2806
        %3095 = vmatpush1.bf16.msra.mxu0 %v2805
        %3096 = vmatprep.mubr.bf16.mxu0 %v2414
        %3097 = vmatmul.mubr.bf16.gmra.mrb[0].mxu0 %v2413
        %v3098 = vpop.f32.mrb[0].mxu0
        %v3099 = vadd.f32 %v2906, %v3098
        %v3100 = vpop.f32.mrb[0].mxu0
        %v3101 = vadd.f32 %v2908, %v3100
        %v3102 = vpop.f32.mrb[0].mxu0
        %v3103 = vadd.f32 %v2910, %v3102
        %v3104 = vpop.f32.mrb[0].mxu0
        %v3105 = vadd.f32 %v2912, %v3104
        %3106 = vmatprep.mubr.bf16.mxu0 %v2418
        %3107 = vmatmul.mubr.bf16.gmra.mrb[0].mxu0 %v2417
        %v3108 = vpop.f32.mrb[0].mxu0
        %v3109 = vadd.f32 %v2916, %v3108
        %v3110 = vpop.f32.mrb[0].mxu0
        %v3111 = vadd.f32 %v2918, %v3110
        %v3112 = vpop.f32.mrb[0].mxu0
        %v3113 = vadd.f32 %v2920, %v3112
        %v3114 = vpop.f32.mrb[0].mxu0
        %v3115 = vadd.f32 %v2922, %v3114
        %3116 = vmatprep.mubr.bf16.mxu0 %v2422
        %3117 = vmatmul.mubr.bf16.gmra.mrb[0].mxu0 %v2421
        %v3118 = vpop.f32.mrb[0].mxu0
        %v3119 = vadd.f32 %v2926, %v3118
        %v3120 = vpop.f32.mrb[0].mxu0
        %v3121 = vadd.f32 %v2928, %v3120
        %v3122 = vpop.f32.mrb[0].mxu0
        %v3123 = vadd.f32 %v2930, %v3122
        %v3124 = vpop.f32.mrb[0].mxu0
        %v3125 = vadd.f32 %v2932, %v3124
        %3126 = vmatprep.mubr.bf16.mxu0 %v2426
        %3127 = vmatmul.mubr.bf16.gmra.mrb[0].mxu0 %v2425
        %v3128 = vpop.f32.mrb[0].mxu0
        %v3129 = vadd.f32 %v2936, %v3128
        %v3130 = vpop.f32.mrb[0].mxu0
        %v3131 = vadd.f32 %v2938, %v3130
        %v3132 = vpop.f32.mrb[0].mxu0
        %v3133 = vadd.f32 %v2940, %v3132
        %v3134 = vpop.f32.mrb[0].mxu0
        %v3135 = vadd.f32 %v2942, %v3134
        %3136 = vmatprep.mubr.bf16.mxu0 %v2430
        %3137 = vmatmul.mubr.bf16.gmra.mrb[0].mxu0 %v2429
        %v3138 = vpop.f32.mrb[0].mxu0
        %v3139 = vadd.f32 %v2946, %v3138
        %v3140 = vpop.f32.mrb[0].mxu0
        %v3141 = vadd.f32 %v2948, %v3140
        %v3142 = vpop.f32.mrb[0].mxu0
        %v3143 = vadd.f32 %v2950, %v3142
        %v3144 = vpop.f32.mrb[0].mxu0
        %v3145 = vadd.f32 %v2952, %v3144
        %3146 = vmatprep.mubr.bf16.mxu0 %v2434
        %3147 = vmatmul.mubr.bf16.gmra.mrb[0].mxu0 %v2433
        %v3148 = vpop.f32.mrb[0].mxu0
        %v3149 = vadd.f32 %v2956, %v3148
        %v3150 = vpop.f32.mrb[0].mxu0
        %v3151 = vadd.f32 %v2958, %v3150
        %v3152 = vpop.f32.mrb[0].mxu0
        %v3153 = vadd.f32 %v2960, %v3152
        %v3154 = vpop.f32.mrb[0].mxu0
        %v3155 = vadd.f32 %v2962, %v3154
        %3156 = vmatprep.mubr.bf16.mxu0 %v2438
        %3157 = vmatmul.mubr.bf16.gmra.mrb[0].mxu0 %v2437
        %v3158 = vpop.f32.mrb[0].mxu0
        %v3159 = vadd.f32 %v2966, %v3158
        %v3160 = vpop.f32.mrb[0].mxu0
        %v3161 = vadd.f32 %v2968, %v3160
        %v3162 = vpop.f32.mrb[0].mxu0
        %v3163 = vadd.f32 %v2970, %v3162
        %v3164 = vpop.f32.mrb[0].mxu0
        %v3165 = vadd.f32 %v2972, %v3164
        %3166 = vmatprep.mubr.bf16.mxu0 %v2442
        %3167 = vmatmul.mubr.bf16.gmra.mrb[0].mxu0 %v2441
        %v3168 = vpop.f32.mrb[0].mxu0
        %v3169 = vadd.f32 %v2976, %v3168
        %v3170 = vpop.f32.mrb[0].mxu0
        %v3171 = vadd.f32 %v2978, %v3170
        %v3172 = vpop.f32.mrb[0].mxu0
        %v3173 = vadd.f32 %v2980, %v3172
        %v3174 = vpop.f32.mrb[0].mxu0
        %v3175 = vadd.f32 %v2982, %v3174
        %3176 = vmatprep.mubr.bf16.mxu0 %v2446
        %3177 = vmatmul.mubr.bf16.gmra.mrb[0].mxu0 %v2445
        %v3178 = vpop.f32.mrb[0].mxu0
        %v3179 = vadd.f32 %v2986, %v3178
        %v3180 = vpop.f32.mrb[0].mxu0
        %v3181 = vadd.f32 %v2988, %v3180
        %v3182 = vpop.f32.mrb[0].mxu0
        %v3183 = vadd.f32 %v2990, %v3182
        %v3184 = vpop.f32.mrb[0].mxu0
        %v3185 = vadd.f32 %v2992, %v3184
        %3186 = vmatprep.mubr.bf16.mxu0 %v2450
        %3187 = vmatmul.mubr.bf16.gmra.mrb[0].mxu0 %v2449
        %v3188 = vpop.f32.mrb[0].mxu0
        %v3189 = vadd.f32 %v2996, %v3188
        %v3190 = vpop.f32.mrb[0].mxu0
        %v3191 = vadd.f32 %v2998, %v3190
        %v3192 = vpop.f32.mrb[0].mxu0
        %v3193 = vadd.f32 %v3000, %v3192
        %v3194 = vpop.f32.mrb[0].mxu0
        %v3195 = vadd.f32 %v3002, %v3194
        %3196 = vmatprep.mubr.bf16.mxu0 %v2454
        %3197 = vmatmul.mubr.bf16.gmra.mrb[0].mxu0 %v2453
        %v3198 = vpop.f32.mrb[0].mxu0
        %v3199 = vadd.f32 %v3006, %v3198
        %v3200 = vpop.f32.mrb[0].mxu0
        %v3201 = vadd.f32 %v3008, %v3200
        %v3202 = vpop.f32.mrb[0].mxu0
        %v3203 = vadd.f32 %v3010, %v3202
        %v3204 = vpop.f32.mrb[0].mxu0
        %v3205 = vadd.f32 %v3012, %v3204
        %3206 = vmatprep.mubr.bf16.mxu0 %v2458
        %3207 = vmatmul.mubr.bf16.gmra.mrb[0].mxu0 %v2457
        %v3208 = vpop.f32.mrb[0].mxu0
        %v3209 = vadd.f32 %v3016, %v3208
        %v3210 = vpop.f32.mrb[0].mxu0
        %v3211 = vadd.f32 %v3018, %v3210
        %v3212 = vpop.f32.mrb[0].mxu0
        %v3213 = vadd.f32 %v3020, %v3212
        %v3214 = vpop.f32.mrb[0].mxu0
        %v3215 = vadd.f32 %v3022, %v3214
        %3216 = vmatprep.mubr.bf16.mxu0 %v2462
        %3217 = vmatmul.mubr.bf16.gmra.mrb[0].mxu0 %v2461
        %v3218 = vpop.f32.mrb[0].mxu0
        %v3219 = vadd.f32 %v3026, %v3218
        %v3220 = vpop.f32.mrb[0].mxu0
        %v3221 = vadd.f32 %v3028, %v3220
        %v3222 = vpop.f32.mrb[0].mxu0
        %v3223 = vadd.f32 %v3030, %v3222
        %v3224 = vpop.f32.mrb[0].mxu0
        %v3225 = vadd.f32 %v3032, %v3224
        %3226 = vmatprep.mubr.bf16.mxu0 %v2466
        %3227 = vmatmul.mubr.bf16.gmra.mrb[0].mxu0 %v2465
        %v3228 = vpop.f32.mrb[0].mxu0
        %v3229 = vadd.f32 %v3036, %v3228
        %v3230 = vpop.f32.mrb[0].mxu0
        %v3231 = vadd.f32 %v3038, %v3230
        %v3232 = vpop.f32.mrb[0].mxu0
        %v3233 = vadd.f32 %v3040, %v3232
        %v3234 = vpop.f32.mrb[0].mxu0
        %v3235 = vadd.f32 %v3042, %v3234
        %3236 = vmatprep.mubr.bf16.mxu0 %v2470
        %3237 = vmatmul.mubr.bf16.gmra.mrb[0].mxu0 %v2469
        %v3238 = vpop.f32.mrb[0].mxu0
        %v3239 = vadd.f32 %v3046, %v3238
        %v3240 = vpop.f32.mrb[0].mxu0
        %v3241 = vadd.f32 %v3048, %v3240
        %v3242 = vpop.f32.mrb[0].mxu0
        %v3243 = vadd.f32 %v3050, %v3242
        %v3244 = vpop.f32.mrb[0].mxu0
        %v3245 = vadd.f32 %v3052, %v3244
        %3246 = vmatprep.mubr.bf16.mxu0 %v2474
        %3247 = vmatmul.mubr.bf16.gmra.mrb[0].mxu0 %v2473
        %v3248 = vpop.f32.mrb[0].mxu0
        %v3249 = vadd.f32 %v3056, %v3248
        %v3250 = vpop.f32.mrb[0].mxu0
        %v3251 = vadd.f32 %v3058, %v3250
        %v3252 = vpop.f32.mrb[0].mxu0
        %v3253 = vadd.f32 %v3060, %v3252
        %v3254 = vpop.f32.mrb[0].mxu0
        %v3255 = vadd.f32 %v3062, %v3254
        %3256 = vdwg.mxu0
        %3257 = vst [vmem:[%s272] sm:$0xff] %v3099
        %3258 = vst [vmem:[%s272 + $0x8] sm:$0xff] %v3101
        %3259 = vst [vmem:[%s272 + $0x10] sm:$0xff] %v3103
        %3260 = vst [vmem:[%s272 + $0x18] sm:$0xff] %v3105
        %3261 = vst [vmem:[%s272 + $0x20] sm:$0xff] %v3109
        %3262 = vst [vmem:[%s272 + $0x28] sm:$0xff] %v3111
        %3263 = vst [vmem:[%s272 + $0x30] sm:$0xff] %v3113
        %3264 = vst [vmem:[%s272 + $0x38] sm:$0xff] %v3115
        %3265 = vst [vmem:[%s272 + $0x40] sm:$0xff] %v3119
        %3266 = vst [vmem:[%s272 + $0x48] sm:$0xff] %v3121
        %3267 = vst [vmem:[%s272 + $0x50] sm:$0xff] %v3123
        %3268 = vst [vmem:[%s272 + $0x58] sm:$0xff] %v3125
        %3269 = vst [vmem:[%s272 + $0x60] sm:$0xff] %v3129
        %3270 = vst [vmem:[%s272 + $0x68] sm:$0xff] %v3131
        %3271 = vst [vmem:[%s272 + $0x70] sm:$0xff] %v3133
        %3272 = vst [vmem:[%s272 + $0x78] sm:$0xff] %v3135
        %3273 = vst [vmem:[%s272 + $0x80] sm:$0xff] %v3139
        %3274 = vst [vmem:[%s272 + $0x88] sm:$0xff] %v3141
        %3275 = vst [vmem:[%s272 + $0x90] sm:$0xff] %v3143
        %3276 = vst [vmem:[%s272 + $0x98] sm:$0xff] %v3145
        %3277 = vst [vmem:[%s272 + $0xa0] sm:$0xff] %v3149
        %3278 = vst [vmem:[%s272 + $0xa8] sm:$0xff] %v3151
        %3279 = vst [vmem:[%s272 + $0xb0] sm:$0xff] %v3153
        %3280 = vst [vmem:[%s272 + $0xb8] sm:$0xff] %v3155
        %3281 = vst [vmem:[%s272 + $0xc0] sm:$0xff] %v3159
        %3282 = vst [vmem:[%s272 + $0xc8] sm:$0xff] %v3161
        %3283 = vst [vmem:[%s272 + $0xd0] sm:$0xff] %v3163
        %3284 = vst [vmem:[%s272 + $0xd8] sm:$0xff] %v3165
        %3285 = vst [vmem:[%s272 + $0xe0] sm:$0xff] %v3169
        %3286 = vst [vmem:[%s272 + $0xe8] sm:$0xff] %v3171
        %3287 = vst [vmem:[%s272 + $0xf0] sm:$0xff] %v3173
        %3288 = vst [vmem:[%s272 + $0xf8] sm:$0xff] %v3175
        %3289 = vst [vmem:[%s272 + $0x100] sm:$0xff] %v3179
        %3290 = vst [vmem:[%s272 + $0x108] sm:$0xff] %v3181
        %3291 = vst [vmem:[%s272 + $0x110] sm:$0xff] %v3183
        %3292 = vst [vmem:[%s272 + $0x118] sm:$0xff] %v3185
        %3293 = vst [vmem:[%s272 + $0x120] sm:$0xff] %v3189
        %3294 = vst [vmem:[%s272 + $0x128] sm:$0xff] %v3191
        %3295 = vst [vmem:[%s272 + $0x130] sm:$0xff] %v3193
        %3296 = vst [vmem:[%s272 + $0x138] sm:$0xff] %v3195
        %3297 = vst [vmem:[%s272 + $0x140] sm:$0xff] %v3199
        %3298 = vst [vmem:[%s272 + $0x148] sm:$0xff] %v3201
        %3299 = vst [vmem:[%s272 + $0x150] sm:$0xff] %v3203
        %3300 = vst [vmem:[%s272 + $0x158] sm:$0xff] %v3205
        %3301 = vst [vmem:[%s272 + $0x160] sm:$0xff] %v3209
        %3302 = vst [vmem:[%s272 + $0x168] sm:$0xff] %v3211
        %3303 = vst [vmem:[%s272 + $0x170] sm:$0xff] %v3213
        %3304 = vst [vmem:[%s272 + $0x178] sm:$0xff] %v3215
        %3305 = vst [vmem:[%s272 + $0x180] sm:$0xff] %v3219
        %3306 = vst [vmem:[%s272 + $0x188] sm:$0xff] %v3221
        %3307 = vst [vmem:[%s272 + $0x190] sm:$0xff] %v3223
        %3308 = vst [vmem:[%s272 + $0x198] sm:$0xff] %v3225
        %3309 = vst [vmem:[%s272 + $0x1a0] sm:$0xff] %v3229
        %3310 = vst [vmem:[%s272 + $0x1a8] sm:$0xff] %v3231
        %3311 = vst [vmem:[%s272 + $0x1b0] sm:$0xff] %v3233
        %3312 = vst [vmem:[%s272 + $0x1b8] sm:$0xff] %v3235
        %3313 = vst [vmem:[%s272 + $0x1c0] sm:$0xff] %v3239
        %3314 = vst [vmem:[%s272 + $0x1c8] sm:$0xff] %v3241
        %3315 = vst [vmem:[%s272 + $0x1d0] sm:$0xff] %v3243
        %3316 = vst [vmem:[%s272 + $0x1d8] sm:$0xff] %v3245
        %3317 = vst [vmem:[%s272 + $0x1e0] sm:$0xff] %v3249
        %3318 = vst [vmem:[%s272 + $0x1e8] sm:$0xff] %v3251
        %3319 = vst [vmem:[%s272 + $0x1f0] sm:$0xff] %v3253
        %3320 = vst [vmem:[%s272 + $0x1f8] sm:$0xff] %v3255
        %s3321 = sand.u32 %s141, 1
        %s3322 = scalar_lea.sflag [#allocation4], %s3321
        %s3323 = sand.u32 %s141, 1
        %s3324 = smul.addr %s3323, 512
        %s3325 = scalar_lea.vmem [#allocation8], %s3324
        // Predicated region
        $region53: #{tpu_custom_call.1} parent=39 // pred_check
          %p3326 = pneg %p151
        $region54: #{tpu_custom_call.1} parent=39 // pred_check_branch
          %3328 = sbr.rel (%p3326) target = $region56
        $region55: #{tpu_custom_call.1} parent=39 // pred_region
          %s3329 = smul.u32 32, %s23
          %s3331 = ssub.s32 8192, 8192
          %3332 = vsyncadd %s3322, %s3331
          %s3333 = smul.addr %s3329, 2
          %s3334 = smul.addr %s3333, 128
          %s3335 = scalar_lea.hbm %s5, %s3334
          %s3336 = sshll.u32 %s3325, 4
          %s3337 = int_to_ptr.vmem [resolvable:$true] %s3336
          %3342 = dma.vmem_to_hbm [thread:$0]  %s3337, 8192, %s3335, %s3322, 256, 256, 16
        $region56: #{tpu_custom_call.1} parent=39 // pred_fallthru
          _
      $region40: #{tpu_custom_call.1} parent=5 // pred_fallthru
        _
      %p3343 = scmp.le.s32.totalorder 2, %s18
      // Predicated region
      $region57: #{tpu_custom_call.1} parent=5 // pred_check
        %p3344 = pneg %p3343
      $region58: #{tpu_custom_call.1} parent=5 // pred_check_branch
        %3346 = sbr.rel (%p3344) target = $region60
      $region59: #{tpu_custom_call.1} parent=5 // pred_region
        %s3347 = ssub.s32 %s18, 2
        // Predicated region
        $region61: #{tpu_custom_call.1} parent=59 // pred_check
          %p3348 = pneg %p157
        $region62: #{tpu_custom_call.1} parent=59 // pred_check_branch
          %3350 = sbr.rel (%p3348) target = $region64
        $region63: #{tpu_custom_call.1} parent=59 // pred_region
          %s3351 = sand.u32 %s142, 1
          %s3352 = scalar_lea.sflag [#allocation4], %s3351
          %s3353 = sand.u32 %s142, 1
          %s3354 = smul.addr %s3353, 512
          %s3355 = scalar_lea.vmem [#allocation8], %s3354
          %3356 = dma.done %s3352, 8192
        $region64: #{tpu_custom_call.1} parent=59 // pred_fallthru
          _
      $region60: #{tpu_custom_call.1} parent=5 // pred_fallthru
        _
    $region6: #{tpu_custom_call.1} parent=1 // loop_footer
      %s22 = sadd.s32 1, %s18
    $region7: #{tpu_custom_call.1} parent=1 // loop_footer_branch
      %17 = sbr.rel target = $region3
    $region8: #{tpu_custom_call.1} parent=1 // loop_exit
      _
    %3357 = vsyncpa [#allocation3], 1
    %s3358 = scalar_lea.sflag [#allocation3], 1
    %3359 = vsyncpa %s3358, 1
    %3360 = vsyncpa [#allocation6], 1
    %3361 = vsyncpa [#allocation4], 1
    %s3362 = scalar_lea.sflag [#allocation4], 1
    %3363 = vsyncpa %s3362, 1

</llo_original>
